<compile_context>
chip_gen: v5e
topology: v5e:2x2
jax: 0.10.0
libtpu: 0.0.40
codegen_flags: <defaults>
</compile_context>

<pallas_src>
import jax
import jax.numpy as jnp
from jax import lax
from jax.experimental import pallas as pl
from jax.experimental.pallas import tpu as pltpu

_VMEM_LIMIT_BYTES = 32 * 1024 * 1024


# ----------------------------- small helpers ------------------------------- #

def _fold_bn(gamma, beta, mean, var, eps=1e-5):
    scale = gamma / jnp.sqrt(var + eps)
    bias = beta - mean * scale
    return scale, bias


def _prep_conv1_input(x, stride, ho, wo):
    """Width-3 column packing (+ row phase split for stride>1), flat rows.

    Produces xs (N, R, 3*Cin) bf16 and row_bases so that conv1 tap dh for the
    flattened output position m = i*(wo+2) + j reads xs[:, row_bases[dh]*(wo+2)
    + m, :] contiguously (the 2 extra "junk" width columns are discarded later).
    """
    n, h, w, c = x.shape
    wj = wo + 2
    need_w = (wj - 1) * stride + 3           # padded width every tap can read
    xp = jnp.pad(x, ((0, 0), (1, 1), (1, need_w - (w + 1)), (0, 0)))
    cols = jnp.concatenate(
        [xp[:, :, dw:dw + (wj - 1) * stride + 1:stride, :] for dw in range(3)],
        axis=-1)                             # (n, h+2, wj, 3c)
    if stride == 1:
        xs = cols
        row_bases = (0, 1, 2)
    else:
        hh = ho + 1
        phases = []
        for p in range(stride):
            ph = cols[:, p::stride]
            ph = jnp.pad(ph, ((0, 0), (0, hh - ph.shape[1]), (0, 0), (0, 0)))
            phases.append(ph)
        xs = jnp.concatenate(phases, axis=1)  # (n, stride*hh, wj, 3c)
        row_bases = tuple((dh % stride) * hh + dh // stride for dh in range(3))
    xs = xs.reshape(n, -1, 3 * c).astype(jnp.bfloat16)
    return xs, row_bases


# ----------------------------- fused kernel -------------------------------- #

def _make_fused_kernel(row_bases, ho, wo, wj, cout, has_downsample):
    mp = ho * wj

    def conv1(xs_ref, w1_ref, s1_ref, b1_ref):
        # 3 accumulating matmuls, K = 3*cin, contiguous flat windows.
        acc = jnp.zeros((mp, cout), jnp.float32)
        for dh in range(3):
            win = xs_ref[0, pl.ds(row_bases[dh] * wj, mp), :]
            acc = acc + jnp.dot(win, w1_ref[dh],
                                preferred_element_type=jnp.float32)
        y1 = jnp.maximum(acc * s1_ref[...] + b1_ref[...], 0.0)
        # Zero the 2 junk width columns: they become conv2's left/right zero pad.
        col = lax.broadcasted_iota(jnp.int32, (mp, cout), 0) % wj
        return jnp.where(col < wo, y1, 0.0)

    def conv2(y1_ref, y1, w2_ref, s2_ref, b2_ref):
        # Stage y1 into a zero-padded (ho+2, wj) image, flattened rows.
        y1_ref[...] = jnp.zeros_like(y1_ref)
        y1_ref[pl.ds(wj + 1, mp), :] = y1
        acc = jnp.zeros((mp, cout), jnp.float32)
        for dh in range(3):
            for dw in range(3):
                win = y1_ref[pl.ds(dh * wj + dw, mp), :].astype(jnp.bfloat16)
                acc = acc + jnp.dot(win, w2_ref[dh * 3 + dw],
                                    preferred_element_type=jnp.float32)
        return acc * s2_ref[...] + b2_ref[...]

    if has_downsample:
        def kernel(xs_ref, xr_ref, w1_ref, w2_ref, wd_ref,
                   s1_ref, b1_ref, s2_ref, b2_ref, sd_ref, bd_ref,
                   o_ref, y1_ref):
            y1 = conv1(xs_ref, w1_ref, s1_ref, b1_ref)
            main = conv2(y1_ref, y1, w2_ref, s2_ref, b2_ref)
            res = jnp.dot(xr_ref[0], wd_ref[...],
                          preferred_element_type=jnp.float32)
            res = res * sd_ref[...] + bd_ref[...]
            o_ref[0] = jnp.maximum(main + res, 0.0).astype(o_ref.dtype)
    else:
        def kernel(xs_ref, xr_ref, w1_ref, w2_ref,
                   s1_ref, b1_ref, s2_ref, b2_ref,
                   o_ref, y1_ref):
            y1 = conv1(xs_ref, w1_ref, s1_ref, b1_ref)
            main = conv2(y1_ref, y1, w2_ref, s2_ref, b2_ref)
            o_ref[0] = jnp.maximum(main + xr_ref[0], 0.0).astype(o_ref.dtype)
    return kernel


def _fused_pallas_call(kernel, xs, xr, consts, n, mp, ho, wj, cout):
    r1 = xs.shape[1]
    in_specs = [pl.BlockSpec((1, r1, xs.shape[2]), lambda i: (i, 0, 0)),
                pl.BlockSpec((1, mp, xr.shape[2]), lambda i: (i, 0, 0))]
    for c in consts:   # weights / BN params: whole array, same block each step
        in_specs.append(pl.BlockSpec(c.shape, lambda i, nd=c.ndim: (0,) * nd))
    scratch_rows = (ho + 2) * wj + 8          # +slack so junk-row taps stay in-bounds
    return pl.pallas_call(
        kernel,
        out_shape=jax.ShapeDtypeStruct((n, mp, cout), jnp.float32),
        grid_spec=pltpu.PrefetchScalarGridSpec(
            num_scalar_prefetch=0,
            grid=(n,),
            in_specs=in_specs,
            out_specs=pl.BlockSpec((1, mp, cout), lambda i: (i, 0, 0)),
            scratch_shapes=[pltpu.VMEM((scratch_rows, cout), jnp.float32)]),
        compiler_params=pltpu.CompilerParams(
            dimension_semantics=("parallel",),
            vmem_limit_bytes=_VMEM_LIMIT_BYTES),
    )(xs, xr, *consts)


# ----------------------------- forward -------------------------------------- #

def basic_block_forward(x_nchw, params, stride=1):
    x = jnp.transpose(x_nchw, (0, 2, 3, 1)).astype(jnp.float32)   # NHWC
    n, h, w, cin = x.shape
    cout = params['w1'].shape[-1]
    ho = (h - 1) // stride + 1
    wo = (w - 1) // stride + 1
    wj = wo + 2
    mp = ho * wj

    xs, row_bases = _prep_conv1_input(x, stride, ho, wo)

    w1p = params['w1'].reshape(3, 3 * cin, cout).astype(jnp.bfloat16)
    w2p = params['w2'].reshape(9, cout, cout).astype(jnp.bfloat16)
    s1, b1 = _fold_bn(*params['bn1'])
    s2, b2 = _fold_bn(*params['bn2'])
    s1 = s1.reshape(1, cout).astype(jnp.float32)
    b1 = b1.reshape(1, cout).astype(jnp.float32)
    s2 = s2.reshape(1, cout).astype(jnp.float32)
    b2 = b2.reshape(1, cout).astype(jnp.float32)

    kernel = _make_fused_kernel(row_bases, ho, wo, wj, cout,
                                params['has_downsample'])

    if params['has_downsample']:
        sd, bd = _fold_bn(*params['bnd'])
        sd = sd.reshape(1, cout).astype(jnp.float32)
        bd = bd.reshape(1, cout).astype(jnp.float32)
        wd = params['wd'].astype(jnp.bfloat16)                    # (cin, cout)
        xr = x[:, ::stride, ::stride, :]                          # 1x1 / stride
        xr = jnp.pad(xr, ((0, 0), (0, 0), (0, wj - wo), (0, 0)))
        xr = xr.reshape(n, mp, cin).astype(jnp.bfloat16)
        consts = (w1p, w2p, wd, s1, b1, s2, b2, sd, bd)
    else:
        assert stride == 1, "identity residual requires stride == 1"
        xr = jnp.pad(x, ((0, 0), (0, 0), (0, wj - wo), (0, 0)))
        xr = xr.reshape(n, mp, cin)                               # f32, exact add
        consts = (w1p, w2p, s1, b1, s2, b2)

    out = _fused_pallas_call(kernel, xs, xr, consts, n, mp, ho, wj, cout)
    out = out.reshape(n, ho, wj, cout)[:, :, :wo, :]              # drop junk cols
    return jnp.transpose(out, (0, 3, 1, 2))                       # back to NCHW


# ----------------------------- reference (pure JAX) ------------------------- #

def reference_forward(x_nchw, params, stride=1):
    x = jnp.transpose(x_nchw, (0, 2, 3, 1)).astype(jnp.float32)

    def conv(v, w, s, pad):
        return lax.conv_general_dilated(
            v, w, (s, s), pad, dimension_numbers=('NHWC', 'HWIO', 'NHWC'),
            precision=lax.Precision.HIGHEST)

    def bn(v, p):
        gamma, beta, mean, var = p
        return (v - mean) * (gamma / jnp.sqrt(var + 1e-5)) + beta

    out = conv(x, params['w1'], stride, [(1, 1), (1, 1)])
    out = jnp.maximum(bn(out, params['bn1']), 0.0)
    out = conv(out, params['w2'], 1, [(1, 1), (1, 1)])
    out = bn(out, params['bn2'])
    if params['has_downsample']:
        wd = params['wd'].reshape(1, 1, *params['wd'].shape)
        res = bn(conv(x, wd, stride, [(0, 0), (0, 0)]), params['bnd'])
    else:
        res = x
    out = jnp.maximum(out + res, 0.0)
    return jnp.transpose(out, (0, 3, 1, 2))


# ----------------------------- params --------------------------------------- #

def init_params(key, cin, cout):
    ks = jax.random.split(key, 16)

    def bn_params(i):
        gamma = jax.random.uniform(ks[i], (cout,), jnp.float32, 0.5, 1.5)
        beta = 0.1 * jax.random.normal(ks[i + 1], (cout,), jnp.float32)
        mean = 0.1 * jax.random.normal(ks[i + 2], (cout,), jnp.float32)
        var = jax.random.uniform(ks[i + 3], (cout,), jnp.float32, 0.5, 1.5)
        return (gamma, beta, mean, var)

    p = {
        'w1': 0.2 * jax.random.normal(ks[0], (3, 3, cin, cout), jnp.float32),
        'bn1': bn_params(1),
        'w2': 0.2 * jax.random.normal(ks[5], (3, 3, cout, cout), jnp.float32),
        'bn2': bn_params(6),
        'has_downsample': cin != cout,
    }
    if cin != cout:
        p['wd'] = 0.2 * jax.random.normal(ks[10], (cin, cout), jnp.float32)
        p['bnd'] = bn_params(11)
    return p


# ----------------------------- main ----------------------------------------- #

if __name__ == "__main__":
    key = jax.random.PRNGKey(0)
    N, H, W = 2, 16, 16
    # (inplanes, planes, stride): with/without downsample, with stride 2
    configs = [(4, 8, 1), (8, 8, 1), (4, 8, 2)]

    for idx, (cin, cout, stride) in enumerate(configs):
        kx, kp = jax.random.split(jax.random.fold_in(key, idx))
        x = jax.random.normal(kx, (N, cin, H, W), jnp.float32)
        params = init_params(kp, cin, cout)

        out = jax.block_until_ready(basic_block_forward(x, params, stride))
        ref = reference_forward(x, params, stride)

        assert out.shape == ref.shape, (out.shape, ref.shape)
        # bf16 MXU operands vs f32 reference -> relaxed tolerance.
        assert bool(jnp.allclose(out, ref, atol=7e-2, rtol=7e-2)), (
            f"mismatch for config {(cin, cout, stride)}: "
            f"max abs err = {float(jnp.max(jnp.abs(out - ref)))}")

    print("KERNEL_OK")
</pallas_src>

<mosaic_0001>
module attributes {stable_mosaic.version = 11 : i64} {
  func.func @kernel(%arg0: i32, %arg1: memref<1x324x12xbf16, #tpu.memory_space<vmem>>, %arg2: memref<1x288x4xbf16, #tpu.memory_space<vmem>>, %arg3: memref<3x12x8xbf16, #tpu.memory_space<vmem>>, %arg4: memref<9x8x8xbf16, #tpu.memory_space<vmem>>, %arg5: memref<4x8xbf16, #tpu.memory_space<vmem>>, %arg6: memref<1x8xf32, #tpu.memory_space<vmem>>, %arg7: memref<1x8xf32, #tpu.memory_space<vmem>>, %arg8: memref<1x8xf32, #tpu.memory_space<vmem>>, %arg9: memref<1x8xf32, #tpu.memory_space<vmem>>, %arg10: memref<1x8xf32, #tpu.memory_space<vmem>>, %arg11: memref<1x8xf32, #tpu.memory_space<vmem>>, %arg12: memref<1x288x8xf32, #tpu.memory_space<vmem>>, %arg13: memref<332x8xf32, #tpu.memory_space<vmem>>) attributes {dimension_semantics = [#tpu.dimension_semantics<parallel>], iteration_bounds = array<i64: 2>, scalar_prefetch = 0 : i64, scratch_operands = 1 : i64, tpu.core_type = #tpu.core_type<tc>, window_params = [{transform_indices = @transform_0, window_bounds = array<i64: 1, 324, 12>}, {transform_indices = @transform_1, window_bounds = array<i64: 1, 288, 4>}, {pipeline_mode = #tpu.pipeline_mode<synchronous>, transform_indices = @transform_2, window_bounds = array<i64: 3, 12, 8>}, {pipeline_mode = #tpu.pipeline_mode<synchronous>, transform_indices = @transform_3, window_bounds = array<i64: 9, 8, 8>}, {pipeline_mode = #tpu.pipeline_mode<synchronous>, transform_indices = @transform_4, window_bounds = array<i64: 4, 8>}, {pipeline_mode = #tpu.pipeline_mode<synchronous>, transform_indices = @transform_5, window_bounds = array<i64: 1, 8>}, {pipeline_mode = #tpu.pipeline_mode<synchronous>, transform_indices = @transform_6, window_bounds = array<i64: 1, 8>}, {pipeline_mode = #tpu.pipeline_mode<synchronous>, transform_indices = @transform_7, window_bounds = array<i64: 1, 8>}, {pipeline_mode = #tpu.pipeline_mode<synchronous>, transform_indices = @transform_8, window_bounds = array<i64: 1, 8>}, {pipeline_mode = #tpu.pipeline_mode<synchronous>, transform_indices = @transform_9, window_bounds = array<i64: 1, 8>}, {pipeline_mode = #tpu.pipeline_mode<synchronous>, transform_indices = @transform_10, window_bounds = array<i64: 1, 8>}, {transform_indices = @transform_11, window_bounds = array<i64: 1, 288, 8>}]} {
    %cst = arith.constant 0.000000e+00 : f32
    %0 = vector.broadcast %cst : f32 to vector<288x8xf32>
    %c0 = arith.constant 0 : index
    %c0_0 = arith.constant 0 : index
    %c0_1 = arith.constant 0 : index
    %1 = vector.load %arg1[%c0, %c0_0, %c0_1] : memref<1x324x12xbf16, #tpu.memory_space<vmem>>, vector<1x288x12xbf16>
    %2 = vector.shape_cast %1 : vector<1x288x12xbf16> to vector<288x12xbf16>
    %c0_2 = arith.constant 0 : index
    %c0_3 = arith.constant 0 : index
    %c0_4 = arith.constant 0 : index
    %3 = vector.load %arg3[%c0_2, %c0_3, %c0_4] : memref<3x12x8xbf16, #tpu.memory_space<vmem>>, vector<1x12x8xbf16>
    %4 = vector.shape_cast %3 : vector<1x12x8xbf16> to vector<12x8xbf16>
    %cst_5 = arith.constant dense<0.000000e+00> : vector<288x8xf32>
    %5 = tpu.matmul %2, %4, %cst_5 {dimension_numbers = #tpu.dot_dimension_numbers<[1], [0], [0], [1], [0, 0, 1, 1], [], []>} : vector<288x12xbf16>, vector<12x8xbf16>, vector<288x8xf32> -> vector<288x8xf32>
    %6 = arith.addf %0, %5 : vector<288x8xf32>
    %c0_6 = arith.constant 0 : index
    %c18 = arith.constant 18 : index
    %c0_7 = arith.constant 0 : index
    %7 = vector.load %arg1[%c0_6, %c18, %c0_7] : memref<1x324x12xbf16, #tpu.memory_space<vmem>>, vector<1x288x12xbf16>
    %8 = vector.shape_cast %7 : vector<1x288x12xbf16> to vector<288x12xbf16>
    %c1 = arith.constant 1 : index
    %c0_8 = arith.constant 0 : index
    %c0_9 = arith.constant 0 : index
    %9 = vector.load %arg3[%c1, %c0_8, %c0_9] : memref<3x12x8xbf16, #tpu.memory_space<vmem>>, vector<1x12x8xbf16>
    %10 = vector.shape_cast %9 : vector<1x12x8xbf16> to vector<12x8xbf16>
    %cst_10 = arith.constant dense<0.000000e+00> : vector<288x8xf32>
    %11 = tpu.matmul %8, %10, %cst_10 {dimension_numbers = #tpu.dot_dimension_numbers<[1], [0], [0], [1], [0, 0, 1, 1], [], []>} : vector<288x12xbf16>, vector<12x8xbf16>, vector<288x8xf32> -> vector<288x8xf32>
    %12 = arith.addf %6, %11 : vector<288x8xf32>
    %c0_11 = arith.constant 0 : index
    %c36 = arith.constant 36 : index
    %c0_12 = arith.constant 0 : index
    %13 = vector.load %arg1[%c0_11, %c36, %c0_12] : memref<1x324x12xbf16, #tpu.memory_space<vmem>>, vector<1x288x12xbf16>
    %14 = vector.shape_cast %13 : vector<1x288x12xbf16> to vector<288x12xbf16>
    %c2 = arith.constant 2 : index
    %c0_13 = arith.constant 0 : index
    %c0_14 = arith.constant 0 : index
    %15 = vector.load %arg3[%c2, %c0_13, %c0_14] : memref<3x12x8xbf16, #tpu.memory_space<vmem>>, vector<1x12x8xbf16>
    %16 = vector.shape_cast %15 : vector<1x12x8xbf16> to vector<12x8xbf16>
    %cst_15 = arith.constant dense<0.000000e+00> : vector<288x8xf32>
    %17 = tpu.matmul %14, %16, %cst_15 {dimension_numbers = #tpu.dot_dimension_numbers<[1], [0], [0], [1], [0, 0, 1, 1], [], []>} : vector<288x12xbf16>, vector<12x8xbf16>, vector<288x8xf32> -> vector<288x8xf32>
    %18 = arith.addf %12, %17 : vector<288x8xf32>
    %c0_16 = arith.constant 0 : index
    %c0_17 = arith.constant 0 : index
    %19 = vector.load %arg6[%c0_16, %c0_17] : memref<1x8xf32, #tpu.memory_space<vmem>>, vector<1x8xf32>
    %20 = vector.broadcast %19 : vector<1x8xf32> to vector<288x8xf32>
    %21 = arith.mulf %18, %20 : vector<288x8xf32>
    %c0_18 = arith.constant 0 : index
    %c0_19 = arith.constant 0 : index
    %22 = vector.load %arg7[%c0_18, %c0_19] : memref<1x8xf32, #tpu.memory_space<vmem>>, vector<1x8xf32>
    %23 = vector.broadcast %22 : vector<1x8xf32> to vector<288x8xf32>
    %24 = arith.addf %21, %23 : vector<288x8xf32>
    %cst_20 = arith.constant 0.000000e+00 : f32
    %25 = vector.broadcast %cst_20 : f32 to vector<288x8xf32>
    %26 = arith.maximumf %24, %25 : vector<288x8xf32>
    %27 = tpu.iota {dimensions = array<i32: 0>} : vector<288x8xi32>
    %c18_i32 = arith.constant 18 : i32
    %c0_i32 = arith.constant 0 : i32
    %28 = arith.cmpi eq, %c18_i32, %c0_i32 : i32
    %c1_i32 = arith.constant 1 : i32
    %29 = arith.select %28, %c1_i32, %c18_i32 : i32
    %30 = vector.broadcast %29 : i32 to vector<288x8xi32>
    %31 = arith.remsi %27, %30 : vector<288x8xi32>
    %c0_i32_21 = arith.constant 0 : i32
    %32 = vector.broadcast %c0_i32_21 : i32 to vector<288x8xi32>
    %33 = arith.cmpi ne, %31, %32 : vector<288x8xi32>
    %c0_i32_22 = arith.constant 0 : i32
    %34 = vector.broadcast %c0_i32_22 : i32 to vector<288x8xi32>
    %35 = arith.cmpi slt, %31, %34 : vector<288x8xi32>
    %c0_i32_23 = arith.constant 0 : i32
    %36 = arith.cmpi slt, %29, %c0_i32_23 : i32
    %37 = vector.broadcast %36 : i1 to vector<288x8xi1>
    %38 = vector.broadcast %37 : vector<288x8xi1> to vector<288x8xi1>
    %39 = arith.xori %35, %38 : vector<288x8xi1>
    %40 = arith.andi %39, %33 : vector<288x8xi1>
    %41 = vector.broadcast %29 : i32 to vector<288x8xi32>
    %42 = arith.addi %31, %41 : vector<288x8xi32>
    %43 = arith.select %40, %42, %31 : vector<288x8xi1>, vector<288x8xi32>
    %c16_i32 = arith.constant 16 : i32
    %44 = vector.broadcast %c16_i32 : i32 to vector<288x8xi32>
    %45 = arith.cmpi slt, %43, %44 : vector<288x8xi32>
    %cst_24 = arith.constant 0.000000e+00 : f32
    %46 = vector.broadcast %cst_24 : f32 to vector<288x8xf32>
    %47 = arith.select %45, %26, %46 : vector<288x8xi1>, vector<288x8xf32>
    %cst_25 = arith.constant 0.000000e+00 : f32
    %48 = vector.broadcast %cst_25 : f32 to vector<332x8xf32>
    %c0_26 = arith.constant 0 : index
    %c0_27 = arith.constant 0 : index
    %49 = vector.load %arg13[%c0_26, %c0_27] : memref<332x8xf32, #tpu.memory_space<vmem>>, vector<332x8xf32>
    tpu.vector_store %arg13[%c0_26, %c0_27], %48 {strides = array<i32>} : memref<332x8xf32, #tpu.memory_space<vmem>>, vector<332x8xf32>,
    %c19 = arith.constant 19 : index
    %c0_28 = arith.constant 0 : index
    %50 = vector.load %arg13[%c19, %c0_28] : memref<332x8xf32, #tpu.memory_space<vmem>>, vector<288x8xf32>
    tpu.vector_store %arg13[%c19, %c0_28], %47 {strides = array<i32>} : memref<332x8xf32, #tpu.memory_space<vmem>>, vector<288x8xf32>,
    %cst_29 = arith.constant 0.000000e+00 : f32
    %51 = vector.broadcast %cst_29 : f32 to vector<288x8xf32>
    %c0_30 = arith.constant 0 : index
    %c0_31 = arith.constant 0 : index
    %52 = vector.load %arg13[%c0_30, %c0_31] : memref<332x8xf32, #tpu.memory_space<vmem>>, vector<288x8xf32>
    %53 = arith.truncf %52 : vector<288x8xf32> to vector<288x8xbf16>
    %c0_32 = arith.constant 0 : index
    %c0_33 = arith.constant 0 : index
    %c0_34 = arith.constant 0 : index
    %54 = vector.load %arg4[%c0_32, %c0_33, %c0_34] : memref<9x8x8xbf16, #tpu.memory_space<vmem>>, vector<1x8x8xbf16>
    %55 = vector.shape_cast %54 : vector<1x8x8xbf16> to vector<8x8xbf16>
    %cst_35 = arith.constant dense<0.000000e+00> : vector<288x8xf32>
    %56 = tpu.matmul %53, %55, %cst_35 {dimension_numbers = #tpu.dot_dimension_numbers<[1], [0], [0], [1], [0, 0, 1, 1], [], []>} : vector<288x8xbf16>, vector<8x8xbf16>, vector<288x8xf32> -> vector<288x8xf32>
    %57 = arith.addf %51, %56 : vector<288x8xf32>
    %c1_36 = arith.constant 1 : index
    %c0_37 = arith.constant 0 : index
    %58 = vector.load %arg13[%c1_36, %c0_37] : memref<332x8xf32, #tpu.memory_space<vmem>>, vector<288x8xf32>
    %59 = arith.truncf %58 : vector<288x8xf32> to vector<288x8xbf16>
    %c1_38 = arith.constant 1 : index
    %c0_39 = arith.constant 0 : index
    %c0_40 = arith.constant 0 : index
    %60 = vector.load %arg4[%c1_38, %c0_39, %c0_40] : memref<9x8x8xbf16, #tpu.memory_space<vmem>>, vector<1x8x8xbf16>
    %61 = vector.shape_cast %60 : vector<1x8x8xbf16> to vector<8x8xbf16>
    %cst_41 = arith.constant dense<0.000000e+00> : vector<288x8xf32>
    %62 = tpu.matmul %59, %61, %cst_41 {dimension_numbers = #tpu.dot_dimension_numbers<[1], [0], [0], [1], [0, 0, 1, 1], [], []>} : vector<288x8xbf16>, vector<8x8xbf16>, vector<288x8xf32> -> vector<288x8xf32>
    %63 = arith.addf %57, %62 : vector<288x8xf32>
    %c2_42 = arith.constant 2 : index
    %c0_43 = arith.constant 0 : index
    %64 = vector.load %arg13[%c2_42, %c0_43] : memref<332x8xf32, #tpu.memory_space<vmem>>, vector<288x8xf32>
    %65 = arith.truncf %64 : vector<288x8xf32> to vector<288x8xbf16>
    %c2_44 = arith.constant 2 : index
    %c0_45 = arith.constant 0 : index
    %c0_46 = arith.constant 0 : index
    %66 = vector.load %arg4[%c2_44, %c0_45, %c0_46] : memref<9x8x8xbf16, #tpu.memory_space<vmem>>, vector<1x8x8xbf16>
    %67 = vector.shape_cast %66 : vector<1x8x8xbf16> to vector<8x8xbf16>
    %cst_47 = arith.constant dense<0.000000e+00> : vector<288x8xf32>
    %68 = tpu.matmul %65, %67, %cst_47 {dimension_numbers = #tpu.dot_dimension_numbers<[1], [0], [0], [1], [0, 0, 1, 1], [], []>} : vector<288x8xbf16>, vector<8x8xbf16>, vector<288x8xf32> -> vector<288x8xf32>
    %69 = arith.addf %63, %68 : vector<288x8xf32>
    %c18_48 = arith.constant 18 : index
    %c0_49 = arith.constant 0 : index
    %70 = vector.load %arg13[%c18_48, %c0_49] : memref<332x8xf32, #tpu.memory_space<vmem>>, vector<288x8xf32>
    %71 = arith.truncf %70 : vector<288x8xf32> to vector<288x8xbf16>
    %c3 = arith.constant 3 : index
    %c0_50 = arith.constant 0 : index
    %c0_51 = arith.constant 0 : index
    %72 = vector.load %arg4[%c3, %c0_50, %c0_51] : memref<9x8x8xbf16, #tpu.memory_space<vmem>>, vector<1x8x8xbf16>
    %73 = vector.shape_cast %72 : vector<1x8x8xbf16> to vector<8x8xbf16>
    %cst_52 = arith.constant dense<0.000000e+00> : vector<288x8xf32>
    %74 = tpu.matmul %71, %73, %cst_52 {dimension_numbers = #tpu.dot_dimension_numbers<[1], [0], [0], [1], [0, 0, 1, 1], [], []>} : vector<288x8xbf16>, vector<8x8xbf16>, vector<288x8xf32> -> vector<288x8xf32>
    %75 = arith.addf %69, %74 : vector<288x8xf32>
    %c19_53 = arith.constant 19 : index
    %c0_54 = arith.constant 0 : index
    %76 = vector.load %arg13[%c19_53, %c0_54] : memref<332x8xf32, #tpu.memory_space<vmem>>, vector<288x8xf32>
    %77 = arith.truncf %76 : vector<288x8xf32> to vector<288x8xbf16>
    %c4 = arith.constant 4 : index
    %c0_55 = arith.constant 0 : index
    %c0_56 = arith.constant 0 : index
    %78 = vector.load %arg4[%c4, %c0_55, %c0_56] : memref<9x8x8xbf16, #tpu.memory_space<vmem>>, vector<1x8x8xbf16>
    %79 = vector.shape_cast %78 : vector<1x8x8xbf16> to vector<8x8xbf16>
    %cst_57 = arith.constant dense<0.000000e+00> : vector<288x8xf32>
    %80 = tpu.matmul %77, %79, %cst_57 {dimension_numbers = #tpu.dot_dimension_numbers<[1], [0], [0], [1], [0, 0, 1, 1], [], []>} : vector<288x8xbf16>, vector<8x8xbf16>, vector<288x8xf32> -> vector<288x8xf32>
    %81 = arith.addf %75, %80 : vector<288x8xf32>
    %c20 = arith.constant 20 : index
    %c0_58 = arith.constant 0 : index
    %82 = vector.load %arg13[%c20, %c0_58] : memref<332x8xf32, #tpu.memory_space<vmem>>, vector<288x8xf32>
    %83 = arith.truncf %82 : vector<288x8xf32> to vector<288x8xbf16>
    %c5 = arith.constant 5 : index
    %c0_59 = arith.constant 0 : index
    %c0_60 = arith.constant 0 : index
    %84 = vector.load %arg4[%c5, %c0_59, %c0_60] : memref<9x8x8xbf16, #tpu.memory_space<vmem>>, vector<1x8x8xbf16>
    %85 = vector.shape_cast %84 : vector<1x8x8xbf16> to vector<8x8xbf16>
    %cst_61 = arith.constant dense<0.000000e+00> : vector<288x8xf32>
    %86 = tpu.matmul %83, %85, %cst_61 {dimension_numbers = #tpu.dot_dimension_numbers<[1], [0], [0], [1], [0, 0, 1, 1], [], []>} : vector<288x8xbf16>, vector<8x8xbf16>, vector<288x8xf32> -> vector<288x8xf32>
    %87 = arith.addf %81, %86 : vector<288x8xf32>
    %c36_62 = arith.constant 36 : index
    %c0_63 = arith.constant 0 : index
    %88 = vector.load %arg13[%c36_62, %c0_63] : memref<332x8xf32, #tpu.memory_space<vmem>>, vector<288x8xf32>
    %89 = arith.truncf %88 : vector<288x8xf32> to vector<288x8xbf16>
    %c6 = arith.constant 6 : index
    %c0_64 = arith.constant 0 : index
    %c0_65 = arith.constant 0 : index
    %90 = vector.load %arg4[%c6, %c0_64, %c0_65] : memref<9x8x8xbf16, #tpu.memory_space<vmem>>, vector<1x8x8xbf16>
    %91 = vector.shape_cast %90 : vector<1x8x8xbf16> to vector<8x8xbf16>
    %cst_66 = arith.constant dense<0.000000e+00> : vector<288x8xf32>
    %92 = tpu.matmul %89, %91, %cst_66 {dimension_numbers = #tpu.dot_dimension_numbers<[1], [0], [0], [1], [0, 0, 1, 1], [], []>} : vector<288x8xbf16>, vector<8x8xbf16>, vector<288x8xf32> -> vector<288x8xf32>
    %93 = arith.addf %87, %92 : vector<288x8xf32>
    %c37 = arith.constant 37 : index
    %c0_67 = arith.constant 0 : index
    %94 = vector.load %arg13[%c37, %c0_67] : memref<332x8xf32, #tpu.memory_space<vmem>>, vector<288x8xf32>
    %95 = arith.truncf %94 : vector<288x8xf32> to vector<288x8xbf16>
    %c7 = arith.constant 7 : index
    %c0_68 = arith.constant 0 : index
    %c0_69 = arith.constant 0 : index
    %96 = vector.load %arg4[%c7, %c0_68, %c0_69] : memref<9x8x8xbf16, #tpu.memory_space<vmem>>, vector<1x8x8xbf16>
    %97 = vector.shape_cast %96 : vector<1x8x8xbf16> to vector<8x8xbf16>
    %cst_70 = arith.constant dense<0.000000e+00> : vector<288x8xf32>
    %98 = tpu.matmul %95, %97, %cst_70 {dimension_numbers = #tpu.dot_dimension_numbers<[1], [0], [0], [1], [0, 0, 1, 1], [], []>} : vector<288x8xbf16>, vector<8x8xbf16>, vector<288x8xf32> -> vector<288x8xf32>
    %99 = arith.addf %93, %98 : vector<288x8xf32>
    %c38 = arith.constant 38 : index
    %c0_71 = arith.constant 0 : index
    %100 = vector.load %arg13[%c38, %c0_71] : memref<332x8xf32, #tpu.memory_space<vmem>>, vector<288x8xf32>
    %101 = arith.truncf %100 : vector<288x8xf32> to vector<288x8xbf16>
    %c8 = arith.constant 8 : index
    %c0_72 = arith.constant 0 : index
    %c0_73 = arith.constant 0 : index
    %102 = vector.load %arg4[%c8, %c0_72, %c0_73] : memref<9x8x8xbf16, #tpu.memory_space<vmem>>, vector<1x8x8xbf16>
    %103 = vector.shape_cast %102 : vector<1x8x8xbf16> to vector<8x8xbf16>
    %cst_74 = arith.constant dense<0.000000e+00> : vector<288x8xf32>
    %104 = tpu.matmul %101, %103, %cst_74 {dimension_numbers = #tpu.dot_dimension_numbers<[1], [0], [0], [1], [0, 0, 1, 1], [], []>} : vector<288x8xbf16>, vector<8x8xbf16>, vector<288x8xf32> -> vector<288x8xf32>
    %105 = arith.addf %99, %104 : vector<288x8xf32>
    %c0_75 = arith.constant 0 : index
    %c0_76 = arith.constant 0 : index
    %106 = vector.load %arg8[%c0_75, %c0_76] : memref<1x8xf32, #tpu.memory_space<vmem>>, vector<1x8xf32>
    %107 = vector.broadcast %106 : vector<1x8xf32> to vector<288x8xf32>
    %108 = arith.mulf %105, %107 : vector<288x8xf32>
    %c0_77 = arith.constant 0 : index
    %c0_78 = arith.constant 0 : index
    %109 = vector.load %arg9[%c0_77, %c0_78] : memref<1x8xf32, #tpu.memory_space<vmem>>, vector<1x8xf32>
    %110 = vector.broadcast %109 : vector<1x8xf32> to vector<288x8xf32>
    %111 = arith.addf %108, %110 : vector<288x8xf32>
    %c0_79 = arith.constant 0 : index
    %c0_80 = arith.constant 0 : index
    %c0_81 = arith.constant 0 : index
    %112 = vector.load %arg2[%c0_79, %c0_80, %c0_81] : memref<1x288x4xbf16, #tpu.memory_space<vmem>>, vector<1x288x4xbf16>
    %113 = vector.shape_cast %112 : vector<1x288x4xbf16> to vector<288x4xbf16>
    %c0_82 = arith.constant 0 : index
    %c0_83 = arith.constant 0 : index
    %114 = vector.load %arg5[%c0_82, %c0_83] : memref<4x8xbf16, #tpu.memory_space<vmem>>, vector<4x8xbf16>
    %cst_84 = arith.constant dense<0.000000e+00> : vector<288x8xf32>
    %115 = tpu.matmul %113, %114, %cst_84 {dimension_numbers = #tpu.dot_dimension_numbers<[1], [0], [0], [1], [0, 0, 1, 1], [], []>} : vector<288x4xbf16>, vector<4x8xbf16>, vector<288x8xf32> -> vector<288x8xf32>
    %c0_85 = arith.constant 0 : index
    %c0_86 = arith.constant 0 : index
    %116 = vector.load %arg10[%c0_85, %c0_86] : memref<1x8xf32, #tpu.memory_space<vmem>>, vector<1x8xf32>
    %117 = vector.broadcast %116 : vector<1x8xf32> to vector<288x8xf32>
    %118 = arith.mulf %115, %117 : vector<288x8xf32>
    %c0_87 = arith.constant 0 : index
    %c0_88 = arith.constant 0 : index
    %119 = vector.load %arg11[%c0_87, %c0_88] : memref<1x8xf32, #tpu.memory_space<vmem>>, vector<1x8xf32>
    %120 = vector.broadcast %119 : vector<1x8xf32> to vector<288x8xf32>
    %121 = arith.addf %118, %120 : vector<288x8xf32>
    %122 = arith.addf %111, %121 : vector<288x8xf32>
    %cst_89 = arith.constant 0.000000e+00 : f32
    %123 = vector.broadcast %cst_89 : f32 to vector<288x8xf32>
    %124 = arith.maximumf %122, %123 : vector<288x8xf32>
    %c0_90 = arith.constant 0 : index
    %c0_91 = arith.constant 0 : index
    %c0_92 = arith.constant 0 : index
    %125 = vector.load %arg12[%c0_90, %c0_91, %c0_92] : memref<1x288x8xf32, #tpu.memory_space<vmem>>, vector<1x288x8xf32>
    %126 = vector.shape_cast %125 : vector<1x288x8xf32> to vector<288x8xf32>
    %127 = vector.shape_cast %124 : vector<288x8xf32> to vector<1x288x8xf32>
    tpu.vector_store %arg12[%c0_90, %c0_91, %c0_92], %127 {strides = array<i32>} : memref<1x288x8xf32, #tpu.memory_space<vmem>>, vector<1x288x8xf32>,
    return
  }
  func.func @transform_0(%arg0: i32) -> (i32, i32, i32) {
    %c0_i32 = arith.constant 0 : i32
    %c0_i32_0 = arith.constant 0 : i32
    %c0_i32_1 = arith.constant 0 : i32
    return %arg0, %c0_i32, %c0_i32_0 : i32, i32, i32
  }
  func.func @transform_1(%arg0: i32) -> (i32, i32, i32) {
    %c0_i32 = arith.constant 0 : i32
    %c0_i32_0 = arith.constant 0 : i32
    %c0_i32_1 = arith.constant 0 : i32
    return %arg0, %c0_i32, %c0_i32_0 : i32, i32, i32
  }
  func.func @transform_2(%arg0: i32) -> (i32, i32, i32) {
    %c0_i32 = arith.constant 0 : i32
    %c0_i32_0 = arith.constant 0 : i32
    %c0_i32_1 = arith.constant 0 : i32
    %c0_i32_2 = arith.constant 0 : i32
    return %c0_i32, %c0_i32_0, %c0_i32_1 : i32, i32, i32
  }
  func.func @transform_3(%arg0: i32) -> (i32, i32, i32) {
    %c0_i32 = arith.constant 0 : i32
    %c0_i32_0 = arith.constant 0 : i32
    %c0_i32_1 = arith.constant 0 : i32
    %c0_i32_2 = arith.constant 0 : i32
    return %c0_i32, %c0_i32_0, %c0_i32_1 : i32, i32, i32
  }
  func.func @transform_4(%arg0: i32) -> (i32, i32) {
    %c0_i32 = arith.constant 0 : i32
    %c0_i32_0 = arith.constant 0 : i32
    %c0_i32_1 = arith.constant 0 : i32
    return %c0_i32, %c0_i32_0 : i32, i32
  }
  func.func @transform_5(%arg0: i32) -> (i32, i32) {
    %c0_i32 = arith.constant 0 : i32
    %c0_i32_0 = arith.constant 0 : i32
    %c0_i32_1 = arith.constant 0 : i32
    return %c0_i32, %c0_i32_0 : i32, i32
  }
  func.func @transform_6(%arg0: i32) -> (i32, i32) {
    %c0_i32 = arith.constant 0 : i32
    %c0_i32_0 = arith.constant 0 : i32
    %c0_i32_1 = arith.constant 0 : i32
    return %c0_i32, %c0_i32_0 : i32, i32
  }
  func.func @transform_7(%arg0: i32) -> (i32, i32) {
    %c0_i32 = arith.constant 0 : i32
    %c0_i32_0 = arith.constant 0 : i32
    %c0_i32_1 = arith.constant 0 : i32
    return %c0_i32, %c0_i32_0 : i32, i32
  }
  func.func @transform_8(%arg0: i32) -> (i32, i32) {
    %c0_i32 = arith.constant 0 : i32
    %c0_i32_0 = arith.constant 0 : i32
    %c0_i32_1 = arith.constant 0 : i32
    return %c0_i32, %c0_i32_0 : i32, i32
  }
  func.func @transform_9(%arg0: i32) -> (i32, i32) {
    %c0_i32 = arith.constant 0 : i32
    %c0_i32_0 = arith.constant 0 : i32
    %c0_i32_1 = arith.constant 0 : i32
    return %c0_i32, %c0_i32_0 : i32, i32
  }
  func.func @transform_10(%arg0: i32) -> (i32, i32) {
    %c0_i32 = arith.constant 0 : i32
    %c0_i32_0 = arith.constant 0 : i32
    %c0_i32_1 = arith.constant 0 : i32
    return %c0_i32, %c0_i32_0 : i32, i32
  }
  func.func @transform_11(%arg0: i32) -> (i32, i32, i32) {
    %c0_i32 = arith.constant 0 : i32
    %c0_i32_0 = arith.constant 0 : i32
    %c0_i32_1 = arith.constant 0 : i32
    return %arg0, %c0_i32, %c0_i32_0 : i32, i32, i32
  }
}

</mosaic_0001>

<llo_original>
// kernel: tpu_custom_call.1
$region0: #{tpu_custom_call.1}
  #allocation0 [shape = 'u32[]', space=smem, size = 0x4, offset = 0x4, fixed_abs, tag = 'smem constant byte address 0x4 - core index']
  #allocation1 [shape = 'u32[72,128]{1,0:T(1,128)}', space=vmem, size = 0x9000, scoped, tag = 'internal scratch']
  #allocation2 [shape = 'f32[332,8]{1,0:T(8,128)}', space=vmem, size = 0x2a000, scoped, tag = 'scratch operand']
  %s0 = inlined_call_operand.vmem [shape: bf16[2,324,12], index: 0, kind: input, shape index: {}]
  %s1 = inlined_call_operand.vmem [shape: bf16[2,288,4], index: 1, kind: input, shape index: {}]
  %s2 = inlined_call_operand.vmem [shape: bf16[3,12,8], index: 2, kind: input, shape index: {}]
  %s3 = inlined_call_operand.vmem [shape: bf16[9,8,8], index: 3, kind: input, shape index: {}]
  %s4 = inlined_call_operand.vmem [shape: bf16[4,8], index: 4, kind: input, shape index: {}]
  %s5 = inlined_call_operand.vmem [shape: f32[1,8], index: 5, kind: input, shape index: {}]
  %s6 = inlined_call_operand.vmem [shape: f32[1,8], index: 6, kind: input, shape index: {}]
  %s7 = inlined_call_operand.vmem [shape: f32[1,8], index: 7, kind: input, shape index: {}]
  %s8 = inlined_call_operand.vmem [shape: f32[1,8], index: 8, kind: input, shape index: {}]
  %s9 = inlined_call_operand.vmem [shape: f32[1,8], index: 9, kind: input, shape index: {}]
  %s10 = inlined_call_operand.vmem [shape: f32[1,8], index: 10, kind: input, shape index: {}]
  %s11 = inlined_call_operand.vmem [shape: f32[2,288,8], index: 11, kind: output, shape index: {}]
  %s12 = sld [smem:[#allocation0]]
  $region77: #{tpu_custom_call.1} parent=0
    _
  %s14 = ssub.s32 1, %s12
  %s15 = scalar_select 0, %s14, %s12
  loop: start=0, step=1, limit=4
  $region2: #{tpu_custom_call.1} parent=0 // loop_pre_header
    _
  $region3: #{tpu_custom_call.1} parent=0 // loop_header
    %s17 = sphi 0, %s21
    %p18 = scmp.ge.s32.totalorder %s17, 4
    %s27 = sphi 0, %s29
    %s30 = sphi 0, %s27
    %s31 = sphi 0, %s30
    %s47 = sphi 0, %s31
    %s53 = sphi 0, %s55
    %s56 = sphi 0, %s53
    %s57 = sphi 0, %s56
    %s73 = sphi 0, %s57
    %s77 = sphi 0, %s77
    %s79 = sphi 0, %s77
    %s80 = sphi 0, %s79
    %s94 = sphi 0, %s80
    %s98 = sphi 0, %s98
    %s100 = sphi 0, %s98
    %s101 = sphi 0, %s100
    %s115 = sphi 0, %s101
    %s119 = sphi 0, %s119
    %s121 = sphi 0, %s119
    %s122 = sphi 0, %s121
    %s136 = sphi 0, %s122
    %s140 = sphi 0, %s140
    %s142 = sphi 0, %s140
    %s143 = sphi 0, %s142
    %s157 = sphi 0, %s143
    %s161 = sphi 0, %s161
    %s163 = sphi 0, %s161
    %s164 = sphi 0, %s163
    %s178 = sphi 0, %s164
    %s182 = sphi 0, %s182
    %s184 = sphi 0, %s182
    %s185 = sphi 0, %s184
    %s199 = sphi 0, %s185
    %s203 = sphi 0, %s203
    %s205 = sphi 0, %s203
    %s206 = sphi 0, %s205
    %s220 = sphi 0, %s206
    %s224 = sphi 0, %s224
    %s226 = sphi 0, %s224
    %s227 = sphi 0, %s226
    %s241 = sphi 0, %s227
    %s245 = sphi 0, %s245
    %s247 = sphi 0, %s245
    %s248 = sphi 0, %s247
    %s262 = sphi 0, %s248
    %s268 = sphi 0, %s270
    %s271 = sphi 0, %s268
    %s272 = sphi 0, %s271
    %s288 = sphi 0, %s272
  $region4: #{tpu_custom_call.1} parent=0 // loop_header_branch
    %20 = sbr.rel (%p18) target = $region8
  $region5: #{tpu_custom_call.1} parent=0 // loop_body
    %s22 = ssub.s32 %s17, 1
    %s23 = ssub.s32 %s17, 2
    %s24 = sadd.s32 %s17, 1
    %s25 = ssub.s32 %s17, %s24
    %p26 = scmp.eq.s32.totalorder %s25, 0
    %s28 = sadd.s32 %s27, 1
    %s29 = scalar_select %p26, %s27, %s28
    %p32 = pneg %p26
    %p33 = scmp.eq.s32.totalorder %s17, 1
    %p34 = por %p32, %p33
    %p35 = scmp.ne.s32.totalorder %s27, %s30
    %p36 = scmp.eq.s32.totalorder %s17, 0
    %p37 = por %p35, %p36
    %p38 = scmp.ne.s32.totalorder %s27, %s30
    %p39 = scmp.eq.s32.totalorder %s22, 1
    %p40 = por %p38, %p39
    %p41 = scmp.ne.s32.totalorder %s30, %s31
    %p42 = scmp.eq.s32.totalorder %s22, 0
    %p43 = por %p41, %p42
    %p44 = scmp.ne.s32.totalorder %s30, %s31
    %p45 = scmp.eq.s32.totalorder %s23, 1
    %p46 = por %p44, %p45
    %p48 = scmp.ne.s32.totalorder %s31, %s47
    %p49 = scmp.eq.s32.totalorder %s23, 0
    %p50 = por %p48, %p49
    %s51 = ssub.s32 %s17, %s24
    %p52 = scmp.eq.s32.totalorder %s51, 0
    %s54 = sadd.s32 %s53, 1
    %s55 = scalar_select %p52, %s53, %s54
    %p58 = pneg %p52
    %p59 = scmp.eq.s32.totalorder %s17, 1
    %p60 = por %p58, %p59
    %p61 = scmp.ne.s32.totalorder %s53, %s56
    %p62 = scmp.eq.s32.totalorder %s17, 0
    %p63 = por %p61, %p62
    %p64 = scmp.ne.s32.totalorder %s53, %s56
    %p65 = scmp.eq.s32.totalorder %s22, 1
    %p66 = por %p64, %p65
    %p67 = scmp.ne.s32.totalorder %s56, %s57
    %p68 = scmp.eq.s32.totalorder %s22, 0
    %p69 = por %p67, %p68
    %p70 = scmp.ne.s32.totalorder %s56, %s57
    %p71 = scmp.eq.s32.totalorder %s23, 1
    %p72 = por %p70, %p71
    %p74 = scmp.ne.s32.totalorder %s57, %s73
    %p75 = scmp.eq.s32.totalorder %s23, 0
    %p76 = por %p74, %p75
    %s78 = sadd.s32 %s77, 1
    %p81 = scmp.eq.s32.totalorder %s17, 1
    %p82 = scmp.ne.s32.totalorder %s77, %s79
    %p83 = scmp.eq.s32.totalorder %s17, 0
    %p84 = por %p82, %p83
    %p85 = scmp.ne.s32.totalorder %s77, %s79
    %p86 = scmp.eq.s32.totalorder %s22, 1
    %p87 = por %p85, %p86
    %p88 = scmp.ne.s32.totalorder %s79, %s80
    %p89 = scmp.eq.s32.totalorder %s22, 0
    %p90 = por %p88, %p89
    %p91 = scmp.ne.s32.totalorder %s79, %s80
    %p92 = scmp.eq.s32.totalorder %s23, 1
    %p93 = por %p91, %p92
    %p95 = scmp.ne.s32.totalorder %s80, %s94
    %p96 = scmp.eq.s32.totalorder %s23, 0
    %p97 = por %p95, %p96
    %s99 = sadd.s32 %s98, 1
    %p102 = scmp.eq.s32.totalorder %s17, 1
    %p103 = scmp.ne.s32.totalorder %s98, %s100
    %p104 = scmp.eq.s32.totalorder %s17, 0
    %p105 = por %p103, %p104
    %p106 = scmp.ne.s32.totalorder %s98, %s100
    %p107 = scmp.eq.s32.totalorder %s22, 1
    %p108 = por %p106, %p107
    %p109 = scmp.ne.s32.totalorder %s100, %s101
    %p110 = scmp.eq.s32.totalorder %s22, 0
    %p111 = por %p109, %p110
    %p112 = scmp.ne.s32.totalorder %s100, %s101
    %p113 = scmp.eq.s32.totalorder %s23, 1
    %p114 = por %p112, %p113
    %p116 = scmp.ne.s32.totalorder %s101, %s115
    %p117 = scmp.eq.s32.totalorder %s23, 0
    %p118 = por %p116, %p117
    %s120 = sadd.s32 %s119, 1
    %p123 = scmp.eq.s32.totalorder %s17, 1
    %p124 = scmp.ne.s32.totalorder %s119, %s121
    %p125 = scmp.eq.s32.totalorder %s17, 0
    %p126 = por %p124, %p125
    %p127 = scmp.ne.s32.totalorder %s119, %s121
    %p128 = scmp.eq.s32.totalorder %s22, 1
    %p129 = por %p127, %p128
    %p130 = scmp.ne.s32.totalorder %s121, %s122
    %p131 = scmp.eq.s32.totalorder %s22, 0
    %p132 = por %p130, %p131
    %p133 = scmp.ne.s32.totalorder %s121, %s122
    %p134 = scmp.eq.s32.totalorder %s23, 1
    %p135 = por %p133, %p134
    %p137 = scmp.ne.s32.totalorder %s122, %s136
    %p138 = scmp.eq.s32.totalorder %s23, 0
    %p139 = por %p137, %p138
    %s141 = sadd.s32 %s140, 1
    %p144 = scmp.eq.s32.totalorder %s17, 1
    %p145 = scmp.ne.s32.totalorder %s140, %s142
    %p146 = scmp.eq.s32.totalorder %s17, 0
    %p147 = por %p145, %p146
    %p148 = scmp.ne.s32.totalorder %s140, %s142
    %p149 = scmp.eq.s32.totalorder %s22, 1
    %p150 = por %p148, %p149
    %p151 = scmp.ne.s32.totalorder %s142, %s143
    %p152 = scmp.eq.s32.totalorder %s22, 0
    %p153 = por %p151, %p152
    %p154 = scmp.ne.s32.totalorder %s142, %s143
    %p155 = scmp.eq.s32.totalorder %s23, 1
    %p156 = por %p154, %p155
    %p158 = scmp.ne.s32.totalorder %s143, %s157
    %p159 = scmp.eq.s32.totalorder %s23, 0
    %p160 = por %p158, %p159
    %s162 = sadd.s32 %s161, 1
    %p165 = scmp.eq.s32.totalorder %s17, 1
    %p166 = scmp.ne.s32.totalorder %s161, %s163
    %p167 = scmp.eq.s32.totalorder %s17, 0
    %p168 = por %p166, %p167
    %p169 = scmp.ne.s32.totalorder %s161, %s163
    %p170 = scmp.eq.s32.totalorder %s22, 1
    %p171 = por %p169, %p170
    %p172 = scmp.ne.s32.totalorder %s163, %s164
    %p173 = scmp.eq.s32.totalorder %s22, 0
    %p174 = por %p172, %p173
    %p175 = scmp.ne.s32.totalorder %s163, %s164
    %p176 = scmp.eq.s32.totalorder %s23, 1
    %p177 = por %p175, %p176
    %p179 = scmp.ne.s32.totalorder %s164, %s178
    %p180 = scmp.eq.s32.totalorder %s23, 0
    %p181 = por %p179, %p180
    %s183 = sadd.s32 %s182, 1
    %p186 = scmp.eq.s32.totalorder %s17, 1
    %p187 = scmp.ne.s32.totalorder %s182, %s184
    %p188 = scmp.eq.s32.totalorder %s17, 0
    %p189 = por %p187, %p188
    %p190 = scmp.ne.s32.totalorder %s182, %s184
    %p191 = scmp.eq.s32.totalorder %s22, 1
    %p192 = por %p190, %p191
    %p193 = scmp.ne.s32.totalorder %s184, %s185
    %p194 = scmp.eq.s32.totalorder %s22, 0
    %p195 = por %p193, %p194
    %p196 = scmp.ne.s32.totalorder %s184, %s185
    %p197 = scmp.eq.s32.totalorder %s23, 1
    %p198 = por %p196, %p197
    %p200 = scmp.ne.s32.totalorder %s185, %s199
    %p201 = scmp.eq.s32.totalorder %s23, 0
    %p202 = por %p200, %p201
    %s204 = sadd.s32 %s203, 1
    %p207 = scmp.eq.s32.totalorder %s17, 1
    %p208 = scmp.ne.s32.totalorder %s203, %s205
    %p209 = scmp.eq.s32.totalorder %s17, 0
    %p210 = por %p208, %p209
    %p211 = scmp.ne.s32.totalorder %s203, %s205
    %p212 = scmp.eq.s32.totalorder %s22, 1
    %p213 = por %p211, %p212
    %p214 = scmp.ne.s32.totalorder %s205, %s206
    %p215 = scmp.eq.s32.totalorder %s22, 0
    %p216 = por %p214, %p215
    %p217 = scmp.ne.s32.totalorder %s205, %s206
    %p218 = scmp.eq.s32.totalorder %s23, 1
    %p219 = por %p217, %p218
    %p221 = scmp.ne.s32.totalorder %s206, %s220
    %p222 = scmp.eq.s32.totalorder %s23, 0
    %p223 = por %p221, %p222
    %s225 = sadd.s32 %s224, 1
    %p228 = scmp.eq.s32.totalorder %s17, 1
    %p229 = scmp.ne.s32.totalorder %s224, %s226
    %p230 = scmp.eq.s32.totalorder %s17, 0
    %p231 = por %p229, %p230
    %p232 = scmp.ne.s32.totalorder %s224, %s226
    %p233 = scmp.eq.s32.totalorder %s22, 1
    %p234 = por %p232, %p233
    %p235 = scmp.ne.s32.totalorder %s226, %s227
    %p236 = scmp.eq.s32.totalorder %s22, 0
    %p237 = por %p235, %p236
    %p238 = scmp.ne.s32.totalorder %s226, %s227
    %p239 = scmp.eq.s32.totalorder %s23, 1
    %p240 = por %p238, %p239
    %p242 = scmp.ne.s32.totalorder %s227, %s241
    %p243 = scmp.eq.s32.totalorder %s23, 0
    %p244 = por %p242, %p243
    %s246 = sadd.s32 %s245, 1
    %p249 = scmp.eq.s32.totalorder %s17, 1
    %p250 = scmp.ne.s32.totalorder %s245, %s247
    %p251 = scmp.eq.s32.totalorder %s17, 0
    %p252 = por %p250, %p251
    %p253 = scmp.ne.s32.totalorder %s245, %s247
    %p254 = scmp.eq.s32.totalorder %s22, 1
    %p255 = por %p253, %p254
    %p256 = scmp.ne.s32.totalorder %s247, %s248
    %p257 = scmp.eq.s32.totalorder %s22, 0
    %p258 = por %p256, %p257
    %p259 = scmp.ne.s32.totalorder %s247, %s248
    %p260 = scmp.eq.s32.totalorder %s23, 1
    %p261 = por %p259, %p260
    %p263 = scmp.ne.s32.totalorder %s248, %s262
    %p264 = scmp.eq.s32.totalorder %s23, 0
    %p265 = por %p263, %p264
    %s266 = ssub.s32 %s17, %s24
    %p267 = scmp.eq.s32.totalorder %s266, 0
    %s269 = sadd.s32 %s268, 1
    %s270 = scalar_select %p267, %s268, %s269
    %p273 = pneg %p267
    %p274 = scmp.eq.s32.totalorder %s17, 1
    %p275 = por %p273, %p274
    %p276 = scmp.ne.s32.totalorder %s268, %s271
    %p277 = scmp.eq.s32.totalorder %s17, 0
    %p278 = por %p276, %p277
    %p279 = scmp.ne.s32.totalorder %s268, %s271
    %p280 = scmp.eq.s32.totalorder %s22, 1
    %p281 = por %p279, %p280
    %p282 = scmp.ne.s32.totalorder %s271, %s272
    %p283 = scmp.eq.s32.totalorder %s22, 0
    %p284 = por %p282, %p283
    %p285 = scmp.ne.s32.totalorder %s271, %s272
    %p286 = scmp.eq.s32.totalorder %s23, 1
    %p287 = por %p285, %p286
    %p289 = scmp.ne.s32.totalorder %s272, %s288
    %p290 = scmp.eq.s32.totalorder %s23, 0
    %p291 = por %p289, %p290
    %p292 = scmp.le.s32.totalorder 1, %s17
    %p293 = scmp.lt.s32.totalorder %s17, 3
    %p294 = pnand %p292, %p293
    %p295 = pneg %p294
    // Predicated region
    $region9: #{tpu_custom_call.1} parent=5 // pred_check
      _
    $region10: #{tpu_custom_call.1} parent=5 // pred_check_branch
      %297 = sbr.rel (%p294) target = $region12
    $region11: #{tpu_custom_call.1} parent=5 // pred_region
      %s298 = ssub.s32 %s17, 1
      // Predicated region
      $region13: #{tpu_custom_call.1} parent=11 // pred_check
        %p299 = pneg %p90
      $region14: #{tpu_custom_call.1} parent=11 // pred_check_branch
        %301 = sbr.rel (%p299) target = $region16
      $region15: #{tpu_custom_call.1} parent=11 // pred_region
        _
      $region16: #{tpu_custom_call.1} parent=11 // pred_fallthru
        _
      // Predicated region
      $region17: #{tpu_custom_call.1} parent=11 // pred_check
        %p302 = pneg %p111
      $region18: #{tpu_custom_call.1} parent=11 // pred_check_branch
        %304 = sbr.rel (%p302) target = $region20
      $region19: #{tpu_custom_call.1} parent=11 // pred_region
        _
      $region20: #{tpu_custom_call.1} parent=11 // pred_fallthru
        _
      // Predicated region
      $region21: #{tpu_custom_call.1} parent=11 // pred_check
        %p305 = pneg %p132
      $region22: #{tpu_custom_call.1} parent=11 // pred_check_branch
        %307 = sbr.rel (%p305) target = $region24
      $region23: #{tpu_custom_call.1} parent=11 // pred_region
        _
      $region24: #{tpu_custom_call.1} parent=11 // pred_fallthru
        _
      // Predicated region
      $region25: #{tpu_custom_call.1} parent=11 // pred_check
        %p308 = pneg %p153
      $region26: #{tpu_custom_call.1} parent=11 // pred_check_branch
        %310 = sbr.rel (%p308) target = $region28
      $region27: #{tpu_custom_call.1} parent=11 // pred_region
        _
      $region28: #{tpu_custom_call.1} parent=11 // pred_fallthru
        _
      // Predicated region
      $region29: #{tpu_custom_call.1} parent=11 // pred_check
        %p311 = pneg %p174
      $region30: #{tpu_custom_call.1} parent=11 // pred_check_branch
        %313 = sbr.rel (%p311) target = $region32
      $region31: #{tpu_custom_call.1} parent=11 // pred_region
        _
      $region32: #{tpu_custom_call.1} parent=11 // pred_fallthru
        _
      // Predicated region
      $region33: #{tpu_custom_call.1} parent=11 // pred_check
        %p314 = pneg %p195
      $region34: #{tpu_custom_call.1} parent=11 // pred_check_branch
        %316 = sbr.rel (%p314) target = $region36
      $region35: #{tpu_custom_call.1} parent=11 // pred_region
        _
      $region36: #{tpu_custom_call.1} parent=11 // pred_fallthru
        _
      // Predicated region
      $region37: #{tpu_custom_call.1} parent=11 // pred_check
        %p317 = pneg %p216
      $region38: #{tpu_custom_call.1} parent=11 // pred_check_branch
        %319 = sbr.rel (%p317) target = $region40
      $region39: #{tpu_custom_call.1} parent=11 // pred_region
        _
      $region40: #{tpu_custom_call.1} parent=11 // pred_fallthru
        _
      // Predicated region
      $region41: #{tpu_custom_call.1} parent=11 // pred_check
        %p320 = pneg %p237
      $region42: #{tpu_custom_call.1} parent=11 // pred_check_branch
        %322 = sbr.rel (%p320) target = $region44
      $region43: #{tpu_custom_call.1} parent=11 // pred_region
        _
      $region44: #{tpu_custom_call.1} parent=11 // pred_fallthru
        _
      // Predicated region
      $region45: #{tpu_custom_call.1} parent=11 // pred_check
        %p323 = pneg %p258
      $region46: #{tpu_custom_call.1} parent=11 // pred_check_branch
        %325 = sbr.rel (%p323) target = $region48
      $region47: #{tpu_custom_call.1} parent=11 // pred_region
        _
      $region48: #{tpu_custom_call.1} parent=11 // pred_fallthru
        _
    $region12: #{tpu_custom_call.1} parent=5 // pred_fallthru
      _
    %p326 = scmp.lt.s32.totalorder %s17, 2
    // Predicated region
    $region49: #{tpu_custom_call.1} parent=5 // pred_check
      %p327 = pneg %p326
    $region50: #{tpu_custom_call.1} parent=5 // pred_check_branch
      %329 = sbr.rel (%p327) target = $region52
    $region51: #{tpu_custom_call.1} parent=5 // pred_region
      // Predicated region
      $region53: #{tpu_custom_call.1} parent=51 // pred_check
        %p330 = pneg %p37
      $region54: #{tpu_custom_call.1} parent=51 // pred_check_branch
        %332 = sbr.rel (%p330) target = $region56
      $region55: #{tpu_custom_call.1} parent=51 // pred_region
        %p333 = scmp.lt.s32.totalorder %s17, 1
        %s334 = scalar_select %p333, %s17, 1
        %s335 = smul.addr %s334, 41
        %s336 = smul.addr %s335, 4
        %s337 = scalar_lea.vmem %s0, %s336
      $region56: #{tpu_custom_call.1} parent=51 // pred_fallthru
        _
      // Predicated region
      $region57: #{tpu_custom_call.1} parent=51 // pred_check
        %p338 = pneg %p63
      $region58: #{tpu_custom_call.1} parent=51 // pred_check_branch
        %340 = sbr.rel (%p338) target = $region60
      $region59: #{tpu_custom_call.1} parent=51 // pred_region
        %p341 = scmp.lt.s32.totalorder %s17, 1
        %s342 = scalar_select %p341, %s17, 1
        %s343 = smul.addr %s342, 36
        %s344 = smul.addr %s343, 4
        %s345 = scalar_lea.vmem %s1, %s344
      $region60: #{tpu_custom_call.1} parent=51 // pred_fallthru
        _
    $region52: #{tpu_custom_call.1} parent=5 // pred_fallthru
      _
    %p346 = scmp.le.s32.totalorder 1, %s17
    %p347 = scmp.lt.s32.totalorder %s17, 3
    %p348 = pnand %p346, %p347
    %p349 = pneg %p348
    // Predicated region
    $region61: #{tpu_custom_call.1} parent=5 // pred_check
      _
    $region62: #{tpu_custom_call.1} parent=5 // pred_check_branch
      %351 = sbr.rel (%p348) target = $region64
    $region63: #{tpu_custom_call.1} parent=5 // pred_region
      %s352 = ssub.s32 %s17, 1
      %p353 = scmp.lt.s32.totalorder %s22, 1
      %s354 = scalar_select %p353, %s22, 1
      %s355 = smul.addr %s354, 41
      %s356 = smul.addr %s355, 4
      %s357 = scalar_lea.vmem %s0, %s356
      %p358 = pneg %p43
      %p359 = pneg %p40
      %p360 = scmp.lt.s32.totalorder %s22, 1
      %s361 = scalar_select %p360, %s22, 1
      %s362 = smul.addr %s361, 36
      %s363 = smul.addr %s362, 4
      %s364 = scalar_lea.vmem %s1, %s363
      %p365 = pneg %p69
      %p366 = pneg %p66
      %p367 = pneg %p90
      %p368 = pneg %p87
      %p369 = pneg %p111
      %p370 = pneg %p108
      %p371 = pneg %p132
      %p372 = pneg %p129
      %p373 = pneg %p153
      %p374 = pneg %p150
      %p375 = pneg %p174
      %p376 = pneg %p171
      %p377 = pneg %p195
      %p378 = pneg %p192
      %p379 = pneg %p216
      %p380 = pneg %p213
      %p381 = pneg %p237
      %p382 = pneg %p234
      %p383 = pneg %p258
      %p384 = pneg %p255
      %p385 = pneg %p284
      %p386 = pneg %p281
      %p387 = scmp.lt.s32.totalorder %s22, 1
      %s388 = scalar_select %p387, %s22, 1
      %s389 = smul.addr %s388, 36
      %s390 = smul.addr %s389, 8
      %s391 = scalar_lea.vmem %s11, %s390
      %p392 = scmp.lt.s32.totalorder %s22, 1
      %s393 = scalar_select %p392, %s22, 1
      %s394 = smul.addr %s393, 41
      %s395 = smul.addr %s394, 4
      %s396 = scalar_lea.vmem %s0, %s395
      %p397 = scmp.lt.s32.totalorder %s22, 1
      %s398 = scalar_select %p397, %s22, 1
      %s399 = smul.addr %s398, 36
      %s400 = smul.addr %s399, 4
      %s401 = scalar_lea.vmem %s1, %s400
      %p402 = scmp.lt.s32.totalorder %s22, 1
      %s403 = scalar_select %p402, %s22, 1
      %s404 = smul.addr %s403, 36
      %s405 = smul.addr %s404, 8
      %s406 = scalar_lea.vmem %s11, %s405
      %v408 = vld [vmem:[%s396] sm:$0xf]
      %v409 = vld [vmem:[%s396 + $0x4] sm:$0xf]
      %v410 = vld [vmem:[%s396 + $0x8] sm:$0xf]
      %v411 = vld [vmem:[%s396 + $0xc] sm:$0xf]
      %v412 = vld [vmem:[%s396 + $0x10] sm:$0xf]
      %v413 = vld [vmem:[%s396 + $0x14] sm:$0xf]
      %v414 = vld [vmem:[%s396 + $0x18] sm:$0xf]
      %v415 = vld [vmem:[%s396 + $0x1c] sm:$0xf]
      %v416 = vld [vmem:[%s396 + $0x20] sm:$0xf]
      %v417 = vld [vmem:[%s396 + $0x24] sm:$0xf]
      %v418 = vld [vmem:[%s396 + $0x28] sm:$0xf]
      %v419 = vld [vmem:[%s396 + $0x2c] sm:$0xf]
      %v420 = vld [vmem:[%s396 + $0x30] sm:$0xf]
      %v421 = vld [vmem:[%s396 + $0x34] sm:$0xf]
      %v422 = vld [vmem:[%s396 + $0x38] sm:$0xf]
      %v423 = vld [vmem:[%s396 + $0x3c] sm:$0xf]
      %v424 = vld [vmem:[%s396 + $0x40] sm:$0xf]
      %v425 = vld [vmem:[%s396 + $0x44] sm:$0xf]
      %v426 = vld [vmem:[%s396 + $0x48] sm:$0xf]
      %v427 = vld [vmem:[%s396 + $0x4c] sm:$0xf]
      %v428 = vld [vmem:[%s396 + $0x50] sm:$0xf]
      %v429 = vld [vmem:[%s396 + $0x54] sm:$0xf]
      %v430 = vld [vmem:[%s396 + $0x58] sm:$0xf]
      %v431 = vld [vmem:[%s396 + $0x5c] sm:$0xf]
      %v432 = vld [vmem:[%s396 + $0x60] sm:$0xf]
      %v433 = vld [vmem:[%s396 + $0x64] sm:$0xf]
      %v434 = vld [vmem:[%s396 + $0x68] sm:$0xf]
      %v435 = vld [vmem:[%s396 + $0x6c] sm:$0xf]
      %v436 = vld [vmem:[%s396 + $0x70] sm:$0xf]
      %v437 = vld [vmem:[%s396 + $0x74] sm:$0xf]
      %v438 = vld [vmem:[%s396 + $0x78] sm:$0xf]
      %v439 = vld [vmem:[%s396 + $0x7c] sm:$0xf]
      %v440 = vld [vmem:[%s396 + $0x80] sm:$0xf]
      %v441 = vld [vmem:[%s396 + $0x84] sm:$0xf]
      %v442 = vld [vmem:[%s396 + $0x88] sm:$0xf]
      %v443 = vld [vmem:[%s396 + $0x8c] sm:$0xf]
      %v444 = vld [vmem:[%s2] sm:$0xf]
      %v445 = vld [vmem:[%s2 + $0x4] sm:$0x3]
      %v446 = vld [vmem:[%s396 + $0x8] sm:$0xe]
      %v447 = vld [vmem:[%s396 + $0x90] sm:$0xf]
      %v448 = vld [vmem:[%s396 + $0x94] sm:$0xf]
      %v449 = vld [vmem:[%s396 + $0x98] sm:$0x1]
      %s450 = scalar_lea.vmem %s2, 8
      %v451 = vld [vmem:[%s450] sm:$0xf]
      %v452 = vld [vmem:[%s450 + $0x4] sm:$0x3]
      %v490 = vunpack.c.l.b16 %v446
      %v491 = vunpack.c.l.b16 %v411
      %v492 = vunpack.c.l.b16 %v412
      %v493 = vunpack.c.l.b16 %v413
      %v494 = vunpack.c.l.b16 %v414
      %v495 = vunpack.c.l.b16 %v415
      %v496 = vunpack.c.l.b16 %v416
      %v497 = vunpack.c.l.b16 %v417
      %v498 = vunpack.c.l.b16 %v418
      %v499 = vunpack.c.l.b16 %v419
      %v500 = vunpack.c.l.b16 %v420
      %v501 = vunpack.c.l.b16 %v421
      %v502 = vunpack.c.l.b16 %v422
      %v503 = vunpack.c.l.b16 %v423
      %v504 = vunpack.c.l.b16 %v424
      %v505 = vunpack.c.l.b16 %v425
      %v506 = vunpack.c.l.b16 %v426
      %v507 = vunpack.c.l.b16 %v427
      %v508 = vunpack.c.l.b16 %v428
      %v509 = vunpack.c.l.b16 %v429
      %v510 = vunpack.c.l.b16 %v430
      %v511 = vunpack.c.l.b16 %v431
      %v512 = vunpack.c.l.b16 %v432
      %v513 = vunpack.c.l.b16 %v433
      %v514 = vunpack.c.l.b16 %v434
      %v515 = vunpack.c.l.b16 %v435
      %v516 = vunpack.c.l.b16 %v436
      %v517 = vunpack.c.l.b16 %v437
      %v518 = vunpack.c.l.b16 %v438
      %v519 = vunpack.c.l.b16 %v439
      %v520 = vunpack.c.l.b16 %v440
      %v521 = vunpack.c.l.b16 %v441
      %v522 = vunpack.c.l.b16 %v442
      %v523 = vunpack.c.l.b16 %v443
      %v524 = vunpack.c.l.b16 %v447
      %v525 = vunpack.c.l.b16 %v448
      %v526 = vunpack.c.l.b16 %v449
      %v527 = vpack.c.b16 %v491, %v490
      %v528 = vpack.c.b16 %v493, %v492
      %v529 = vpack.c.b16 %v495, %v494
      %v530 = vpack.c.b16 %v497, %v496
      %v531 = vpack.c.b16 %v499, %v498
      %v532 = vpack.c.b16 %v501, %v500
      %v533 = vpack.c.b16 %v503, %v502
      %v534 = vpack.c.b16 %v505, %v504
      %v535 = vpack.c.b16 %v507, %v506
      %v536 = vpack.c.b16 %v509, %v508
      %v537 = vpack.c.b16 %v511, %v510
      %v538 = vpack.c.b16 %v513, %v512
      %v539 = vpack.c.b16 %v515, %v514
      %v540 = vpack.c.b16 %v517, %v516
      %v541 = vpack.c.b16 %v519, %v518
      %v542 = vpack.c.b16 %v521, %v520
      %v543 = vpack.c.b16 %v523, %v522
      %v544 = vpack.c.b16 %v525, %v524
      %v545 = vpack.c.b16 %v526, %v526
      %vm546 = vcmask 1046528
      %v547 = vrot.slane %v527, 1
      %v548 = vrot.slane %v528, 1
      %v549 = vsel %vm546, %v547, %v548
      %v550 = vrot.slane %v529, 1
      %v551 = vsel %vm546, %v548, %v550
      %v552 = vrot.slane %v530, 1
      %v553 = vsel %vm546, %v550, %v552
      %v554 = vrot.slane %v531, 1
      %v555 = vsel %vm546, %v552, %v554
      %v556 = vrot.slane %v532, 1
      %v557 = vsel %vm546, %v554, %v556
      %v558 = vrot.slane %v533, 1
      %v559 = vsel %vm546, %v556, %v558
      %v560 = vrot.slane %v534, 1
      %v561 = vsel %vm546, %v558, %v560
      %v562 = vrot.slane %v535, 1
      %v563 = vsel %vm546, %v560, %v562
      %v564 = vrot.slane %v536, 1
      %v565 = vsel %vm546, %v562, %v564
      %v566 = vrot.slane %v537, 1
      %v567 = vsel %vm546, %v564, %v566
      %v568 = vrot.slane %v538, 1
      %v569 = vsel %vm546, %v566, %v568
      %v570 = vrot.slane %v539, 1
      %v571 = vsel %vm546, %v568, %v570
      %v572 = vrot.slane %v540, 1
      %v573 = vsel %vm546, %v570, %v572
      %v574 = vrot.slane %v541, 1
      %v575 = vsel %vm546, %v572, %v574
      %v576 = vrot.slane %v542, 1
      %v577 = vsel %vm546, %v574, %v576
      %v578 = vrot.slane %v543, 1
      %v579 = vsel %vm546, %v576, %v578
      %v580 = vrot.slane %v544, 1
      %v581 = vsel %vm546, %v578, %v580
      %v582 = vrot.slane %v545, 1
      %v583 = vsel %vm546, %v580, %v582
      %v586 = vunpack.c.l.b16 %v451
      %v587 = vunpack.c.l.b16 %v452
      %v588 = vpack.c.b16 %v587, %v586
      %vm589 = vcmask 97280
      %v591 = vsel %vm589, %v549, 0
      %v594 = vsel %vm589, %v551, 0
      %v597 = vsel %vm589, %v553, 0
      %v600 = vsel %vm589, %v555, 0
      %v603 = vsel %vm589, %v557, 0
      %v606 = vsel %vm589, %v559, 0
      %v609 = vsel %vm589, %v561, 0
      %v612 = vsel %vm589, %v563, 0
      %v615 = vsel %vm589, %v565, 0
      %v618 = vsel %vm589, %v567, 0
      %v621 = vsel %vm589, %v569, 0
      %v624 = vsel %vm589, %v571, 0
      %v627 = vsel %vm589, %v573, 0
      %v630 = vsel %vm589, %v575, 0
      %v633 = vsel %vm589, %v577, 0
      %v636 = vsel %vm589, %v579, 0
      %v639 = vsel %vm589, %v581, 0
      %v642 = vsel %vm589, %v583, 0
      %vm644 = vcmask 1045504
      %v646 = vsel %vm644, %v588, 0
      %648 = vmatpush.bf16.msra.mxu0 0
      %649 = vmatpush.bf16.msra.mxu0 0
      %650 = vmatpush.bf16.msra.mxu0 0
      %651 = vmatpush.bf16.msra.mxu0 0
      %652 = vmatpush.bf16.msra.mxu0 0
      %653 = vmatpush.bf16.msra.mxu0 0
      %654 = vmatpush.bf16.msra.mxu0 0
      %655 = vmatpush.bf16.msra.mxu0 %v646
      %656 = vmatmul.bf16.gmra.mxu0 %v591
      %v657 = vpop.f32.mrf.mxu0
      %v658 = vadd.f32 0.0, %v657
      %v659 = vpop.f32.mrf.mxu0
      %v660 = vadd.f32 0.0, %v659
      %661 = vmatmul.bf16.gmra.mxu0 %v594
      %v662 = vpop.f32.mrf.mxu0
      %v663 = vadd.f32 0.0, %v662
      %v664 = vpop.f32.mrf.mxu0
      %v665 = vadd.f32 0.0, %v664
      %666 = vmatmul.bf16.gmra.mxu0 %v597
      %v667 = vpop.f32.mrf.mxu0
      %v668 = vadd.f32 0.0, %v667
      %v669 = vpop.f32.mrf.mxu0
      %v670 = vadd.f32 0.0, %v669
      %671 = vmatmul.bf16.gmra.mxu0 %v600
      %v672 = vpop.f32.mrf.mxu0
      %v673 = vadd.f32 0.0, %v672
      %v674 = vpop.f32.mrf.mxu0
      %v675 = vadd.f32 0.0, %v674
      %676 = vmatmul.bf16.gmra.mxu0 %v603
      %v677 = vpop.f32.mrf.mxu0
      %v678 = vadd.f32 0.0, %v677
      %v679 = vpop.f32.mrf.mxu0
      %v680 = vadd.f32 0.0, %v679
      %681 = vmatmul.bf16.gmra.mxu0 %v606
      %v682 = vpop.f32.mrf.mxu0
      %v683 = vadd.f32 0.0, %v682
      %v684 = vpop.f32.mrf.mxu0
      %v685 = vadd.f32 0.0, %v684
      %686 = vmatmul.bf16.gmra.mxu0 %v609
      %v687 = vpop.f32.mrf.mxu0
      %v688 = vadd.f32 0.0, %v687
      %v689 = vpop.f32.mrf.mxu0
      %v690 = vadd.f32 0.0, %v689
      %691 = vmatmul.bf16.gmra.mxu0 %v612
      %v692 = vpop.f32.mrf.mxu0
      %v693 = vadd.f32 0.0, %v692
      %v694 = vpop.f32.mrf.mxu0
      %v695 = vadd.f32 0.0, %v694
      %696 = vmatmul.bf16.gmra.mxu0 %v615
      %v697 = vpop.f32.mrf.mxu0
      %v698 = vadd.f32 0.0, %v697
      %v699 = vpop.f32.mrf.mxu0
      %v700 = vadd.f32 0.0, %v699
      %701 = vmatmul.bf16.gmra.mxu0 %v618
      %v702 = vpop.f32.mrf.mxu0
      %v703 = vadd.f32 0.0, %v702
      %v704 = vpop.f32.mrf.mxu0
      %v705 = vadd.f32 0.0, %v704
      %706 = vmatmul.bf16.gmra.mxu0 %v621
      %v707 = vpop.f32.mrf.mxu0
      %v708 = vadd.f32 0.0, %v707
      %v709 = vpop.f32.mrf.mxu0
      %v710 = vadd.f32 0.0, %v709
      %711 = vmatmul.bf16.gmra.mxu0 %v624
      %v712 = vpop.f32.mrf.mxu0
      %v713 = vadd.f32 0.0, %v712
      %v714 = vpop.f32.mrf.mxu0
      %v715 = vadd.f32 0.0, %v714
      %716 = vmatmul.bf16.gmra.mxu0 %v627
      %v717 = vpop.f32.mrf.mxu0
      %v718 = vadd.f32 0.0, %v717
      %v719 = vpop.f32.mrf.mxu0
      %v720 = vadd.f32 0.0, %v719
      %721 = vmatmul.bf16.gmra.mxu0 %v630
      %v722 = vpop.f32.mrf.mxu0
      %v723 = vadd.f32 0.0, %v722
      %v724 = vpop.f32.mrf.mxu0
      %v725 = vadd.f32 0.0, %v724
      %726 = vmatmul.bf16.gmra.mxu0 %v633
      %v727 = vpop.f32.mrf.mxu0
      %v728 = vadd.f32 0.0, %v727
      %v729 = vpop.f32.mrf.mxu0
      %v730 = vadd.f32 0.0, %v729
      %731 = vmatmul.bf16.gmra.mxu0 %v636
      %v732 = vpop.f32.mrf.mxu0
      %v733 = vadd.f32 0.0, %v732
      %v734 = vpop.f32.mrf.mxu0
      %v735 = vadd.f32 0.0, %v734
      %736 = vmatmul.bf16.gmra.mxu0 %v639
      %v737 = vpop.f32.mrf.mxu0
      %v738 = vadd.f32 0.0, %v737
      %v739 = vpop.f32.mrf.mxu0
      %v740 = vadd.f32 0.0, %v739
      %741 = vmatmul.bf16.gmra.mxu0 %v642
      %v742 = vpop.f32.mrf.mxu0
      %v743 = vadd.f32 0.0, %v742
      %v744 = vpop.f32.mrf.mxu0
      %v745 = vadd.f32 0.0, %v744
      %746 = vdwg.mxu0
      %v750 = vunpack.c.l.b16 %v408
      %v751 = vunpack.c.l.b16 %v409
      %v752 = vunpack.c.l.b16 %v410
      %v753 = vpack.c.b16 %v751, %v750
      %v754 = vpack.c.b16 %v491, %v752
      %v757 = vunpack.c.l.b16 %v444
      %v758 = vunpack.c.l.b16 %v445
      %v759 = vpack.c.b16 %v758, %v757
      %v761 = vsel %vm589, %v753, 0
      %v764 = vsel %vm589, %v754, 0
      %v767 = vsel %vm589, %v528, 0
      %v770 = vsel %vm589, %v529, 0
      %v773 = vsel %vm589, %v530, 0
      %v776 = vsel %vm589, %v531, 0
      %v779 = vsel %vm589, %v532, 0
      %v782 = vsel %vm589, %v533, 0
      %v785 = vsel %vm589, %v534, 0
      %v788 = vsel %vm589, %v535, 0
      %v791 = vsel %vm589, %v536, 0
      %v794 = vsel %vm589, %v537, 0
      %v797 = vsel %vm589, %v538, 0
      %v800 = vsel %vm589, %v539, 0
      %v803 = vsel %vm589, %v540, 0
      %v806 = vsel %vm589, %v541, 0
      %v809 = vsel %vm589, %v542, 0
      %v812 = vsel %vm589, %v543, 0
      %v815 = vsel %vm644, %v759, 0
      %817 = vmatpush.bf16.msra.mxu0 0
      %818 = vmatpush.bf16.msra.mxu0 0
      %819 = vmatpush.bf16.msra.mxu0 0
      %820 = vmatpush.bf16.msra.mxu0 0
      %821 = vmatpush.bf16.msra.mxu0 0
      %822 = vmatpush.bf16.msra.mxu0 0
      %823 = vmatpush.bf16.msra.mxu0 0
      %824 = vmatpush.bf16.msra.mxu0 %v815
      %825 = vmatmul.bf16.gmra.mxu0 %v761
      %v826 = vpop.f32.mrf.mxu0
      %v827 = vadd.f32 %v658, %v826
      %v828 = vpop.f32.mrf.mxu0
      %v829 = vadd.f32 %v660, %v828
      %830 = vmatmul.bf16.gmra.mxu0 %v764
      %v831 = vpop.f32.mrf.mxu0
      %v832 = vadd.f32 %v663, %v831
      %v833 = vpop.f32.mrf.mxu0
      %v834 = vadd.f32 %v665, %v833
      %835 = vmatmul.bf16.gmra.mxu0 %v767
      %v836 = vpop.f32.mrf.mxu0
      %v837 = vadd.f32 %v668, %v836
      %v838 = vpop.f32.mrf.mxu0
      %v839 = vadd.f32 %v670, %v838
      %840 = vmatmul.bf16.gmra.mxu0 %v770
      %v841 = vpop.f32.mrf.mxu0
      %v842 = vadd.f32 %v673, %v841
      %v843 = vpop.f32.mrf.mxu0
      %v844 = vadd.f32 %v675, %v843
      %845 = vmatmul.bf16.gmra.mxu0 %v773
      %v846 = vpop.f32.mrf.mxu0
      %v847 = vadd.f32 %v678, %v846
      %v848 = vpop.f32.mrf.mxu0
      %v849 = vadd.f32 %v680, %v848
      %850 = vmatmul.bf16.gmra.mxu0 %v776
      %v851 = vpop.f32.mrf.mxu0
      %v852 = vadd.f32 %v683, %v851
      %v853 = vpop.f32.mrf.mxu0
      %v854 = vadd.f32 %v685, %v853
      %855 = vmatmul.bf16.gmra.mxu0 %v779
      %v856 = vpop.f32.mrf.mxu0
      %v857 = vadd.f32 %v688, %v856
      %v858 = vpop.f32.mrf.mxu0
      %v859 = vadd.f32 %v690, %v858
      %860 = vmatmul.bf16.gmra.mxu0 %v782
      %v861 = vpop.f32.mrf.mxu0
      %v862 = vadd.f32 %v693, %v861
      %v863 = vpop.f32.mrf.mxu0
      %v864 = vadd.f32 %v695, %v863
      %865 = vmatmul.bf16.gmra.mxu0 %v785
      %v866 = vpop.f32.mrf.mxu0
      %v867 = vadd.f32 %v698, %v866
      %v868 = vpop.f32.mrf.mxu0
      %v869 = vadd.f32 %v700, %v868
      %870 = vmatmul.bf16.gmra.mxu0 %v788
      %v871 = vpop.f32.mrf.mxu0
      %v872 = vadd.f32 %v703, %v871
      %v873 = vpop.f32.mrf.mxu0
      %v874 = vadd.f32 %v705, %v873
      %875 = vmatmul.bf16.gmra.mxu0 %v791
      %v876 = vpop.f32.mrf.mxu0
      %v877 = vadd.f32 %v708, %v876
      %v878 = vpop.f32.mrf.mxu0
      %v879 = vadd.f32 %v710, %v878
      %880 = vmatmul.bf16.gmra.mxu0 %v794
      %v881 = vpop.f32.mrf.mxu0
      %v882 = vadd.f32 %v713, %v881
      %v883 = vpop.f32.mrf.mxu0
      %v884 = vadd.f32 %v715, %v883
      %885 = vmatmul.bf16.gmra.mxu0 %v797
      %v886 = vpop.f32.mrf.mxu0
      %v887 = vadd.f32 %v718, %v886
      %v888 = vpop.f32.mrf.mxu0
      %v889 = vadd.f32 %v720, %v888
      %890 = vmatmul.bf16.gmra.mxu0 %v800
      %v891 = vpop.f32.mrf.mxu0
      %v892 = vadd.f32 %v723, %v891
      %v893 = vpop.f32.mrf.mxu0
      %v894 = vadd.f32 %v725, %v893
      %895 = vmatmul.bf16.gmra.mxu0 %v803
      %v896 = vpop.f32.mrf.mxu0
      %v897 = vadd.f32 %v728, %v896
      %v898 = vpop.f32.mrf.mxu0
      %v899 = vadd.f32 %v730, %v898
      %900 = vmatmul.bf16.gmra.mxu0 %v806
      %v901 = vpop.f32.mrf.mxu0
      %v902 = vadd.f32 %v733, %v901
      %v903 = vpop.f32.mrf.mxu0
      %v904 = vadd.f32 %v735, %v903
      %905 = vmatmul.bf16.gmra.mxu0 %v809
      %v906 = vpop.f32.mrf.mxu0
      %v907 = vadd.f32 %v738, %v906
      %v908 = vpop.f32.mrf.mxu0
      %v909 = vadd.f32 %v740, %v908
      %910 = vmatmul.bf16.gmra.mxu0 %v812
      %v911 = vpop.f32.mrf.mxu0
      %v912 = vadd.f32 %v743, %v911
      %v913 = vpop.f32.mrf.mxu0
      %v914 = vadd.f32 %v745, %v913
      %915 = vdwg.mxu0
      %v916 = vld [vmem:[%s396 + $0x10] sm:$0xc]
      %v917 = vld [vmem:[%s396 + $0x14] sm:$0xf]
      %v918 = vld [vmem:[%s396 + $0x18] sm:$0xf]
      %v919 = vld [vmem:[%s396 + $0x1c] sm:$0xf]
      %v920 = vld [vmem:[%s396 + $0x20] sm:$0xf]
      %v921 = vld [vmem:[%s396 + $0x24] sm:$0xf]
      %v922 = vld [vmem:[%s396 + $0x28] sm:$0xf]
      %v923 = vld [vmem:[%s396 + $0x2c] sm:$0xf]
      %v924 = vld [vmem:[%s396 + $0x30] sm:$0xf]
      %v925 = vld [vmem:[%s396 + $0x34] sm:$0xf]
      %v926 = vld [vmem:[%s396 + $0x38] sm:$0xf]
      %v927 = vld [vmem:[%s396 + $0x3c] sm:$0xf]
      %v928 = vld [vmem:[%s396 + $0x40] sm:$0xf]
      %v929 = vld [vmem:[%s396 + $0x44] sm:$0xf]
      %v930 = vld [vmem:[%s396 + $0x48] sm:$0xf]
      %v931 = vld [vmem:[%s396 + $0x4c] sm:$0xf]
      %v932 = vld [vmem:[%s396 + $0x50] sm:$0xf]
      %v933 = vld [vmem:[%s396 + $0x54] sm:$0xf]
      %v934 = vld [vmem:[%s396 + $0x58] sm:$0xf]
      %v935 = vld [vmem:[%s396 + $0x5c] sm:$0xf]
      %v936 = vld [vmem:[%s396 + $0x60] sm:$0xf]
      %v937 = vld [vmem:[%s396 + $0x64] sm:$0xf]
      %v938 = vld [vmem:[%s396 + $0x68] sm:$0xf]
      %v939 = vld [vmem:[%s396 + $0x6c] sm:$0xf]
      %v940 = vld [vmem:[%s396 + $0x70] sm:$0xf]
      %v941 = vld [vmem:[%s396 + $0x74] sm:$0xf]
      %v942 = vld [vmem:[%s396 + $0x78] sm:$0xf]
      %v943 = vld [vmem:[%s396 + $0x7c] sm:$0xf]
      %v944 = vld [vmem:[%s396 + $0x80] sm:$0xf]
      %v945 = vld [vmem:[%s396 + $0x84] sm:$0xf]
      %v946 = vld [vmem:[%s396 + $0x88] sm:$0xf]
      %v947 = vld [vmem:[%s396 + $0x8c] sm:$0xf]
      %v948 = vld [vmem:[%s396 + $0x90] sm:$0xf]
      %v949 = vld [vmem:[%s396 + $0x94] sm:$0xf]
      %v950 = vld [vmem:[%s396 + $0x98] sm:$0xf]
      %v951 = vld [vmem:[%s396 + $0x9c] sm:$0xf]
      %v952 = vld [vmem:[%s396 + $0xa0] sm:$0x3]
      %s953 = scalar_lea.vmem %s2, 16
      %v954 = vld [vmem:[%s953] sm:$0xf]
      %v955 = vld [vmem:[%s953 + $0x4] sm:$0x3]
      %v993 = vunpack.c.l.b16 %v916
      %v994 = vunpack.c.l.b16 %v917
      %v995 = vunpack.c.l.b16 %v918
      %v996 = vunpack.c.l.b16 %v919
      %v997 = vunpack.c.l.b16 %v920
      %v998 = vunpack.c.l.b16 %v921
      %v999 = vunpack.c.l.b16 %v922
      %v1000 = vunpack.c.l.b16 %v923
      %v1001 = vunpack.c.l.b16 %v924
      %v1002 = vunpack.c.l.b16 %v925
      %v1003 = vunpack.c.l.b16 %v926
      %v1004 = vunpack.c.l.b16 %v927
      %v1005 = vunpack.c.l.b16 %v928
      %v1006 = vunpack.c.l.b16 %v929
      %v1007 = vunpack.c.l.b16 %v930
      %v1008 = vunpack.c.l.b16 %v931
      %v1009 = vunpack.c.l.b16 %v932
      %v1010 = vunpack.c.l.b16 %v933
      %v1011 = vunpack.c.l.b16 %v934
      %v1012 = vunpack.c.l.b16 %v935
      %v1013 = vunpack.c.l.b16 %v936
      %v1014 = vunpack.c.l.b16 %v937
      %v1015 = vunpack.c.l.b16 %v938
      %v1016 = vunpack.c.l.b16 %v939
      %v1017 = vunpack.c.l.b16 %v940
      %v1018 = vunpack.c.l.b16 %v941
      %v1019 = vunpack.c.l.b16 %v942
      %v1020 = vunpack.c.l.b16 %v943
      %v1021 = vunpack.c.l.b16 %v944
      %v1022 = vunpack.c.l.b16 %v945
      %v1023 = vunpack.c.l.b16 %v946
      %v1024 = vunpack.c.l.b16 %v947
      %v1025 = vunpack.c.l.b16 %v948
      %v1026 = vunpack.c.l.b16 %v949
      %v1027 = vunpack.c.l.b16 %v950
      %v1028 = vunpack.c.l.b16 %v951
      %v1029 = vunpack.c.l.b16 %v952
      %v1030 = vpack.c.b16 %v994, %v993
      %v1031 = vpack.c.b16 %v996, %v995
      %v1032 = vpack.c.b16 %v998, %v997
      %v1033 = vpack.c.b16 %v1000, %v999
      %v1034 = vpack.c.b16 %v1002, %v1001
      %v1035 = vpack.c.b16 %v1004, %v1003
      %v1036 = vpack.c.b16 %v1006, %v1005
      %v1037 = vpack.c.b16 %v1008, %v1007
      %v1038 = vpack.c.b16 %v1010, %v1009
      %v1039 = vpack.c.b16 %v1012, %v1011
      %v1040 = vpack.c.b16 %v1014, %v1013
      %v1041 = vpack.c.b16 %v1016, %v1015
      %v1042 = vpack.c.b16 %v1018, %v1017
      %v1043 = vpack.c.b16 %v1020, %v1019
      %v1044 = vpack.c.b16 %v1022, %v1021
      %v1045 = vpack.c.b16 %v1024, %v1023
      %v1046 = vpack.c.b16 %v1026, %v1025
      %v1047 = vpack.c.b16 %v1028, %v1027
      %v1048 = vpack.c.b16 %v1029, %v1029
      %vm1049 = vcmask 1045504
      %v1050 = vrot.slane %v1030, 2
      %v1051 = vrot.slane %v1031, 2
      %v1052 = vsel %vm1049, %v1050, %v1051
      %v1053 = vrot.slane %v1032, 2
      %v1054 = vsel %vm1049, %v1051, %v1053
      %v1055 = vrot.slane %v1033, 2
      %v1056 = vsel %vm1049, %v1053, %v1055
      %v1057 = vrot.slane %v1034, 2
      %v1058 = vsel %vm1049, %v1055, %v1057
      %v1059 = vrot.slane %v1035, 2
      %v1060 = vsel %vm1049, %v1057, %v1059
      %v1061 = vrot.slane %v1036, 2
      %v1062 = vsel %vm1049, %v1059, %v1061
      %v1063 = vrot.slane %v1037, 2
      %v1064 = vsel %vm1049, %v1061, %v1063
      %v1065 = vrot.slane %v1038, 2
      %v1066 = vsel %vm1049, %v1063, %v1065
      %v1067 = vrot.slane %v1039, 2
      %v1068 = vsel %vm1049, %v1065, %v1067
      %v1069 = vrot.slane %v1040, 2
      %v1070 = vsel %vm1049, %v1067, %v1069
      %v1071 = vrot.slane %v1041, 2
      %v1072 = vsel %vm1049, %v1069, %v1071
      %v1073 = vrot.slane %v1042, 2
      %v1074 = vsel %vm1049, %v1071, %v1073
      %v1075 = vrot.slane %v1043, 2
      %v1076 = vsel %vm1049, %v1073, %v1075
      %v1077 = vrot.slane %v1044, 2
      %v1078 = vsel %vm1049, %v1075, %v1077
      %v1079 = vrot.slane %v1045, 2
      %v1080 = vsel %vm1049, %v1077, %v1079
      %v1081 = vrot.slane %v1046, 2
      %v1082 = vsel %vm1049, %v1079, %v1081
      %v1083 = vrot.slane %v1047, 2
      %v1084 = vsel %vm1049, %v1081, %v1083
      %v1085 = vrot.slane %v1048, 2
      %v1086 = vsel %vm1049, %v1083, %v1085
      %v1089 = vunpack.c.l.b16 %v954
      %v1090 = vunpack.c.l.b16 %v955
      %v1091 = vpack.c.b16 %v1090, %v1089
      %v1093 = vsel %vm589, %v1052, 0
      %v1096 = vsel %vm589, %v1054, 0
      %v1099 = vsel %vm589, %v1056, 0
      %v1102 = vsel %vm589, %v1058, 0
      %v1105 = vsel %vm589, %v1060, 0
      %v1108 = vsel %vm589, %v1062, 0
      %v1111 = vsel %vm589, %v1064, 0
      %v1114 = vsel %vm589, %v1066, 0
      %v1117 = vsel %vm589, %v1068, 0
      %v1120 = vsel %vm589, %v1070, 0
      %v1123 = vsel %vm589, %v1072, 0
      %v1126 = vsel %vm589, %v1074, 0
      %v1129 = vsel %vm589, %v1076, 0
      %v1132 = vsel %vm589, %v1078, 0
      %v1135 = vsel %vm589, %v1080, 0
      %v1138 = vsel %vm589, %v1082, 0
      %v1141 = vsel %vm589, %v1084, 0
      %v1144 = vsel %vm589, %v1086, 0
      %v1147 = vsel %vm644, %v1091, 0
      %1149 = vmatpush.bf16.msra.mxu0 0
      %1150 = vmatpush.bf16.msra.mxu0 0
      %1151 = vmatpush.bf16.msra.mxu0 0
      %1152 = vmatpush.bf16.msra.mxu0 0
      %1153 = vmatpush.bf16.msra.mxu0 0
      %1154 = vmatpush.bf16.msra.mxu0 0
      %1155 = vmatpush.bf16.msra.mxu0 0
      %1156 = vmatpush.bf16.msra.mxu0 %v1147
      %1157 = vmatmul.bf16.gmra.mxu0 %v1093
      %v1158 = vpop.f32.mrf.mxu0
      %v1159 = vadd.f32 0.0, %v1158
      %v1160 = vpop.f32.mrf.mxu0
      %v1161 = vadd.f32 0.0, %v1160
      %1162 = vmatmul.bf16.gmra.mxu0 %v1096
      %v1163 = vpop.f32.mrf.mxu0
      %v1164 = vadd.f32 0.0, %v1163
      %v1165 = vpop.f32.mrf.mxu0
      %v1166 = vadd.f32 0.0, %v1165
      %1167 = vmatmul.bf16.gmra.mxu0 %v1099
      %v1168 = vpop.f32.mrf.mxu0
      %v1169 = vadd.f32 0.0, %v1168
      %v1170 = vpop.f32.mrf.mxu0
      %v1171 = vadd.f32 0.0, %v1170
      %1172 = vmatmul.bf16.gmra.mxu0 %v1102
      %v1173 = vpop.f32.mrf.mxu0
      %v1174 = vadd.f32 0.0, %v1173
      %v1175 = vpop.f32.mrf.mxu0
      %v1176 = vadd.f32 0.0, %v1175
      %1177 = vmatmul.bf16.gmra.mxu0 %v1105
      %v1178 = vpop.f32.mrf.mxu0
      %v1179 = vadd.f32 0.0, %v1178
      %v1180 = vpop.f32.mrf.mxu0
      %v1181 = vadd.f32 0.0, %v1180
      %1182 = vmatmul.bf16.gmra.mxu0 %v1108
      %v1183 = vpop.f32.mrf.mxu0
      %v1184 = vadd.f32 0.0, %v1183
      %v1185 = vpop.f32.mrf.mxu0
      %v1186 = vadd.f32 0.0, %v1185
      %1187 = vmatmul.bf16.gmra.mxu0 %v1111
      %v1188 = vpop.f32.mrf.mxu0
      %v1189 = vadd.f32 0.0, %v1188
      %v1190 = vpop.f32.mrf.mxu0
      %v1191 = vadd.f32 0.0, %v1190
      %1192 = vmatmul.bf16.gmra.mxu0 %v1114
      %v1193 = vpop.f32.mrf.mxu0
      %v1194 = vadd.f32 0.0, %v1193
      %v1195 = vpop.f32.mrf.mxu0
      %v1196 = vadd.f32 0.0, %v1195
      %1197 = vmatmul.bf16.gmra.mxu0 %v1117
      %v1198 = vpop.f32.mrf.mxu0
      %v1199 = vadd.f32 0.0, %v1198
      %v1200 = vpop.f32.mrf.mxu0
      %v1201 = vadd.f32 0.0, %v1200
      %1202 = vmatmul.bf16.gmra.mxu0 %v1120
      %v1203 = vpop.f32.mrf.mxu0
      %v1204 = vadd.f32 0.0, %v1203
      %v1205 = vpop.f32.mrf.mxu0
      %v1206 = vadd.f32 0.0, %v1205
      %1207 = vmatmul.bf16.gmra.mxu0 %v1123
      %v1208 = vpop.f32.mrf.mxu0
      %v1209 = vadd.f32 0.0, %v1208
      %v1210 = vpop.f32.mrf.mxu0
      %v1211 = vadd.f32 0.0, %v1210
      %1212 = vmatmul.bf16.gmra.mxu0 %v1126
      %v1213 = vpop.f32.mrf.mxu0
      %v1214 = vadd.f32 0.0, %v1213
      %v1215 = vpop.f32.mrf.mxu0
      %v1216 = vadd.f32 0.0, %v1215
      %1217 = vmatmul.bf16.gmra.mxu0 %v1129
      %v1218 = vpop.f32.mrf.mxu0
      %v1219 = vadd.f32 0.0, %v1218
      %v1220 = vpop.f32.mrf.mxu0
      %v1221 = vadd.f32 0.0, %v1220
      %1222 = vmatmul.bf16.gmra.mxu0 %v1132
      %v1223 = vpop.f32.mrf.mxu0
      %v1224 = vadd.f32 0.0, %v1223
      %v1225 = vpop.f32.mrf.mxu0
      %v1226 = vadd.f32 0.0, %v1225
      %1227 = vmatmul.bf16.gmra.mxu0 %v1135
      %v1228 = vpop.f32.mrf.mxu0
      %v1229 = vadd.f32 0.0, %v1228
      %v1230 = vpop.f32.mrf.mxu0
      %v1231 = vadd.f32 0.0, %v1230
      %1232 = vmatmul.bf16.gmra.mxu0 %v1138
      %v1233 = vpop.f32.mrf.mxu0
      %v1234 = vadd.f32 0.0, %v1233
      %v1235 = vpop.f32.mrf.mxu0
      %v1236 = vadd.f32 0.0, %v1235
      %1237 = vmatmul.bf16.gmra.mxu0 %v1141
      %v1238 = vpop.f32.mrf.mxu0
      %v1239 = vadd.f32 0.0, %v1238
      %v1240 = vpop.f32.mrf.mxu0
      %v1241 = vadd.f32 0.0, %v1240
      %1242 = vmatmul.bf16.gmra.mxu0 %v1144
      %v1243 = vpop.f32.mrf.mxu0
      %v1244 = vadd.f32 0.0, %v1243
      %v1245 = vpop.f32.mrf.mxu0
      %v1246 = vadd.f32 0.0, %v1245
      %1247 = vdwg.mxu0
      %v1248 = vadd.f32 %v827, %v1159
      %v1249 = vadd.f32 %v829, %v1161
      %v1250 = vadd.f32 %v832, %v1164
      %v1251 = vadd.f32 %v834, %v1166
      %v1252 = vadd.f32 %v837, %v1169
      %v1253 = vadd.f32 %v839, %v1171
      %v1254 = vadd.f32 %v842, %v1174
      %v1255 = vadd.f32 %v844, %v1176
      %v1256 = vadd.f32 %v847, %v1179
      %v1257 = vadd.f32 %v849, %v1181
      %v1258 = vadd.f32 %v852, %v1184
      %v1259 = vadd.f32 %v854, %v1186
      %v1260 = vadd.f32 %v857, %v1189
      %v1261 = vadd.f32 %v859, %v1191
      %v1262 = vadd.f32 %v862, %v1194
      %v1263 = vadd.f32 %v864, %v1196
      %v1264 = vadd.f32 %v867, %v1199
      %v1265 = vadd.f32 %v869, %v1201
      %v1266 = vadd.f32 %v872, %v1204
      %v1267 = vadd.f32 %v874, %v1206
      %v1268 = vadd.f32 %v877, %v1209
      %v1269 = vadd.f32 %v879, %v1211
      %v1270 = vadd.f32 %v882, %v1214
      %v1271 = vadd.f32 %v884, %v1216
      %v1272 = vadd.f32 %v887, %v1219
      %v1273 = vadd.f32 %v889, %v1221
      %v1274 = vadd.f32 %v892, %v1224
      %v1275 = vadd.f32 %v894, %v1226
      %v1276 = vadd.f32 %v897, %v1229
      %v1277 = vadd.f32 %v899, %v1231
      %v1278 = vadd.f32 %v902, %v1234
      %v1279 = vadd.f32 %v904, %v1236
      %v1280 = vadd.f32 %v907, %v1239
      %v1281 = vadd.f32 %v909, %v1241
      %v1282 = vadd.f32 %v912, %v1244
      %v1283 = vadd.f32 %v914, %v1246
      %v1284 = vld [vmem:[%s5] sm:$0x1]
      %v1286 = vperm.slane %v1284, 0
      %v1288 = vmul.f32 %v1248, %v1286
      %v1289 = vmul.f32 %v1249, %v1286
      %v1290 = vmul.f32 %v1250, %v1286
      %v1291 = vmul.f32 %v1251, %v1286
      %v1292 = vmul.f32 %v1252, %v1286
      %v1293 = vmul.f32 %v1253, %v1286
      %v1294 = vmul.f32 %v1254, %v1286
      %v1295 = vmul.f32 %v1255, %v1286
      %v1296 = vmul.f32 %v1256, %v1286
      %v1297 = vmul.f32 %v1257, %v1286
      %v1298 = vmul.f32 %v1258, %v1286
      %v1299 = vmul.f32 %v1259, %v1286
      %v1300 = vmul.f32 %v1260, %v1286
      %v1301 = vmul.f32 %v1261, %v1286
      %v1302 = vmul.f32 %v1262, %v1286
      %v1303 = vmul.f32 %v1263, %v1286
      %v1304 = vmul.f32 %v1264, %v1286
      %v1305 = vmul.f32 %v1265, %v1286
      %v1306 = vmul.f32 %v1266, %v1286
      %v1307 = vmul.f32 %v1267, %v1286
      %v1308 = vmul.f32 %v1268, %v1286
      %v1309 = vmul.f32 %v1269, %v1286
      %v1310 = vmul.f32 %v1270, %v1286
      %v1311 = vmul.f32 %v1271, %v1286
      %v1312 = vmul.f32 %v1272, %v1286
      %v1313 = vmul.f32 %v1273, %v1286
      %v1314 = vmul.f32 %v1274, %v1286
      %v1315 = vmul.f32 %v1275, %v1286
      %v1316 = vmul.f32 %v1276, %v1286
      %v1317 = vmul.f32 %v1277, %v1286
      %v1318 = vmul.f32 %v1278, %v1286
      %v1319 = vmul.f32 %v1279, %v1286
      %v1320 = vmul.f32 %v1280, %v1286
      %v1321 = vmul.f32 %v1281, %v1286
      %v1322 = vmul.f32 %v1282, %v1286
      %v1323 = vmul.f32 %v1283, %v1286
      %v1324 = vld [vmem:[%s6] sm:$0x1]
      %v1326 = vperm.slane %v1324, 0
      %v1328 = vadd.f32 %v1288, %v1326
      %v1329 = vadd.f32 %v1289, %v1326
      %v1330 = vadd.f32 %v1290, %v1326
      %v1331 = vadd.f32 %v1291, %v1326
      %v1332 = vadd.f32 %v1292, %v1326
      %v1333 = vadd.f32 %v1293, %v1326
      %v1334 = vadd.f32 %v1294, %v1326
      %v1335 = vadd.f32 %v1295, %v1326
      %v1336 = vadd.f32 %v1296, %v1326
      %v1337 = vadd.f32 %v1297, %v1326
      %v1338 = vadd.f32 %v1298, %v1326
      %v1339 = vadd.f32 %v1299, %v1326
      %v1340 = vadd.f32 %v1300, %v1326
      %v1341 = vadd.f32 %v1301, %v1326
      %v1342 = vadd.f32 %v1302, %v1326
      %v1343 = vadd.f32 %v1303, %v1326
      %v1344 = vadd.f32 %v1304, %v1326
      %v1345 = vadd.f32 %v1305, %v1326
      %v1346 = vadd.f32 %v1306, %v1326
      %v1347 = vadd.f32 %v1307, %v1326
      %v1348 = vadd.f32 %v1308, %v1326
      %v1349 = vadd.f32 %v1309, %v1326
      %v1350 = vadd.f32 %v1310, %v1326
      %v1351 = vadd.f32 %v1311, %v1326
      %v1352 = vadd.f32 %v1312, %v1326
      %v1353 = vadd.f32 %v1313, %v1326
      %v1354 = vadd.f32 %v1314, %v1326
      %v1355 = vadd.f32 %v1315, %v1326
      %v1356 = vadd.f32 %v1316, %v1326
      %v1357 = vadd.f32 %v1317, %v1326
      %v1358 = vadd.f32 %v1318, %v1326
      %v1359 = vadd.f32 %v1319, %v1326
      %v1360 = vadd.f32 %v1320, %v1326
      %v1361 = vadd.f32 %v1321, %v1326
      %v1362 = vadd.f32 %v1322, %v1326
      %v1363 = vadd.f32 %v1323, %v1326
      %v1364 = vmax.f32 %v1328, 0.0
      %v1365 = vmax.f32 %v1329, 0.0
      %v1366 = vmax.f32 %v1330, 0.0
      %v1367 = vmax.f32 %v1331, 0.0
      %v1368 = vmax.f32 %v1332, 0.0
      %v1369 = vmax.f32 %v1333, 0.0
      %v1370 = vmax.f32 %v1334, 0.0
      %v1371 = vmax.f32 %v1335, 0.0
      %v1372 = vmax.f32 %v1336, 0.0
      %v1373 = vmax.f32 %v1337, 0.0
      %v1374 = vmax.f32 %v1338, 0.0
      %v1375 = vmax.f32 %v1339, 0.0
      %v1376 = vmax.f32 %v1340, 0.0
      %v1377 = vmax.f32 %v1341, 0.0
      %v1378 = vmax.f32 %v1342, 0.0
      %v1379 = vmax.f32 %v1343, 0.0
      %v1380 = vmax.f32 %v1344, 0.0
      %v1381 = vmax.f32 %v1345, 0.0
      %v1382 = vmax.f32 %v1346, 0.0
      %v1383 = vmax.f32 %v1347, 0.0
      %v1384 = vmax.f32 %v1348, 0.0
      %v1385 = vmax.f32 %v1349, 0.0
      %v1386 = vmax.f32 %v1350, 0.0
      %v1387 = vmax.f32 %v1351, 0.0
      %v1388 = vmax.f32 %v1352, 0.0
      %v1389 = vmax.f32 %v1353, 0.0
      %v1390 = vmax.f32 %v1354, 0.0
      %v1391 = vmax.f32 %v1355, 0.0
      %v1392 = vmax.f32 %v1356, 0.0
      %v1393 = vmax.f32 %v1357, 0.0
      %v1394 = vmax.f32 %v1358, 0.0
      %v1395 = vmax.f32 %v1359, 0.0
      %v1396 = vmax.f32 %v1360, 0.0
      %v1397 = vmax.f32 %v1361, 0.0
      %v1398 = vmax.f32 %v1362, 0.0
      %v1399 = vmax.f32 %v1363, 0.0
      %v1400 = vlaneseq
      %v1401 = vshrl.u32 %v1400, 7
      %v1402 = vadd.s32 %v1401, 8
      %v1403 = vadd.s32 %v1401, 16
      %v1404 = vadd.s32 %v1401, 24
      %v1405 = vadd.s32 %v1401, 32
      %v1406 = vadd.s32 %v1401, 40
      %v1407 = vadd.s32 %v1401, 48
      %v1408 = vadd.s32 %v1401, 56
      %v1409 = vadd.s32 %v1401, 64
      %v1410 = vadd.s32 %v1401, 72
      %v1411 = vadd.s32 %v1401, 80
      %v1412 = vadd.s32 %v1401, 88
      %v1413 = vadd.s32 %v1401, 96
      %v1414 = vadd.s32 %v1401, 104
      %v1415 = vadd.s32 %v1401, 112
      %v1416 = vadd.s32 %v1401, 120
      %v1417 = vadd.s32 %v1401, 128
      %v1418 = vadd.s32 %v1401, 136
      %v1419 = vadd.s32 %v1401, 144
      %v1420 = vadd.s32 %v1401, 152
      %v1421 = vadd.s32 %v1401, 160
      %v1422 = vadd.s32 %v1401, 168
      %v1423 = vadd.s32 %v1401, 176
      %v1424 = vadd.s32 %v1401, 184
      %v1425 = vadd.s32 %v1401, 192
      %v1426 = vadd.s32 %v1401, 200
      %v1427 = vadd.s32 %v1401, 208
      %v1428 = vadd.s32 %v1401, 216
      %v1429 = vadd.s32 %v1401, 224
      %v1430 = vadd.s32 %v1401, 232
      %v1431 = vadd.s32 %v1401, 240
      %v1432 = vadd.s32 %v1401, 248
      %v1433 = vadd.s32 %v1401, 256
      %v1434 = vadd.s32 %v1401, 264
      %v1435 = vadd.s32 %v1401, 272
      %v1436 = vadd.s32 %v1401, 280
      %vm1437 = vcmp.lt.s32.totalorder %v1401, 0
      %v1438 = vsub.s32 0, %v1401
      %v1439 = vsel %vm1437, %v1438, %v1401
      %v1440 = vand.u32 %v1439, 65535
      %v1441 = vshrl.u32 %v1439, 16
      %v1443 = vmul.u32 %v1440, 14564
      %v1444 = vmul.u32 %v1440, 58254
      %v1445 = vmul.u32 %v1441, 14564
      %v1446 = vmul.u32 %v1441, 58254
      %v1447 = vshll.u32 %v1444, 16
      %v1448 = vshrl.u32 %v1444, 16
      %v1449 = vshll.u32 %v1445, 16
      %v1450 = vshrl.u32 %v1445, 16
      %vm1451 = vc.u32 %v1443, %v1447
      %v1452 = vsel %vm1451, 1, 0
      %v1453 = vadd.s32 %v1443, %v1447
      %v1454 = vadd.s32 %v1446, %v1452
      %vm1455 = vc.u32 %v1453, %v1449
      %v1456 = vsel %vm1455, 1, 0
      %v1457 = vadd.s32 %v1453, %v1449
      %v1458 = vadd.s32 %v1454, %v1456
      %v1459 = vadd.s32 %v1458, %v1448
      %v1460 = vadd.s32 %v1459, %v1450
      %v1461 = vshrl.u32 %v1460, 4
      %v1462 = vmul.u32 %v1461, 18
      %v1463 = vsub.s32 %v1439, %v1462
      %v1464 = vsub.s32 0, %v1463
      %v1465 = vsel %vm1437, %v1464, %v1463
      %vm1466 = vcmp.lt.s32.totalorder %v1402, 0
      %v1467 = vsub.s32 0, %v1402
      %v1468 = vsel %vm1466, %v1467, %v1402
      %v1469 = vand.u32 %v1468, 65535
      %v1470 = vshrl.u32 %v1468, 16
      %v1472 = vmul.u32 %v1469, 14564
      %v1473 = vmul.u32 %v1469, 58254
      %v1474 = vmul.u32 %v1470, 14564
      %v1475 = vmul.u32 %v1470, 58254
      %v1476 = vshll.u32 %v1473, 16
      %v1477 = vshrl.u32 %v1473, 16
      %v1478 = vshll.u32 %v1474, 16
      %v1479 = vshrl.u32 %v1474, 16
      %vm1480 = vc.u32 %v1472, %v1476
      %v1481 = vsel %vm1480, 1, 0
      %v1482 = vadd.s32 %v1472, %v1476
      %v1483 = vadd.s32 %v1475, %v1481
      %vm1484 = vc.u32 %v1482, %v1478
      %v1485 = vsel %vm1484, 1, 0
      %v1486 = vadd.s32 %v1482, %v1478
      %v1487 = vadd.s32 %v1483, %v1485
      %v1488 = vadd.s32 %v1487, %v1477
      %v1489 = vadd.s32 %v1488, %v1479
      %v1490 = vshrl.u32 %v1489, 4
      %v1491 = vmul.u32 %v1490, 18
      %v1492 = vsub.s32 %v1468, %v1491
      %v1493 = vsub.s32 0, %v1492
      %v1494 = vsel %vm1466, %v1493, %v1492
      %vm1495 = vcmp.lt.s32.totalorder %v1403, 0
      %v1496 = vsub.s32 0, %v1403
      %v1497 = vsel %vm1495, %v1496, %v1403
      %v1498 = vand.u32 %v1497, 65535
      %v1499 = vshrl.u32 %v1497, 16
      %v1501 = vmul.u32 %v1498, 14564
      %v1502 = vmul.u32 %v1498, 58254
      %v1503 = vmul.u32 %v1499, 14564
      %v1504 = vmul.u32 %v1499, 58254
      %v1505 = vshll.u32 %v1502, 16
      %v1506 = vshrl.u32 %v1502, 16
      %v1507 = vshll.u32 %v1503, 16
      %v1508 = vshrl.u32 %v1503, 16
      %vm1509 = vc.u32 %v1501, %v1505
      %v1510 = vsel %vm1509, 1, 0
      %v1511 = vadd.s32 %v1501, %v1505
      %v1512 = vadd.s32 %v1504, %v1510
      %vm1513 = vc.u32 %v1511, %v1507
      %v1514 = vsel %vm1513, 1, 0
      %v1515 = vadd.s32 %v1511, %v1507
      %v1516 = vadd.s32 %v1512, %v1514
      %v1517 = vadd.s32 %v1516, %v1506
      %v1518 = vadd.s32 %v1517, %v1508
      %v1519 = vshrl.u32 %v1518, 4
      %v1520 = vmul.u32 %v1519, 18
      %v1521 = vsub.s32 %v1497, %v1520
      %v1522 = vsub.s32 0, %v1521
      %v1523 = vsel %vm1495, %v1522, %v1521
      %vm1524 = vcmp.lt.s32.totalorder %v1404, 0
      %v1525 = vsub.s32 0, %v1404
      %v1526 = vsel %vm1524, %v1525, %v1404
      %v1527 = vand.u32 %v1526, 65535
      %v1528 = vshrl.u32 %v1526, 16
      %v1530 = vmul.u32 %v1527, 14564
      %v1531 = vmul.u32 %v1527, 58254
      %v1532 = vmul.u32 %v1528, 14564
      %v1533 = vmul.u32 %v1528, 58254
      %v1534 = vshll.u32 %v1531, 16
      %v1535 = vshrl.u32 %v1531, 16
      %v1536 = vshll.u32 %v1532, 16
      %v1537 = vshrl.u32 %v1532, 16
      %vm1538 = vc.u32 %v1530, %v1534
      %v1539 = vsel %vm1538, 1, 0
      %v1540 = vadd.s32 %v1530, %v1534
      %v1541 = vadd.s32 %v1533, %v1539
      %vm1542 = vc.u32 %v1540, %v1536
      %v1543 = vsel %vm1542, 1, 0
      %v1544 = vadd.s32 %v1540, %v1536
      %v1545 = vadd.s32 %v1541, %v1543
      %v1546 = vadd.s32 %v1545, %v1535
      %v1547 = vadd.s32 %v1546, %v1537
      %v1548 = vshrl.u32 %v1547, 4
      %v1549 = vmul.u32 %v1548, 18
      %v1550 = vsub.s32 %v1526, %v1549
      %v1551 = vsub.s32 0, %v1550
      %v1552 = vsel %vm1524, %v1551, %v1550
      %vm1553 = vcmp.lt.s32.totalorder %v1405, 0
      %v1554 = vsub.s32 0, %v1405
      %v1555 = vsel %vm1553, %v1554, %v1405
      %v1556 = vand.u32 %v1555, 65535
      %v1557 = vshrl.u32 %v1555, 16
      %v1559 = vmul.u32 %v1556, 14564
      %v1560 = vmul.u32 %v1556, 58254
      %v1561 = vmul.u32 %v1557, 14564
      %v1562 = vmul.u32 %v1557, 58254
      %v1563 = vshll.u32 %v1560, 16
      %v1564 = vshrl.u32 %v1560, 16
      %v1565 = vshll.u32 %v1561, 16
      %v1566 = vshrl.u32 %v1561, 16
      %vm1567 = vc.u32 %v1559, %v1563
      %v1568 = vsel %vm1567, 1, 0
      %v1569 = vadd.s32 %v1559, %v1563
      %v1570 = vadd.s32 %v1562, %v1568
      %vm1571 = vc.u32 %v1569, %v1565
      %v1572 = vsel %vm1571, 1, 0
      %v1573 = vadd.s32 %v1569, %v1565
      %v1574 = vadd.s32 %v1570, %v1572
      %v1575 = vadd.s32 %v1574, %v1564
      %v1576 = vadd.s32 %v1575, %v1566
      %v1577 = vshrl.u32 %v1576, 4
      %v1578 = vmul.u32 %v1577, 18
      %v1579 = vsub.s32 %v1555, %v1578
      %v1580 = vsub.s32 0, %v1579
      %v1581 = vsel %vm1553, %v1580, %v1579
      %vm1582 = vcmp.lt.s32.totalorder %v1406, 0
      %v1583 = vsub.s32 0, %v1406
      %v1584 = vsel %vm1582, %v1583, %v1406
      %v1585 = vand.u32 %v1584, 65535
      %v1586 = vshrl.u32 %v1584, 16
      %v1588 = vmul.u32 %v1585, 14564
      %v1589 = vmul.u32 %v1585, 58254
      %v1590 = vmul.u32 %v1586, 14564
      %v1591 = vmul.u32 %v1586, 58254
      %v1592 = vshll.u32 %v1589, 16
      %v1593 = vshrl.u32 %v1589, 16
      %v1594 = vshll.u32 %v1590, 16
      %v1595 = vshrl.u32 %v1590, 16
      %vm1596 = vc.u32 %v1588, %v1592
      %v1597 = vsel %vm1596, 1, 0
      %v1598 = vadd.s32 %v1588, %v1592
      %v1599 = vadd.s32 %v1591, %v1597
      %vm1600 = vc.u32 %v1598, %v1594
      %v1601 = vsel %vm1600, 1, 0
      %v1602 = vadd.s32 %v1598, %v1594
      %v1603 = vadd.s32 %v1599, %v1601
      %v1604 = vadd.s32 %v1603, %v1593
      %v1605 = vadd.s32 %v1604, %v1595
      %v1606 = vshrl.u32 %v1605, 4
      %v1607 = vmul.u32 %v1606, 18
      %v1608 = vsub.s32 %v1584, %v1607
      %v1609 = vsub.s32 0, %v1608
      %v1610 = vsel %vm1582, %v1609, %v1608
      %vm1611 = vcmp.lt.s32.totalorder %v1407, 0
      %v1612 = vsub.s32 0, %v1407
      %v1613 = vsel %vm1611, %v1612, %v1407
      %v1614 = vand.u32 %v1613, 65535
      %v1615 = vshrl.u32 %v1613, 16
      %v1617 = vmul.u32 %v1614, 14564
      %v1618 = vmul.u32 %v1614, 58254
      %v1619 = vmul.u32 %v1615, 14564
      %v1620 = vmul.u32 %v1615, 58254
      %v1621 = vshll.u32 %v1618, 16
      %v1622 = vshrl.u32 %v1618, 16
      %v1623 = vshll.u32 %v1619, 16
      %v1624 = vshrl.u32 %v1619, 16
      %vm1625 = vc.u32 %v1617, %v1621
      %v1626 = vsel %vm1625, 1, 0
      %v1627 = vadd.s32 %v1617, %v1621
      %v1628 = vadd.s32 %v1620, %v1626
      %vm1629 = vc.u32 %v1627, %v1623
      %v1630 = vsel %vm1629, 1, 0
      %v1631 = vadd.s32 %v1627, %v1623
      %v1632 = vadd.s32 %v1628, %v1630
      %v1633 = vadd.s32 %v1632, %v1622
      %v1634 = vadd.s32 %v1633, %v1624
      %v1635 = vshrl.u32 %v1634, 4
      %v1636 = vmul.u32 %v1635, 18
      %v1637 = vsub.s32 %v1613, %v1636
      %v1638 = vsub.s32 0, %v1637
      %v1639 = vsel %vm1611, %v1638, %v1637
      %vm1640 = vcmp.lt.s32.totalorder %v1408, 0
      %v1641 = vsub.s32 0, %v1408
      %v1642 = vsel %vm1640, %v1641, %v1408
      %v1643 = vand.u32 %v1642, 65535
      %v1644 = vshrl.u32 %v1642, 16
      %v1646 = vmul.u32 %v1643, 14564
      %v1647 = vmul.u32 %v1643, 58254
      %v1648 = vmul.u32 %v1644, 14564
      %v1649 = vmul.u32 %v1644, 58254
      %v1650 = vshll.u32 %v1647, 16
      %v1651 = vshrl.u32 %v1647, 16
      %v1652 = vshll.u32 %v1648, 16
      %v1653 = vshrl.u32 %v1648, 16
      %vm1654 = vc.u32 %v1646, %v1650
      %v1655 = vsel %vm1654, 1, 0
      %v1656 = vadd.s32 %v1646, %v1650
      %v1657 = vadd.s32 %v1649, %v1655
      %vm1658 = vc.u32 %v1656, %v1652
      %v1659 = vsel %vm1658, 1, 0
      %v1660 = vadd.s32 %v1656, %v1652
      %v1661 = vadd.s32 %v1657, %v1659
      %v1662 = vadd.s32 %v1661, %v1651
      %v1663 = vadd.s32 %v1662, %v1653
      %v1664 = vshrl.u32 %v1663, 4
      %v1665 = vmul.u32 %v1664, 18
      %v1666 = vsub.s32 %v1642, %v1665
      %v1667 = vsub.s32 0, %v1666
      %v1668 = vsel %vm1640, %v1667, %v1666
      %vm1669 = vcmp.lt.s32.totalorder %v1409, 0
      %v1670 = vsub.s32 0, %v1409
      %v1671 = vsel %vm1669, %v1670, %v1409
      %v1672 = vand.u32 %v1671, 65535
      %v1673 = vshrl.u32 %v1671, 16
      %v1675 = vmul.u32 %v1672, 14564
      %v1676 = vmul.u32 %v1672, 58254
      %v1677 = vmul.u32 %v1673, 14564
      %v1678 = vmul.u32 %v1673, 58254
      %v1679 = vshll.u32 %v1676, 16
      %v1680 = vshrl.u32 %v1676, 16
      %v1681 = vshll.u32 %v1677, 16
      %v1682 = vshrl.u32 %v1677, 16
      %vm1683 = vc.u32 %v1675, %v1679
      %v1684 = vsel %vm1683, 1, 0
      %v1685 = vadd.s32 %v1675, %v1679
      %v1686 = vadd.s32 %v1678, %v1684
      %vm1687 = vc.u32 %v1685, %v1681
      %v1688 = vsel %vm1687, 1, 0
      %v1689 = vadd.s32 %v1685, %v1681
      %v1690 = vadd.s32 %v1686, %v1688
      %v1691 = vadd.s32 %v1690, %v1680
      %v1692 = vadd.s32 %v1691, %v1682
      %v1693 = vshrl.u32 %v1692, 4
      %v1694 = vmul.u32 %v1693, 18
      %v1695 = vsub.s32 %v1671, %v1694
      %v1696 = vsub.s32 0, %v1695
      %v1697 = vsel %vm1669, %v1696, %v1695
      %vm1698 = vcmp.lt.s32.totalorder %v1410, 0
      %v1699 = vsub.s32 0, %v1410
      %v1700 = vsel %vm1698, %v1699, %v1410
      %v1701 = vand.u32 %v1700, 65535
      %v1702 = vshrl.u32 %v1700, 16
      %v1704 = vmul.u32 %v1701, 14564
      %v1705 = vmul.u32 %v1701, 58254
      %v1706 = vmul.u32 %v1702, 14564
      %v1707 = vmul.u32 %v1702, 58254
      %v1708 = vshll.u32 %v1705, 16
      %v1709 = vshrl.u32 %v1705, 16
      %v1710 = vshll.u32 %v1706, 16
      %v1711 = vshrl.u32 %v1706, 16
      %vm1712 = vc.u32 %v1704, %v1708
      %v1713 = vsel %vm1712, 1, 0
      %v1714 = vadd.s32 %v1704, %v1708
      %v1715 = vadd.s32 %v1707, %v1713
      %vm1716 = vc.u32 %v1714, %v1710
      %v1717 = vsel %vm1716, 1, 0
      %v1718 = vadd.s32 %v1714, %v1710
      %v1719 = vadd.s32 %v1715, %v1717
      %v1720 = vadd.s32 %v1719, %v1709
      %v1721 = vadd.s32 %v1720, %v1711
      %v1722 = vshrl.u32 %v1721, 4
      %v1723 = vmul.u32 %v1722, 18
      %v1724 = vsub.s32 %v1700, %v1723
      %v1725 = vsub.s32 0, %v1724
      %v1726 = vsel %vm1698, %v1725, %v1724
      %vm1727 = vcmp.lt.s32.totalorder %v1411, 0
      %v1728 = vsub.s32 0, %v1411
      %v1729 = vsel %vm1727, %v1728, %v1411
      %v1730 = vand.u32 %v1729, 65535
      %v1731 = vshrl.u32 %v1729, 16
      %v1733 = vmul.u32 %v1730, 14564
      %v1734 = vmul.u32 %v1730, 58254
      %v1735 = vmul.u32 %v1731, 14564
      %v1736 = vmul.u32 %v1731, 58254
      %v1737 = vshll.u32 %v1734, 16
      %v1738 = vshrl.u32 %v1734, 16
      %v1739 = vshll.u32 %v1735, 16
      %v1740 = vshrl.u32 %v1735, 16
      %vm1741 = vc.u32 %v1733, %v1737
      %v1742 = vsel %vm1741, 1, 0
      %v1743 = vadd.s32 %v1733, %v1737
      %v1744 = vadd.s32 %v1736, %v1742
      %vm1745 = vc.u32 %v1743, %v1739
      %v1746 = vsel %vm1745, 1, 0
      %v1747 = vadd.s32 %v1743, %v1739
      %v1748 = vadd.s32 %v1744, %v1746
      %v1749 = vadd.s32 %v1748, %v1738
      %v1750 = vadd.s32 %v1749, %v1740
      %v1751 = vshrl.u32 %v1750, 4
      %v1752 = vmul.u32 %v1751, 18
      %v1753 = vsub.s32 %v1729, %v1752
      %v1754 = vsub.s32 0, %v1753
      %v1755 = vsel %vm1727, %v1754, %v1753
      %vm1756 = vcmp.lt.s32.totalorder %v1412, 0
      %v1757 = vsub.s32 0, %v1412
      %v1758 = vsel %vm1756, %v1757, %v1412
      %v1759 = vand.u32 %v1758, 65535
      %v1760 = vshrl.u32 %v1758, 16
      %v1762 = vmul.u32 %v1759, 14564
      %v1763 = vmul.u32 %v1759, 58254
      %v1764 = vmul.u32 %v1760, 14564
      %v1765 = vmul.u32 %v1760, 58254
      %v1766 = vshll.u32 %v1763, 16
      %v1767 = vshrl.u32 %v1763, 16
      %v1768 = vshll.u32 %v1764, 16
      %v1769 = vshrl.u32 %v1764, 16
      %vm1770 = vc.u32 %v1762, %v1766
      %v1771 = vsel %vm1770, 1, 0
      %v1772 = vadd.s32 %v1762, %v1766
      %v1773 = vadd.s32 %v1765, %v1771
      %vm1774 = vc.u32 %v1772, %v1768
      %v1775 = vsel %vm1774, 1, 0
      %v1776 = vadd.s32 %v1772, %v1768
      %v1777 = vadd.s32 %v1773, %v1775
      %v1778 = vadd.s32 %v1777, %v1767
      %v1779 = vadd.s32 %v1778, %v1769
      %v1780 = vshrl.u32 %v1779, 4
      %v1781 = vmul.u32 %v1780, 18
      %v1782 = vsub.s32 %v1758, %v1781
      %v1783 = vsub.s32 0, %v1782
      %v1784 = vsel %vm1756, %v1783, %v1782
      %vm1785 = vcmp.lt.s32.totalorder %v1413, 0
      %v1786 = vsub.s32 0, %v1413
      %v1787 = vsel %vm1785, %v1786, %v1413
      %v1788 = vand.u32 %v1787, 65535
      %v1789 = vshrl.u32 %v1787, 16
      %v1791 = vmul.u32 %v1788, 14564
      %v1792 = vmul.u32 %v1788, 58254
      %v1793 = vmul.u32 %v1789, 14564
      %v1794 = vmul.u32 %v1789, 58254
      %v1795 = vshll.u32 %v1792, 16
      %v1796 = vshrl.u32 %v1792, 16
      %v1797 = vshll.u32 %v1793, 16
      %v1798 = vshrl.u32 %v1793, 16
      %vm1799 = vc.u32 %v1791, %v1795
      %v1800 = vsel %vm1799, 1, 0
      %v1801 = vadd.s32 %v1791, %v1795
      %v1802 = vadd.s32 %v1794, %v1800
      %vm1803 = vc.u32 %v1801, %v1797
      %v1804 = vsel %vm1803, 1, 0
      %v1805 = vadd.s32 %v1801, %v1797
      %v1806 = vadd.s32 %v1802, %v1804
      %v1807 = vadd.s32 %v1806, %v1796
      %v1808 = vadd.s32 %v1807, %v1798
      %v1809 = vshrl.u32 %v1808, 4
      %v1810 = vmul.u32 %v1809, 18
      %v1811 = vsub.s32 %v1787, %v1810
      %v1812 = vsub.s32 0, %v1811
      %v1813 = vsel %vm1785, %v1812, %v1811
      %vm1814 = vcmp.lt.s32.totalorder %v1414, 0
      %v1815 = vsub.s32 0, %v1414
      %v1816 = vsel %vm1814, %v1815, %v1414
      %v1817 = vand.u32 %v1816, 65535
      %v1818 = vshrl.u32 %v1816, 16
      %v1820 = vmul.u32 %v1817, 14564
      %v1821 = vmul.u32 %v1817, 58254
      %v1822 = vmul.u32 %v1818, 14564
      %v1823 = vmul.u32 %v1818, 58254
      %v1824 = vshll.u32 %v1821, 16
      %v1825 = vshrl.u32 %v1821, 16
      %v1826 = vshll.u32 %v1822, 16
      %v1827 = vshrl.u32 %v1822, 16
      %vm1828 = vc.u32 %v1820, %v1824
      %v1829 = vsel %vm1828, 1, 0
      %v1830 = vadd.s32 %v1820, %v1824
      %v1831 = vadd.s32 %v1823, %v1829
      %vm1832 = vc.u32 %v1830, %v1826
      %v1833 = vsel %vm1832, 1, 0
      %v1834 = vadd.s32 %v1830, %v1826
      %v1835 = vadd.s32 %v1831, %v1833
      %v1836 = vadd.s32 %v1835, %v1825
      %v1837 = vadd.s32 %v1836, %v1827
      %v1838 = vshrl.u32 %v1837, 4
      %v1839 = vmul.u32 %v1838, 18
      %v1840 = vsub.s32 %v1816, %v1839
      %v1841 = vsub.s32 0, %v1840
      %v1842 = vsel %vm1814, %v1841, %v1840
      %vm1843 = vcmp.lt.s32.totalorder %v1415, 0
      %v1844 = vsub.s32 0, %v1415
      %v1845 = vsel %vm1843, %v1844, %v1415
      %v1846 = vand.u32 %v1845, 65535
      %v1847 = vshrl.u32 %v1845, 16
      %v1849 = vmul.u32 %v1846, 14564
      %v1850 = vmul.u32 %v1846, 58254
      %v1851 = vmul.u32 %v1847, 14564
      %v1852 = vmul.u32 %v1847, 58254
      %v1853 = vshll.u32 %v1850, 16
      %v1854 = vshrl.u32 %v1850, 16
      %v1855 = vshll.u32 %v1851, 16
      %v1856 = vshrl.u32 %v1851, 16
      %vm1857 = vc.u32 %v1849, %v1853
      %v1858 = vsel %vm1857, 1, 0
      %v1859 = vadd.s32 %v1849, %v1853
      %v1860 = vadd.s32 %v1852, %v1858
      %vm1861 = vc.u32 %v1859, %v1855
      %v1862 = vsel %vm1861, 1, 0
      %v1863 = vadd.s32 %v1859, %v1855
      %v1864 = vadd.s32 %v1860, %v1862
      %v1865 = vadd.s32 %v1864, %v1854
      %v1866 = vadd.s32 %v1865, %v1856
      %v1867 = vshrl.u32 %v1866, 4
      %v1868 = vmul.u32 %v1867, 18
      %v1869 = vsub.s32 %v1845, %v1868
      %v1870 = vsub.s32 0, %v1869
      %v1871 = vsel %vm1843, %v1870, %v1869
      %vm1872 = vcmp.lt.s32.totalorder %v1416, 0
      %v1873 = vsub.s32 0, %v1416
      %v1874 = vsel %vm1872, %v1873, %v1416
      %v1875 = vand.u32 %v1874, 65535
      %v1876 = vshrl.u32 %v1874, 16
      %v1878 = vmul.u32 %v1875, 14564
      %v1879 = vmul.u32 %v1875, 58254
      %v1880 = vmul.u32 %v1876, 14564
      %v1881 = vmul.u32 %v1876, 58254
      %v1882 = vshll.u32 %v1879, 16
      %v1883 = vshrl.u32 %v1879, 16
      %v1884 = vshll.u32 %v1880, 16
      %v1885 = vshrl.u32 %v1880, 16
      %vm1886 = vc.u32 %v1878, %v1882
      %v1887 = vsel %vm1886, 1, 0
      %v1888 = vadd.s32 %v1878, %v1882
      %v1889 = vadd.s32 %v1881, %v1887
      %vm1890 = vc.u32 %v1888, %v1884
      %v1891 = vsel %vm1890, 1, 0
      %v1892 = vadd.s32 %v1888, %v1884
      %v1893 = vadd.s32 %v1889, %v1891
      %v1894 = vadd.s32 %v1893, %v1883
      %v1895 = vadd.s32 %v1894, %v1885
      %v1896 = vshrl.u32 %v1895, 4
      %v1897 = vmul.u32 %v1896, 18
      %v1898 = vsub.s32 %v1874, %v1897
      %v1899 = vsub.s32 0, %v1898
      %v1900 = vsel %vm1872, %v1899, %v1898
      %vm1901 = vcmp.lt.s32.totalorder %v1417, 0
      %v1902 = vsub.s32 0, %v1417
      %v1903 = vsel %vm1901, %v1902, %v1417
      %v1904 = vand.u32 %v1903, 65535
      %v1905 = vshrl.u32 %v1903, 16
      %v1907 = vmul.u32 %v1904, 14564
      %v1908 = vmul.u32 %v1904, 58254
      %v1909 = vmul.u32 %v1905, 14564
      %v1910 = vmul.u32 %v1905, 58254
      %v1911 = vshll.u32 %v1908, 16
      %v1912 = vshrl.u32 %v1908, 16
      %v1913 = vshll.u32 %v1909, 16
      %v1914 = vshrl.u32 %v1909, 16
      %vm1915 = vc.u32 %v1907, %v1911
      %v1916 = vsel %vm1915, 1, 0
      %v1917 = vadd.s32 %v1907, %v1911
      %v1918 = vadd.s32 %v1910, %v1916
      %vm1919 = vc.u32 %v1917, %v1913
      %v1920 = vsel %vm1919, 1, 0
      %v1921 = vadd.s32 %v1917, %v1913
      %v1922 = vadd.s32 %v1918, %v1920
      %v1923 = vadd.s32 %v1922, %v1912
      %v1924 = vadd.s32 %v1923, %v1914
      %v1925 = vshrl.u32 %v1924, 4
      %v1926 = vmul.u32 %v1925, 18
      %v1927 = vsub.s32 %v1903, %v1926
      %v1928 = vsub.s32 0, %v1927
      %v1929 = vsel %vm1901, %v1928, %v1927
      %vm1930 = vcmp.lt.s32.totalorder %v1418, 0
      %v1931 = vsub.s32 0, %v1418
      %v1932 = vsel %vm1930, %v1931, %v1418
      %v1933 = vand.u32 %v1932, 65535
      %v1934 = vshrl.u32 %v1932, 16
      %v1936 = vmul.u32 %v1933, 14564
      %v1937 = vmul.u32 %v1933, 58254
      %v1938 = vmul.u32 %v1934, 14564
      %v1939 = vmul.u32 %v1934, 58254
      %v1940 = vshll.u32 %v1937, 16
      %v1941 = vshrl.u32 %v1937, 16
      %v1942 = vshll.u32 %v1938, 16
      %v1943 = vshrl.u32 %v1938, 16
      %vm1944 = vc.u32 %v1936, %v1940
      %v1945 = vsel %vm1944, 1, 0
      %v1946 = vadd.s32 %v1936, %v1940
      %v1947 = vadd.s32 %v1939, %v1945
      %vm1948 = vc.u32 %v1946, %v1942
      %v1949 = vsel %vm1948, 1, 0
      %v1950 = vadd.s32 %v1946, %v1942
      %v1951 = vadd.s32 %v1947, %v1949
      %v1952 = vadd.s32 %v1951, %v1941
      %v1953 = vadd.s32 %v1952, %v1943
      %v1954 = vshrl.u32 %v1953, 4
      %v1955 = vmul.u32 %v1954, 18
      %v1956 = vsub.s32 %v1932, %v1955
      %v1957 = vsub.s32 0, %v1956
      %v1958 = vsel %vm1930, %v1957, %v1956
      %vm1959 = vcmp.lt.s32.totalorder %v1419, 0
      %v1960 = vsub.s32 0, %v1419
      %v1961 = vsel %vm1959, %v1960, %v1419
      %v1962 = vand.u32 %v1961, 65535
      %v1963 = vshrl.u32 %v1961, 16
      %v1965 = vmul.u32 %v1962, 14564
      %v1966 = vmul.u32 %v1962, 58254
      %v1967 = vmul.u32 %v1963, 14564
      %v1968 = vmul.u32 %v1963, 58254
      %v1969 = vshll.u32 %v1966, 16
      %v1970 = vshrl.u32 %v1966, 16
      %v1971 = vshll.u32 %v1967, 16
      %v1972 = vshrl.u32 %v1967, 16
      %vm1973 = vc.u32 %v1965, %v1969
      %v1974 = vsel %vm1973, 1, 0
      %v1975 = vadd.s32 %v1965, %v1969
      %v1976 = vadd.s32 %v1968, %v1974
      %vm1977 = vc.u32 %v1975, %v1971
      %v1978 = vsel %vm1977, 1, 0
      %v1979 = vadd.s32 %v1975, %v1971
      %v1980 = vadd.s32 %v1976, %v1978
      %v1981 = vadd.s32 %v1980, %v1970
      %v1982 = vadd.s32 %v1981, %v1972
      %v1983 = vshrl.u32 %v1982, 4
      %v1984 = vmul.u32 %v1983, 18
      %v1985 = vsub.s32 %v1961, %v1984
      %v1986 = vsub.s32 0, %v1985
      %v1987 = vsel %vm1959, %v1986, %v1985
      %vm1988 = vcmp.lt.s32.totalorder %v1420, 0
      %v1989 = vsub.s32 0, %v1420
      %v1990 = vsel %vm1988, %v1989, %v1420
      %v1991 = vand.u32 %v1990, 65535
      %v1992 = vshrl.u32 %v1990, 16
      %v1994 = vmul.u32 %v1991, 14564
      %v1995 = vmul.u32 %v1991, 58254
      %v1996 = vmul.u32 %v1992, 14564
      %v1997 = vmul.u32 %v1992, 58254
      %v1998 = vshll.u32 %v1995, 16
      %v1999 = vshrl.u32 %v1995, 16
      %v2000 = vshll.u32 %v1996, 16
      %v2001 = vshrl.u32 %v1996, 16
      %vm2002 = vc.u32 %v1994, %v1998
      %v2003 = vsel %vm2002, 1, 0
      %v2004 = vadd.s32 %v1994, %v1998
      %v2005 = vadd.s32 %v1997, %v2003
      %vm2006 = vc.u32 %v2004, %v2000
      %v2007 = vsel %vm2006, 1, 0
      %v2008 = vadd.s32 %v2004, %v2000
      %v2009 = vadd.s32 %v2005, %v2007
      %v2010 = vadd.s32 %v2009, %v1999
      %v2011 = vadd.s32 %v2010, %v2001
      %v2012 = vshrl.u32 %v2011, 4
      %v2013 = vmul.u32 %v2012, 18
      %v2014 = vsub.s32 %v1990, %v2013
      %v2015 = vsub.s32 0, %v2014
      %v2016 = vsel %vm1988, %v2015, %v2014
      %vm2017 = vcmp.lt.s32.totalorder %v1421, 0
      %v2018 = vsub.s32 0, %v1421
      %v2019 = vsel %vm2017, %v2018, %v1421
      %v2020 = vand.u32 %v2019, 65535
      %v2021 = vshrl.u32 %v2019, 16
      %v2023 = vmul.u32 %v2020, 14564
      %v2024 = vmul.u32 %v2020, 58254
      %v2025 = vmul.u32 %v2021, 14564
      %v2026 = vmul.u32 %v2021, 58254
      %v2027 = vshll.u32 %v2024, 16
      %v2028 = vshrl.u32 %v2024, 16
      %v2029 = vshll.u32 %v2025, 16
      %v2030 = vshrl.u32 %v2025, 16
      %vm2031 = vc.u32 %v2023, %v2027
      %v2032 = vsel %vm2031, 1, 0
      %v2033 = vadd.s32 %v2023, %v2027
      %v2034 = vadd.s32 %v2026, %v2032
      %vm2035 = vc.u32 %v2033, %v2029
      %v2036 = vsel %vm2035, 1, 0
      %v2037 = vadd.s32 %v2033, %v2029
      %v2038 = vadd.s32 %v2034, %v2036
      %v2039 = vadd.s32 %v2038, %v2028
      %v2040 = vadd.s32 %v2039, %v2030
      %v2041 = vshrl.u32 %v2040, 4
      %v2042 = vmul.u32 %v2041, 18
      %v2043 = vsub.s32 %v2019, %v2042
      %v2044 = vsub.s32 0, %v2043
      %v2045 = vsel %vm2017, %v2044, %v2043
      %vm2046 = vcmp.lt.s32.totalorder %v1422, 0
      %v2047 = vsub.s32 0, %v1422
      %v2048 = vsel %vm2046, %v2047, %v1422
      %v2049 = vand.u32 %v2048, 65535
      %v2050 = vshrl.u32 %v2048, 16
      %v2052 = vmul.u32 %v2049, 14564
      %v2053 = vmul.u32 %v2049, 58254
      %v2054 = vmul.u32 %v2050, 14564
      %v2055 = vmul.u32 %v2050, 58254
      %v2056 = vshll.u32 %v2053, 16
      %v2057 = vshrl.u32 %v2053, 16
      %v2058 = vshll.u32 %v2054, 16
      %v2059 = vshrl.u32 %v2054, 16
      %vm2060 = vc.u32 %v2052, %v2056
      %v2061 = vsel %vm2060, 1, 0
      %v2062 = vadd.s32 %v2052, %v2056
      %v2063 = vadd.s32 %v2055, %v2061
      %vm2064 = vc.u32 %v2062, %v2058
      %v2065 = vsel %vm2064, 1, 0
      %v2066 = vadd.s32 %v2062, %v2058
      %v2067 = vadd.s32 %v2063, %v2065
      %v2068 = vadd.s32 %v2067, %v2057
      %v2069 = vadd.s32 %v2068, %v2059
      %v2070 = vshrl.u32 %v2069, 4
      %v2071 = vmul.u32 %v2070, 18
      %v2072 = vsub.s32 %v2048, %v2071
      %v2073 = vsub.s32 0, %v2072
      %v2074 = vsel %vm2046, %v2073, %v2072
      %vm2075 = vcmp.lt.s32.totalorder %v1423, 0
      %v2076 = vsub.s32 0, %v1423
      %v2077 = vsel %vm2075, %v2076, %v1423
      %v2078 = vand.u32 %v2077, 65535
      %v2079 = vshrl.u32 %v2077, 16
      %v2081 = vmul.u32 %v2078, 14564
      %v2082 = vmul.u32 %v2078, 58254
      %v2083 = vmul.u32 %v2079, 14564
      %v2084 = vmul.u32 %v2079, 58254
      %v2085 = vshll.u32 %v2082, 16
      %v2086 = vshrl.u32 %v2082, 16
      %v2087 = vshll.u32 %v2083, 16
      %v2088 = vshrl.u32 %v2083, 16
      %vm2089 = vc.u32 %v2081, %v2085
      %v2090 = vsel %vm2089, 1, 0
      %v2091 = vadd.s32 %v2081, %v2085
      %v2092 = vadd.s32 %v2084, %v2090
      %vm2093 = vc.u32 %v2091, %v2087
      %v2094 = vsel %vm2093, 1, 0
      %v2095 = vadd.s32 %v2091, %v2087
      %v2096 = vadd.s32 %v2092, %v2094
      %v2097 = vadd.s32 %v2096, %v2086
      %v2098 = vadd.s32 %v2097, %v2088
      %v2099 = vshrl.u32 %v2098, 4
      %v2100 = vmul.u32 %v2099, 18
      %v2101 = vsub.s32 %v2077, %v2100
      %v2102 = vsub.s32 0, %v2101
      %v2103 = vsel %vm2075, %v2102, %v2101
      %vm2104 = vcmp.lt.s32.totalorder %v1424, 0
      %v2105 = vsub.s32 0, %v1424
      %v2106 = vsel %vm2104, %v2105, %v1424
      %v2107 = vand.u32 %v2106, 65535
      %v2108 = vshrl.u32 %v2106, 16
      %v2110 = vmul.u32 %v2107, 14564
      %v2111 = vmul.u32 %v2107, 58254
      %v2112 = vmul.u32 %v2108, 14564
      %v2113 = vmul.u32 %v2108, 58254
      %v2114 = vshll.u32 %v2111, 16
      %v2115 = vshrl.u32 %v2111, 16
      %v2116 = vshll.u32 %v2112, 16
      %v2117 = vshrl.u32 %v2112, 16
      %vm2118 = vc.u32 %v2110, %v2114
      %v2119 = vsel %vm2118, 1, 0
      %v2120 = vadd.s32 %v2110, %v2114
      %v2121 = vadd.s32 %v2113, %v2119
      %vm2122 = vc.u32 %v2120, %v2116
      %v2123 = vsel %vm2122, 1, 0
      %v2124 = vadd.s32 %v2120, %v2116
      %v2125 = vadd.s32 %v2121, %v2123
      %v2126 = vadd.s32 %v2125, %v2115
      %v2127 = vadd.s32 %v2126, %v2117
      %v2128 = vshrl.u32 %v2127, 4
      %v2129 = vmul.u32 %v2128, 18
      %v2130 = vsub.s32 %v2106, %v2129
      %v2131 = vsub.s32 0, %v2130
      %v2132 = vsel %vm2104, %v2131, %v2130
      %vm2133 = vcmp.lt.s32.totalorder %v1425, 0
      %v2134 = vsub.s32 0, %v1425
      %v2135 = vsel %vm2133, %v2134, %v1425
      %v2136 = vand.u32 %v2135, 65535
      %v2137 = vshrl.u32 %v2135, 16
      %v2139 = vmul.u32 %v2136, 14564
      %v2140 = vmul.u32 %v2136, 58254
      %v2141 = vmul.u32 %v2137, 14564
      %v2142 = vmul.u32 %v2137, 58254
      %v2143 = vshll.u32 %v2140, 16
      %v2144 = vshrl.u32 %v2140, 16
      %v2145 = vshll.u32 %v2141, 16
      %v2146 = vshrl.u32 %v2141, 16
      %vm2147 = vc.u32 %v2139, %v2143
      %v2148 = vsel %vm2147, 1, 0
      %v2149 = vadd.s32 %v2139, %v2143
      %v2150 = vadd.s32 %v2142, %v2148
      %vm2151 = vc.u32 %v2149, %v2145
      %v2152 = vsel %vm2151, 1, 0
      %v2153 = vadd.s32 %v2149, %v2145
      %v2154 = vadd.s32 %v2150, %v2152
      %v2155 = vadd.s32 %v2154, %v2144
      %v2156 = vadd.s32 %v2155, %v2146
      %v2157 = vshrl.u32 %v2156, 4
      %v2158 = vmul.u32 %v2157, 18
      %v2159 = vsub.s32 %v2135, %v2158
      %v2160 = vsub.s32 0, %v2159
      %v2161 = vsel %vm2133, %v2160, %v2159
      %vm2162 = vcmp.lt.s32.totalorder %v1426, 0
      %v2163 = vsub.s32 0, %v1426
      %v2164 = vsel %vm2162, %v2163, %v1426
      %v2165 = vand.u32 %v2164, 65535
      %v2166 = vshrl.u32 %v2164, 16
      %v2168 = vmul.u32 %v2165, 14564
      %v2169 = vmul.u32 %v2165, 58254
      %v2170 = vmul.u32 %v2166, 14564
      %v2171 = vmul.u32 %v2166, 58254
      %v2172 = vshll.u32 %v2169, 16
      %v2173 = vshrl.u32 %v2169, 16
      %v2174 = vshll.u32 %v2170, 16
      %v2175 = vshrl.u32 %v2170, 16
      %vm2176 = vc.u32 %v2168, %v2172
      %v2177 = vsel %vm2176, 1, 0
      %v2178 = vadd.s32 %v2168, %v2172
      %v2179 = vadd.s32 %v2171, %v2177
      %vm2180 = vc.u32 %v2178, %v2174
      %v2181 = vsel %vm2180, 1, 0
      %v2182 = vadd.s32 %v2178, %v2174
      %v2183 = vadd.s32 %v2179, %v2181
      %v2184 = vadd.s32 %v2183, %v2173
      %v2185 = vadd.s32 %v2184, %v2175
      %v2186 = vshrl.u32 %v2185, 4
      %v2187 = vmul.u32 %v2186, 18
      %v2188 = vsub.s32 %v2164, %v2187
      %v2189 = vsub.s32 0, %v2188
      %v2190 = vsel %vm2162, %v2189, %v2188
      %vm2191 = vcmp.lt.s32.totalorder %v1427, 0
      %v2192 = vsub.s32 0, %v1427
      %v2193 = vsel %vm2191, %v2192, %v1427
      %v2194 = vand.u32 %v2193, 65535
      %v2195 = vshrl.u32 %v2193, 16
      %v2197 = vmul.u32 %v2194, 14564
      %v2198 = vmul.u32 %v2194, 58254
      %v2199 = vmul.u32 %v2195, 14564
      %v2200 = vmul.u32 %v2195, 58254
      %v2201 = vshll.u32 %v2198, 16
      %v2202 = vshrl.u32 %v2198, 16
      %v2203 = vshll.u32 %v2199, 16
      %v2204 = vshrl.u32 %v2199, 16
      %vm2205 = vc.u32 %v2197, %v2201
      %v2206 = vsel %vm2205, 1, 0
      %v2207 = vadd.s32 %v2197, %v2201
      %v2208 = vadd.s32 %v2200, %v2206
      %vm2209 = vc.u32 %v2207, %v2203
      %v2210 = vsel %vm2209, 1, 0
      %v2211 = vadd.s32 %v2207, %v2203
      %v2212 = vadd.s32 %v2208, %v2210
      %v2213 = vadd.s32 %v2212, %v2202
      %v2214 = vadd.s32 %v2213, %v2204
      %v2215 = vshrl.u32 %v2214, 4
      %v2216 = vmul.u32 %v2215, 18
      %v2217 = vsub.s32 %v2193, %v2216
      %v2218 = vsub.s32 0, %v2217
      %v2219 = vsel %vm2191, %v2218, %v2217
      %vm2220 = vcmp.lt.s32.totalorder %v1428, 0
      %v2221 = vsub.s32 0, %v1428
      %v2222 = vsel %vm2220, %v2221, %v1428
      %v2223 = vand.u32 %v2222, 65535
      %v2224 = vshrl.u32 %v2222, 16
      %v2226 = vmul.u32 %v2223, 14564
      %v2227 = vmul.u32 %v2223, 58254
      %v2228 = vmul.u32 %v2224, 14564
      %v2229 = vmul.u32 %v2224, 58254
      %v2230 = vshll.u32 %v2227, 16
      %v2231 = vshrl.u32 %v2227, 16
      %v2232 = vshll.u32 %v2228, 16
      %v2233 = vshrl.u32 %v2228, 16
      %vm2234 = vc.u32 %v2226, %v2230
      %v2235 = vsel %vm2234, 1, 0
      %v2236 = vadd.s32 %v2226, %v2230
      %v2237 = vadd.s32 %v2229, %v2235
      %vm2238 = vc.u32 %v2236, %v2232
      %v2239 = vsel %vm2238, 1, 0
      %v2240 = vadd.s32 %v2236, %v2232
      %v2241 = vadd.s32 %v2237, %v2239
      %v2242 = vadd.s32 %v2241, %v2231
      %v2243 = vadd.s32 %v2242, %v2233
      %v2244 = vshrl.u32 %v2243, 4
      %v2245 = vmul.u32 %v2244, 18
      %v2246 = vsub.s32 %v2222, %v2245
      %v2247 = vsub.s32 0, %v2246
      %v2248 = vsel %vm2220, %v2247, %v2246
      %vm2249 = vcmp.lt.s32.totalorder %v1429, 0
      %v2250 = vsub.s32 0, %v1429
      %v2251 = vsel %vm2249, %v2250, %v1429
      %v2252 = vand.u32 %v2251, 65535
      %v2253 = vshrl.u32 %v2251, 16
      %v2255 = vmul.u32 %v2252, 14564
      %v2256 = vmul.u32 %v2252, 58254
      %v2257 = vmul.u32 %v2253, 14564
      %v2258 = vmul.u32 %v2253, 58254
      %v2259 = vshll.u32 %v2256, 16
      %v2260 = vshrl.u32 %v2256, 16
      %v2261 = vshll.u32 %v2257, 16
      %v2262 = vshrl.u32 %v2257, 16
      %vm2263 = vc.u32 %v2255, %v2259
      %v2264 = vsel %vm2263, 1, 0
      %v2265 = vadd.s32 %v2255, %v2259
      %v2266 = vadd.s32 %v2258, %v2264
      %vm2267 = vc.u32 %v2265, %v2261
      %v2268 = vsel %vm2267, 1, 0
      %v2269 = vadd.s32 %v2265, %v2261
      %v2270 = vadd.s32 %v2266, %v2268
      %v2271 = vadd.s32 %v2270, %v2260
      %v2272 = vadd.s32 %v2271, %v2262
      %v2273 = vshrl.u32 %v2272, 4
      %v2274 = vmul.u32 %v2273, 18
      %v2275 = vsub.s32 %v2251, %v2274
      %v2276 = vsub.s32 0, %v2275
      %v2277 = vsel %vm2249, %v2276, %v2275
      %vm2278 = vcmp.lt.s32.totalorder %v1430, 0
      %v2279 = vsub.s32 0, %v1430
      %v2280 = vsel %vm2278, %v2279, %v1430
      %v2281 = vand.u32 %v2280, 65535
      %v2282 = vshrl.u32 %v2280, 16
      %v2284 = vmul.u32 %v2281, 14564
      %v2285 = vmul.u32 %v2281, 58254
      %v2286 = vmul.u32 %v2282, 14564
      %v2287 = vmul.u32 %v2282, 58254
      %v2288 = vshll.u32 %v2285, 16
      %v2289 = vshrl.u32 %v2285, 16
      %v2290 = vshll.u32 %v2286, 16
      %v2291 = vshrl.u32 %v2286, 16
      %vm2292 = vc.u32 %v2284, %v2288
      %v2293 = vsel %vm2292, 1, 0
      %v2294 = vadd.s32 %v2284, %v2288
      %v2295 = vadd.s32 %v2287, %v2293
      %vm2296 = vc.u32 %v2294, %v2290
      %v2297 = vsel %vm2296, 1, 0
      %v2298 = vadd.s32 %v2294, %v2290
      %v2299 = vadd.s32 %v2295, %v2297
      %v2300 = vadd.s32 %v2299, %v2289
      %v2301 = vadd.s32 %v2300, %v2291
      %v2302 = vshrl.u32 %v2301, 4
      %v2303 = vmul.u32 %v2302, 18
      %v2304 = vsub.s32 %v2280, %v2303
      %v2305 = vsub.s32 0, %v2304
      %v2306 = vsel %vm2278, %v2305, %v2304
      %vm2307 = vcmp.lt.s32.totalorder %v1431, 0
      %v2308 = vsub.s32 0, %v1431
      %v2309 = vsel %vm2307, %v2308, %v1431
      %v2310 = vand.u32 %v2309, 65535
      %v2311 = vshrl.u32 %v2309, 16
      %v2313 = vmul.u32 %v2310, 14564
      %v2314 = vmul.u32 %v2310, 58254
      %v2315 = vmul.u32 %v2311, 14564
      %v2316 = vmul.u32 %v2311, 58254
      %v2317 = vshll.u32 %v2314, 16
      %v2318 = vshrl.u32 %v2314, 16
      %v2319 = vshll.u32 %v2315, 16
      %v2320 = vshrl.u32 %v2315, 16
      %vm2321 = vc.u32 %v2313, %v2317
      %v2322 = vsel %vm2321, 1, 0
      %v2323 = vadd.s32 %v2313, %v2317
      %v2324 = vadd.s32 %v2316, %v2322
      %vm2325 = vc.u32 %v2323, %v2319
      %v2326 = vsel %vm2325, 1, 0
      %v2327 = vadd.s32 %v2323, %v2319
      %v2328 = vadd.s32 %v2324, %v2326
      %v2329 = vadd.s32 %v2328, %v2318
      %v2330 = vadd.s32 %v2329, %v2320
      %v2331 = vshrl.u32 %v2330, 4
      %v2332 = vmul.u32 %v2331, 18
      %v2333 = vsub.s32 %v2309, %v2332
      %v2334 = vsub.s32 0, %v2333
      %v2335 = vsel %vm2307, %v2334, %v2333
      %vm2336 = vcmp.lt.s32.totalorder %v1432, 0
      %v2337 = vsub.s32 0, %v1432
      %v2338 = vsel %vm2336, %v2337, %v1432
      %v2339 = vand.u32 %v2338, 65535
      %v2340 = vshrl.u32 %v2338, 16
      %v2342 = vmul.u32 %v2339, 14564
      %v2343 = vmul.u32 %v2339, 58254
      %v2344 = vmul.u32 %v2340, 14564
      %v2345 = vmul.u32 %v2340, 58254
      %v2346 = vshll.u32 %v2343, 16
      %v2347 = vshrl.u32 %v2343, 16
      %v2348 = vshll.u32 %v2344, 16
      %v2349 = vshrl.u32 %v2344, 16
      %vm2350 = vc.u32 %v2342, %v2346
      %v2351 = vsel %vm2350, 1, 0
      %v2352 = vadd.s32 %v2342, %v2346
      %v2353 = vadd.s32 %v2345, %v2351
      %vm2354 = vc.u32 %v2352, %v2348
      %v2355 = vsel %vm2354, 1, 0
      %v2356 = vadd.s32 %v2352, %v2348
      %v2357 = vadd.s32 %v2353, %v2355
      %v2358 = vadd.s32 %v2357, %v2347
      %v2359 = vadd.s32 %v2358, %v2349
      %v2360 = vshrl.u32 %v2359, 4
      %v2361 = vmul.u32 %v2360, 18
      %v2362 = vsub.s32 %v2338, %v2361
      %v2363 = vsub.s32 0, %v2362
      %v2364 = vsel %vm2336, %v2363, %v2362
      %vm2365 = vcmp.lt.s32.totalorder %v1433, 0
      %v2366 = vsub.s32 0, %v1433
      %v2367 = vsel %vm2365, %v2366, %v1433
      %v2368 = vand.u32 %v2367, 65535
      %v2369 = vshrl.u32 %v2367, 16
      %v2371 = vmul.u32 %v2368, 14564
      %v2372 = vmul.u32 %v2368, 58254
      %v2373 = vmul.u32 %v2369, 14564
      %v2374 = vmul.u32 %v2369, 58254
      %v2375 = vshll.u32 %v2372, 16
      %v2376 = vshrl.u32 %v2372, 16
      %v2377 = vshll.u32 %v2373, 16
      %v2378 = vshrl.u32 %v2373, 16
      %vm2379 = vc.u32 %v2371, %v2375
      %v2380 = vsel %vm2379, 1, 0
      %v2381 = vadd.s32 %v2371, %v2375
      %v2382 = vadd.s32 %v2374, %v2380
      %vm2383 = vc.u32 %v2381, %v2377
      %v2384 = vsel %vm2383, 1, 0
      %v2385 = vadd.s32 %v2381, %v2377
      %v2386 = vadd.s32 %v2382, %v2384
      %v2387 = vadd.s32 %v2386, %v2376
      %v2388 = vadd.s32 %v2387, %v2378
      %v2389 = vshrl.u32 %v2388, 4
      %v2390 = vmul.u32 %v2389, 18
      %v2391 = vsub.s32 %v2367, %v2390
      %v2392 = vsub.s32 0, %v2391
      %v2393 = vsel %vm2365, %v2392, %v2391
      %vm2394 = vcmp.lt.s32.totalorder %v1434, 0
      %v2395 = vsub.s32 0, %v1434
      %v2396 = vsel %vm2394, %v2395, %v1434
      %v2397 = vand.u32 %v2396, 65535
      %v2398 = vshrl.u32 %v2396, 16
      %v2400 = vmul.u32 %v2397, 14564
      %v2401 = vmul.u32 %v2397, 58254
      %v2402 = vmul.u32 %v2398, 14564
      %v2403 = vmul.u32 %v2398, 58254
      %v2404 = vshll.u32 %v2401, 16
      %v2405 = vshrl.u32 %v2401, 16
      %v2406 = vshll.u32 %v2402, 16
      %v2407 = vshrl.u32 %v2402, 16
      %vm2408 = vc.u32 %v2400, %v2404
      %v2409 = vsel %vm2408, 1, 0
      %v2410 = vadd.s32 %v2400, %v2404
      %v2411 = vadd.s32 %v2403, %v2409
      %vm2412 = vc.u32 %v2410, %v2406
      %v2413 = vsel %vm2412, 1, 0
      %v2414 = vadd.s32 %v2410, %v2406
      %v2415 = vadd.s32 %v2411, %v2413
      %v2416 = vadd.s32 %v2415, %v2405
      %v2417 = vadd.s32 %v2416, %v2407
      %v2418 = vshrl.u32 %v2417, 4
      %v2419 = vmul.u32 %v2418, 18
      %v2420 = vsub.s32 %v2396, %v2419
      %v2421 = vsub.s32 0, %v2420
      %v2422 = vsel %vm2394, %v2421, %v2420
      %vm2423 = vcmp.lt.s32.totalorder %v1435, 0
      %v2424 = vsub.s32 0, %v1435
      %v2425 = vsel %vm2423, %v2424, %v1435
      %v2426 = vand.u32 %v2425, 65535
      %v2427 = vshrl.u32 %v2425, 16
      %v2429 = vmul.u32 %v2426, 14564
      %v2430 = vmul.u32 %v2426, 58254
      %v2431 = vmul.u32 %v2427, 14564
      %v2432 = vmul.u32 %v2427, 58254
      %v2433 = vshll.u32 %v2430, 16
      %v2434 = vshrl.u32 %v2430, 16
      %v2435 = vshll.u32 %v2431, 16
      %v2436 = vshrl.u32 %v2431, 16
      %vm2437 = vc.u32 %v2429, %v2433
      %v2438 = vsel %vm2437, 1, 0
      %v2439 = vadd.s32 %v2429, %v2433
      %v2440 = vadd.s32 %v2432, %v2438
      %vm2441 = vc.u32 %v2439, %v2435
      %v2442 = vsel %vm2441, 1, 0
      %v2443 = vadd.s32 %v2439, %v2435
      %v2444 = vadd.s32 %v2440, %v2442
      %v2445 = vadd.s32 %v2444, %v2434
      %v2446 = vadd.s32 %v2445, %v2436
      %v2447 = vshrl.u32 %v2446, 4
      %v2448 = vmul.u32 %v2447, 18
      %v2449 = vsub.s32 %v2425, %v2448
      %v2450 = vsub.s32 0, %v2449
      %v2451 = vsel %vm2423, %v2450, %v2449
      %vm2452 = vcmp.lt.s32.totalorder %v1436, 0
      %v2453 = vsub.s32 0, %v1436
      %v2454 = vsel %vm2452, %v2453, %v1436
      %v2455 = vand.u32 %v2454, 65535
      %v2456 = vshrl.u32 %v2454, 16
      %v2458 = vmul.u32 %v2455, 14564
      %v2459 = vmul.u32 %v2455, 58254
      %v2460 = vmul.u32 %v2456, 14564
      %v2461 = vmul.u32 %v2456, 58254
      %v2462 = vshll.u32 %v2459, 16
      %v2463 = vshrl.u32 %v2459, 16
      %v2464 = vshll.u32 %v2460, 16
      %v2465 = vshrl.u32 %v2460, 16
      %vm2466 = vc.u32 %v2458, %v2462
      %v2467 = vsel %vm2466, 1, 0
      %v2468 = vadd.s32 %v2458, %v2462
      %v2469 = vadd.s32 %v2461, %v2467
      %vm2470 = vc.u32 %v2468, %v2464
      %v2471 = vsel %vm2470, 1, 0
      %v2472 = vadd.s32 %v2468, %v2464
      %v2473 = vadd.s32 %v2469, %v2471
      %v2474 = vadd.s32 %v2473, %v2463
      %v2475 = vadd.s32 %v2474, %v2465
      %v2476 = vshrl.u32 %v2475, 4
      %v2477 = vmul.u32 %v2476, 18
      %v2478 = vsub.s32 %v2454, %v2477
      %v2479 = vsub.s32 0, %v2478
      %v2480 = vsel %vm2452, %v2479, %v2478
      %vm2481 = vcmp.ne.s32.totalorder %v1465, 0
      %vm2482 = vcmp.ne.s32.totalorder %v1494, 0
      %vm2483 = vcmp.ne.s32.totalorder %v1523, 0
      %vm2484 = vcmp.ne.s32.totalorder %v1552, 0
      %vm2485 = vcmp.ne.s32.totalorder %v1581, 0
      %vm2486 = vcmp.ne.s32.totalorder %v1610, 0
      %vm2487 = vcmp.ne.s32.totalorder %v1639, 0
      %vm2488 = vcmp.ne.s32.totalorder %v1668, 0
      %vm2489 = vcmp.ne.s32.totalorder %v1697, 0
      %vm2490 = vcmp.ne.s32.totalorder %v1726, 0
      %vm2491 = vcmp.ne.s32.totalorder %v1755, 0
      %vm2492 = vcmp.ne.s32.totalorder %v1784, 0
      %vm2493 = vcmp.ne.s32.totalorder %v1813, 0
      %vm2494 = vcmp.ne.s32.totalorder %v1842, 0
      %vm2495 = vcmp.ne.s32.totalorder %v1871, 0
      %vm2496 = vcmp.ne.s32.totalorder %v1900, 0
      %vm2497 = vcmp.ne.s32.totalorder %v1929, 0
      %vm2498 = vcmp.ne.s32.totalorder %v1958, 0
      %vm2499 = vcmp.ne.s32.totalorder %v1987, 0
      %vm2500 = vcmp.ne.s32.totalorder %v2016, 0
      %vm2501 = vcmp.ne.s32.totalorder %v2045, 0
      %vm2502 = vcmp.ne.s32.totalorder %v2074, 0
      %vm2503 = vcmp.ne.s32.totalorder %v2103, 0
      %vm2504 = vcmp.ne.s32.totalorder %v2132, 0
      %vm2505 = vcmp.ne.s32.totalorder %v2161, 0
      %vm2506 = vcmp.ne.s32.totalorder %v2190, 0
      %vm2507 = vcmp.ne.s32.totalorder %v2219, 0
      %vm2508 = vcmp.ne.s32.totalorder %v2248, 0
      %vm2509 = vcmp.ne.s32.totalorder %v2277, 0
      %vm2510 = vcmp.ne.s32.totalorder %v2306, 0
      %vm2511 = vcmp.ne.s32.totalorder %v2335, 0
      %vm2512 = vcmp.ne.s32.totalorder %v2364, 0
      %vm2513 = vcmp.ne.s32.totalorder %v2393, 0
      %vm2514 = vcmp.ne.s32.totalorder %v2422, 0
      %vm2515 = vcmp.ne.s32.totalorder %v2451, 0
      %vm2516 = vcmp.ne.s32.totalorder %v2480, 0
      %vm2517 = vcmp.lt.s32.totalorder %v1465, 0
      %vm2518 = vcmp.lt.s32.totalorder %v1494, 0
      %vm2519 = vcmp.lt.s32.totalorder %v1523, 0
      %vm2520 = vcmp.lt.s32.totalorder %v1552, 0
      %vm2521 = vcmp.lt.s32.totalorder %v1581, 0
      %vm2522 = vcmp.lt.s32.totalorder %v1610, 0
      %vm2523 = vcmp.lt.s32.totalorder %v1639, 0
      %vm2524 = vcmp.lt.s32.totalorder %v1668, 0
      %vm2525 = vcmp.lt.s32.totalorder %v1697, 0
      %vm2526 = vcmp.lt.s32.totalorder %v1726, 0
      %vm2527 = vcmp.lt.s32.totalorder %v1755, 0
      %vm2528 = vcmp.lt.s32.totalorder %v1784, 0
      %vm2529 = vcmp.lt.s32.totalorder %v1813, 0
      %vm2530 = vcmp.lt.s32.totalorder %v1842, 0
      %vm2531 = vcmp.lt.s32.totalorder %v1871, 0
      %vm2532 = vcmp.lt.s32.totalorder %v1900, 0
      %vm2533 = vcmp.lt.s32.totalorder %v1929, 0
      %vm2534 = vcmp.lt.s32.totalorder %v1958, 0
      %vm2535 = vcmp.lt.s32.totalorder %v1987, 0
      %vm2536 = vcmp.lt.s32.totalorder %v2016, 0
      %vm2537 = vcmp.lt.s32.totalorder %v2045, 0
      %vm2538 = vcmp.lt.s32.totalorder %v2074, 0
      %vm2539 = vcmp.lt.s32.totalorder %v2103, 0
      %vm2540 = vcmp.lt.s32.totalorder %v2132, 0
      %vm2541 = vcmp.lt.s32.totalorder %v2161, 0
      %vm2542 = vcmp.lt.s32.totalorder %v2190, 0
      %vm2543 = vcmp.lt.s32.totalorder %v2219, 0
      %vm2544 = vcmp.lt.s32.totalorder %v2248, 0
      %vm2545 = vcmp.lt.s32.totalorder %v2277, 0
      %vm2546 = vcmp.lt.s32.totalorder %v2306, 0
      %vm2547 = vcmp.lt.s32.totalorder %v2335, 0
      %vm2548 = vcmp.lt.s32.totalorder %v2364, 0
      %vm2549 = vcmp.lt.s32.totalorder %v2393, 0
      %vm2550 = vcmp.lt.s32.totalorder %v2422, 0
      %vm2551 = vcmp.lt.s32.totalorder %v2451, 0
      %vm2552 = vcmp.lt.s32.totalorder %v2480, 0
      %vm2553 = vmand %vm2517, %vm2481
      %vm2554 = vmand %vm2518, %vm2482
      %vm2555 = vmand %vm2519, %vm2483
      %vm2556 = vmand %vm2520, %vm2484
      %vm2557 = vmand %vm2521, %vm2485
      %vm2558 = vmand %vm2522, %vm2486
      %vm2559 = vmand %vm2523, %vm2487
      %vm2560 = vmand %vm2524, %vm2488
      %vm2561 = vmand %vm2525, %vm2489
      %vm2562 = vmand %vm2526, %vm2490
      %vm2563 = vmand %vm2527, %vm2491
      %vm2564 = vmand %vm2528, %vm2492
      %vm2565 = vmand %vm2529, %vm2493
      %vm2566 = vmand %vm2530, %vm2494
      %vm2567 = vmand %vm2531, %vm2495
      %vm2568 = vmand %vm2532, %vm2496
      %vm2569 = vmand %vm2533, %vm2497
      %vm2570 = vmand %vm2534, %vm2498
      %vm2571 = vmand %vm2535, %vm2499
      %vm2572 = vmand %vm2536, %vm2500
      %vm2573 = vmand %vm2537, %vm2501
      %vm2574 = vmand %vm2538, %vm2502
      %vm2575 = vmand %vm2539, %vm2503
      %vm2576 = vmand %vm2540, %vm2504
      %vm2577 = vmand %vm2541, %vm2505
      %vm2578 = vmand %vm2542, %vm2506
      %vm2579 = vmand %vm2543, %vm2507
      %vm2580 = vmand %vm2544, %vm2508
      %vm2581 = vmand %vm2545, %vm2509
      %vm2582 = vmand %vm2546, %vm2510
      %vm2583 = vmand %vm2547, %vm2511
      %vm2584 = vmand %vm2548, %vm2512
      %vm2585 = vmand %vm2549, %vm2513
      %vm2586 = vmand %vm2550, %vm2514
      %vm2587 = vmand %vm2551, %vm2515
      %vm2588 = vmand %vm2552, %vm2516
      %v2589 = vadd.s32 %v1465, 18
      %v2590 = vadd.s32 %v1494, 18
      %v2591 = vadd.s32 %v1523, 18
      %v2592 = vadd.s32 %v1552, 18
      %v2593 = vadd.s32 %v1581, 18
      %v2594 = vadd.s32 %v1610, 18
      %v2595 = vadd.s32 %v1639, 18
      %v2596 = vadd.s32 %v1668, 18
      %v2597 = vadd.s32 %v1697, 18
      %v2598 = vadd.s32 %v1726, 18
      %v2599 = vadd.s32 %v1755, 18
      %v2600 = vadd.s32 %v1784, 18
      %v2601 = vadd.s32 %v1813, 18
      %v2602 = vadd.s32 %v1842, 18
      %v2603 = vadd.s32 %v1871, 18
      %v2604 = vadd.s32 %v1900, 18
      %v2605 = vadd.s32 %v1929, 18
      %v2606 = vadd.s32 %v1958, 18
      %v2607 = vadd.s32 %v1987, 18
      %v2608 = vadd.s32 %v2016, 18
      %v2609 = vadd.s32 %v2045, 18
      %v2610 = vadd.s32 %v2074, 18
      %v2611 = vadd.s32 %v2103, 18
      %v2612 = vadd.s32 %v2132, 18
      %v2613 = vadd.s32 %v2161, 18
      %v2614 = vadd.s32 %v2190, 18
      %v2615 = vadd.s32 %v2219, 18
      %v2616 = vadd.s32 %v2248, 18
      %v2617 = vadd.s32 %v2277, 18
      %v2618 = vadd.s32 %v2306, 18
      %v2619 = vadd.s32 %v2335, 18
      %v2620 = vadd.s32 %v2364, 18
      %v2621 = vadd.s32 %v2393, 18
      %v2622 = vadd.s32 %v2422, 18
      %v2623 = vadd.s32 %v2451, 18
      %v2624 = vadd.s32 %v2480, 18
      %v2625 = vsel %vm2553, %v2589, %v1465
      %v2626 = vsel %vm2554, %v2590, %v1494
      %v2627 = vsel %vm2555, %v2591, %v1523
      %v2628 = vsel %vm2556, %v2592, %v1552
      %v2629 = vsel %vm2557, %v2593, %v1581
      %v2630 = vsel %vm2558, %v2594, %v1610
      %v2631 = vsel %vm2559, %v2595, %v1639
      %v2632 = vsel %vm2560, %v2596, %v1668
      %v2633 = vsel %vm2561, %v2597, %v1697
      %v2634 = vsel %vm2562, %v2598, %v1726
      %v2635 = vsel %vm2563, %v2599, %v1755
      %v2636 = vsel %vm2564, %v2600, %v1784
      %v2637 = vsel %vm2565, %v2601, %v1813
      %v2638 = vsel %vm2566, %v2602, %v1842
      %v2639 = vsel %vm2567, %v2603, %v1871
      %v2640 = vsel %vm2568, %v2604, %v1900
      %v2641 = vsel %vm2569, %v2605, %v1929
      %v2642 = vsel %vm2570, %v2606, %v1958
      %v2643 = vsel %vm2571, %v2607, %v1987
      %v2644 = vsel %vm2572, %v2608, %v2016
      %v2645 = vsel %vm2573, %v2609, %v2045
      %v2646 = vsel %vm2574, %v2610, %v2074
      %v2647 = vsel %vm2575, %v2611, %v2103
      %v2648 = vsel %vm2576, %v2612, %v2132
      %v2649 = vsel %vm2577, %v2613, %v2161
      %v2650 = vsel %vm2578, %v2614, %v2190
      %v2651 = vsel %vm2579, %v2615, %v2219
      %v2652 = vsel %vm2580, %v2616, %v2248
      %v2653 = vsel %vm2581, %v2617, %v2277
      %v2654 = vsel %vm2582, %v2618, %v2306
      %v2655 = vsel %vm2583, %v2619, %v2335
      %v2656 = vsel %vm2584, %v2620, %v2364
      %v2657 = vsel %vm2585, %v2621, %v2393
      %v2658 = vsel %vm2586, %v2622, %v2422
      %v2659 = vsel %vm2587, %v2623, %v2451
      %v2660 = vsel %vm2588, %v2624, %v2480
      %vm2661 = vcmp.lt.s32.totalorder %v2625, 16
      %vm2662 = vcmp.lt.s32.totalorder %v2626, 16
      %vm2663 = vcmp.lt.s32.totalorder %v2627, 16
      %vm2664 = vcmp.lt.s32.totalorder %v2628, 16
      %vm2665 = vcmp.lt.s32.totalorder %v2629, 16
      %vm2666 = vcmp.lt.s32.totalorder %v2630, 16
      %vm2667 = vcmp.lt.s32.totalorder %v2631, 16
      %vm2668 = vcmp.lt.s32.totalorder %v2632, 16
      %vm2669 = vcmp.lt.s32.totalorder %v2633, 16
      %vm2670 = vcmp.lt.s32.totalorder %v2634, 16
      %vm2671 = vcmp.lt.s32.totalorder %v2635, 16
      %vm2672 = vcmp.lt.s32.totalorder %v2636, 16
      %vm2673 = vcmp.lt.s32.totalorder %v2637, 16
      %vm2674 = vcmp.lt.s32.totalorder %v2638, 16
      %vm2675 = vcmp.lt.s32.totalorder %v2639, 16
      %vm2676 = vcmp.lt.s32.totalorder %v2640, 16
      %vm2677 = vcmp.lt.s32.totalorder %v2641, 16
      %vm2678 = vcmp.lt.s32.totalorder %v2642, 16
      %vm2679 = vcmp.lt.s32.totalorder %v2643, 16
      %vm2680 = vcmp.lt.s32.totalorder %v2644, 16
      %vm2681 = vcmp.lt.s32.totalorder %v2645, 16
      %vm2682 = vcmp.lt.s32.totalorder %v2646, 16
      %vm2683 = vcmp.lt.s32.totalorder %v2647, 16
      %vm2684 = vcmp.lt.s32.totalorder %v2648, 16
      %vm2685 = vcmp.lt.s32.totalorder %v2649, 16
      %vm2686 = vcmp.lt.s32.totalorder %v2650, 16
      %vm2687 = vcmp.lt.s32.totalorder %v2651, 16
      %vm2688 = vcmp.lt.s32.totalorder %v2652, 16
      %vm2689 = vcmp.lt.s32.totalorder %v2653, 16
      %vm2690 = vcmp.lt.s32.totalorder %v2654, 16
      %vm2691 = vcmp.lt.s32.totalorder %v2655, 16
      %vm2692 = vcmp.lt.s32.totalorder %v2656, 16
      %vm2693 = vcmp.lt.s32.totalorder %v2657, 16
      %vm2694 = vcmp.lt.s32.totalorder %v2658, 16
      %vm2695 = vcmp.lt.s32.totalorder %v2659, 16
      %vm2696 = vcmp.lt.s32.totalorder %v2660, 16
      %v2697 = vsel %vm2661, %v1364, 0.0
      %v2698 = vsel %vm2662, %v1365, 0.0
      %v2699 = vsel %vm2663, %v1366, 0.0
      %v2700 = vsel %vm2664, %v1367, 0.0
      %v2701 = vsel %vm2665, %v1368, 0.0
      %v2702 = vsel %vm2666, %v1369, 0.0
      %v2703 = vsel %vm2667, %v1370, 0.0
      %v2704 = vsel %vm2668, %v1371, 0.0
      %v2705 = vsel %vm2669, %v1372, 0.0
      %v2706 = vsel %vm2670, %v1373, 0.0
      %v2707 = vsel %vm2671, %v1374, 0.0
      %v2708 = vsel %vm2672, %v1375, 0.0
      %v2709 = vsel %vm2673, %v1376, 0.0
      %v2710 = vsel %vm2674, %v1377, 0.0
      %v2711 = vsel %vm2675, %v1378, 0.0
      %v2712 = vsel %vm2676, %v1379, 0.0
      %v2713 = vsel %vm2677, %v1380, 0.0
      %v2714 = vsel %vm2678, %v1381, 0.0
      %v2715 = vsel %vm2679, %v1382, 0.0
      %v2716 = vsel %vm2680, %v1383, 0.0
      %v2717 = vsel %vm2681, %v1384, 0.0
      %v2718 = vsel %vm2682, %v1385, 0.0
      %v2719 = vsel %vm2683, %v1386, 0.0
      %v2720 = vsel %vm2684, %v1387, 0.0
      %v2721 = vsel %vm2685, %v1388, 0.0
      %v2722 = vsel %vm2686, %v1389, 0.0
      %v2723 = vsel %vm2687, %v1390, 0.0
      %v2724 = vsel %vm2688, %v1391, 0.0
      %v2725 = vsel %vm2689, %v1392, 0.0
      %v2726 = vsel %vm2690, %v1393, 0.0
      %v2727 = vsel %vm2691, %v1394, 0.0
      %v2728 = vsel %vm2692, %v1395, 0.0
      %v2729 = vsel %vm2693, %v1396, 0.0
      %v2730 = vsel %vm2694, %v1397, 0.0
      %v2731 = vsel %vm2695, %v1398, 0.0
      %v2732 = vsel %vm2696, %v1399, 0.0
      %vm2733 = vcmask 64512
      %2734 = vst.msk [vmem:[#allocation2] sm:$0xff] %vm2733, 0.0
      %2735 = vst.msk [vmem:[#allocation2 + $0x8] sm:$0xff] %vm2733, 0.0
      %2736 = vst.msk [vmem:[#allocation2 + $0x10] sm:$0xff] %vm2733, 0.0
      %2737 = vst.msk [vmem:[#allocation2 + $0x18] sm:$0xff] %vm2733, 0.0
      %2738 = vst.msk [vmem:[#allocation2 + $0x20] sm:$0xff] %vm2733, 0.0
      %2739 = vst.msk [vmem:[#allocation2 + $0x28] sm:$0xff] %vm2733, 0.0
      %2740 = vst.msk [vmem:[#allocation2 + $0x30] sm:$0xff] %vm2733, 0.0
      %2741 = vst.msk [vmem:[#allocation2 + $0x38] sm:$0xff] %vm2733, 0.0
      %2742 = vst.msk [vmem:[#allocation2 + $0x40] sm:$0xff] %vm2733, 0.0
      %2743 = vst.msk [vmem:[#allocation2 + $0x48] sm:$0xff] %vm2733, 0.0
      %2744 = vst.msk [vmem:[#allocation2 + $0x50] sm:$0xff] %vm2733, 0.0
      %2745 = vst.msk [vmem:[#allocation2 + $0x58] sm:$0xff] %vm2733, 0.0
      %2746 = vst.msk [vmem:[#allocation2 + $0x60] sm:$0xff] %vm2733, 0.0
      %2747 = vst.msk [vmem:[#allocation2 + $0x68] sm:$0xff] %vm2733, 0.0
      %2748 = vst.msk [vmem:[#allocation2 + $0x70] sm:$0xff] %vm2733, 0.0
      %2749 = vst.msk [vmem:[#allocation2 + $0x78] sm:$0xff] %vm2733, 0.0
      %2750 = vst.msk [vmem:[#allocation2 + $0x80] sm:$0xff] %vm2733, 0.0
      %2751 = vst.msk [vmem:[#allocation2 + $0x88] sm:$0xff] %vm2733, 0.0
      %2752 = vst.msk [vmem:[#allocation2 + $0x90] sm:$0xff] %vm2733, 0.0
      %2753 = vst.msk [vmem:[#allocation2 + $0x98] sm:$0xff] %vm2733, 0.0
      %2754 = vst.msk [vmem:[#allocation2 + $0xa0] sm:$0xff] %vm2733, 0.0
      %2755 = vst.msk [vmem:[#allocation2 + $0xa8] sm:$0xff] %vm2733, 0.0
      %2756 = vst.msk [vmem:[#allocation2 + $0xb0] sm:$0xff] %vm2733, 0.0
      %2757 = vst.msk [vmem:[#allocation2 + $0xb8] sm:$0xff] %vm2733, 0.0
      %2758 = vst.msk [vmem:[#allocation2 + $0xc0] sm:$0xff] %vm2733, 0.0
      %2759 = vst.msk [vmem:[#allocation2 + $0xc8] sm:$0xff] %vm2733, 0.0
      %2760 = vst.msk [vmem:[#allocation2 + $0xd0] sm:$0xff] %vm2733, 0.0
      %2761 = vst.msk [vmem:[#allocation2 + $0xd8] sm:$0xff] %vm2733, 0.0
      %2762 = vst.msk [vmem:[#allocation2 + $0xe0] sm:$0xff] %vm2733, 0.0
      %2763 = vst.msk [vmem:[#allocation2 + $0xe8] sm:$0xff] %vm2733, 0.0
      %2764 = vst.msk [vmem:[#allocation2 + $0xf0] sm:$0xff] %vm2733, 0.0
      %2765 = vst.msk [vmem:[#allocation2 + $0xf8] sm:$0xff] %vm2733, 0.0
      %2766 = vst.msk [vmem:[#allocation2 + $0x100] sm:$0xff] %vm2733, 0.0
      %2767 = vst.msk [vmem:[#allocation2 + $0x108] sm:$0xff] %vm2733, 0.0
      %2768 = vst.msk [vmem:[#allocation2 + $0x110] sm:$0xff] %vm2733, 0.0
      %2769 = vst.msk [vmem:[#allocation2 + $0x118] sm:$0xff] %vm2733, 0.0
      %2770 = vst.msk [vmem:[#allocation2 + $0x120] sm:$0xff] %vm2733, 0.0
      %2771 = vst.msk [vmem:[#allocation2 + $0x128] sm:$0xff] %vm2733, 0.0
      %2772 = vst.msk [vmem:[#allocation2 + $0x130] sm:$0xff] %vm2733, 0.0
      %2773 = vst.msk [vmem:[#allocation2 + $0x138] sm:$0xff] %vm2733, 0.0
      %2774 = vst.msk [vmem:[#allocation2 + $0x140] sm:$0xff] %vm2733, 0.0
      %vm2775 = vcmask 60416
      %2776 = vst.msk [vmem:[#allocation2 + $0x148] sm:$0xf] %vm2775, 0.0
      %2777 = vst.msk [vmem:[#allocation2 + $0x13] sm:$0xff] %vm2733, %v2697
      %2778 = vst.msk [vmem:[#allocation2 + $0x1b] sm:$0xff] %vm2733, %v2698
      %2779 = vst.msk [vmem:[#allocation2 + $0x23] sm:$0xff] %vm2733, %v2699
      %2780 = vst.msk [vmem:[#allocation2 + $0x2b] sm:$0xff] %vm2733, %v2700
      %2781 = vst.msk [vmem:[#allocation2 + $0x33] sm:$0xff] %vm2733, %v2701
      %2782 = vst.msk [vmem:[#allocation2 + $0x3b] sm:$0xff] %vm2733, %v2702
      %2783 = vst.msk [vmem:[#allocation2 + $0x43] sm:$0xff] %vm2733, %v2703
      %2784 = vst.msk [vmem:[#allocation2 + $0x4b] sm:$0xff] %vm2733, %v2704
      %2785 = vst.msk [vmem:[#allocation2 + $0x53] sm:$0xff] %vm2733, %v2705
      %2786 = vst.msk [vmem:[#allocation2 + $0x5b] sm:$0xff] %vm2733, %v2706
      %2787 = vst.msk [vmem:[#allocation2 + $0x63] sm:$0xff] %vm2733, %v2707
      %2788 = vst.msk [vmem:[#allocation2 + $0x6b] sm:$0xff] %vm2733, %v2708
      %2789 = vst.msk [vmem:[#allocation2 + $0x73] sm:$0xff] %vm2733, %v2709
      %2790 = vst.msk [vmem:[#allocation2 + $0x7b] sm:$0xff] %vm2733, %v2710
      %2791 = vst.msk [vmem:[#allocation2 + $0x83] sm:$0xff] %vm2733, %v2711
      %2792 = vst.msk [vmem:[#allocation2 + $0x8b] sm:$0xff] %vm2733, %v2712
      %2793 = vst.msk [vmem:[#allocation2 + $0x93] sm:$0xff] %vm2733, %v2713
      %2794 = vst.msk [vmem:[#allocation2 + $0x9b] sm:$0xff] %vm2733, %v2714
      %2795 = vst.msk [vmem:[#allocation2 + $0xa3] sm:$0xff] %vm2733, %v2715
      %2796 = vst.msk [vmem:[#allocation2 + $0xab] sm:$0xff] %vm2733, %v2716
      %2797 = vst.msk [vmem:[#allocation2 + $0xb3] sm:$0xff] %vm2733, %v2717
      %2798 = vst.msk [vmem:[#allocation2 + $0xbb] sm:$0xff] %vm2733, %v2718
      %2799 = vst.msk [vmem:[#allocation2 + $0xc3] sm:$0xff] %vm2733, %v2719
      %2800 = vst.msk [vmem:[#allocation2 + $0xcb] sm:$0xff] %vm2733, %v2720
      %2801 = vst.msk [vmem:[#allocation2 + $0xd3] sm:$0xff] %vm2733, %v2721
      %2802 = vst.msk [vmem:[#allocation2 + $0xdb] sm:$0xff] %vm2733, %v2722
      %2803 = vst.msk [vmem:[#allocation2 + $0xe3] sm:$0xff] %vm2733, %v2723
      %2804 = vst.msk [vmem:[#allocation2 + $0xeb] sm:$0xff] %vm2733, %v2724
      %2805 = vst.msk [vmem:[#allocation2 + $0xf3] sm:$0xff] %vm2733, %v2725
      %2806 = vst.msk [vmem:[#allocation2 + $0xfb] sm:$0xff] %vm2733, %v2726
      %2807 = vst.msk [vmem:[#allocation2 + $0x103] sm:$0xff] %vm2733, %v2727
      %2808 = vst.msk [vmem:[#allocation2 + $0x10b] sm:$0xff] %vm2733, %v2728
      %2809 = vst.msk [vmem:[#allocation2 + $0x113] sm:$0xff] %vm2733, %v2729
      %2810 = vst.msk [vmem:[#allocation2 + $0x11b] sm:$0xff] %vm2733, %v2730
      %2811 = vst.msk [vmem:[#allocation2 + $0x123] sm:$0xff] %vm2733, %v2731
      %2812 = vst.msk [vmem:[#allocation2 + $0x12b] sm:$0xff] %vm2733, %v2732
      %v2813 = vld [vmem:[#allocation2] sm:$0xff]
      %v2814 = vld [vmem:[#allocation2 + $0x8] sm:$0xff]
      %v2815 = vld [vmem:[#allocation2 + $0x10] sm:$0xff]
      %v2816 = vld [vmem:[#allocation2 + $0x18] sm:$0xff]
      %v2817 = vld [vmem:[#allocation2 + $0x20] sm:$0xff]
      %v2818 = vld [vmem:[#allocation2 + $0x28] sm:$0xff]
      %v2819 = vld [vmem:[#allocation2 + $0x30] sm:$0xff]
      %v2820 = vld [vmem:[#allocation2 + $0x38] sm:$0xff]
      %v2821 = vld [vmem:[#allocation2 + $0x40] sm:$0xff]
      %v2822 = vld [vmem:[#allocation2 + $0x48] sm:$0xff]
      %v2823 = vld [vmem:[#allocation2 + $0x50] sm:$0xff]
      %v2824 = vld [vmem:[#allocation2 + $0x58] sm:$0xff]
      %v2825 = vld [vmem:[#allocation2 + $0x60] sm:$0xff]
      %v2826 = vld [vmem:[#allocation2 + $0x68] sm:$0xff]
      %v2827 = vld [vmem:[#allocation2 + $0x70] sm:$0xff]
      %v2828 = vld [vmem:[#allocation2 + $0x78] sm:$0xff]
      %v2829 = vld [vmem:[#allocation2 + $0x80] sm:$0xff]
      %v2830 = vld [vmem:[#allocation2 + $0x88] sm:$0xff]
      %v2831 = vld [vmem:[#allocation2 + $0x90] sm:$0xff]
      %v2832 = vld [vmem:[#allocation2 + $0x98] sm:$0xff]
      %v2833 = vld [vmem:[#allocation2 + $0xa0] sm:$0xff]
      %v2834 = vld [vmem:[#allocation2 + $0xa8] sm:$0xff]
      %v2835 = vld [vmem:[#allocation2 + $0xb0] sm:$0xff]
      %v2836 = vld [vmem:[#allocation2 + $0xb8] sm:$0xff]
      %v2837 = vld [vmem:[#allocation2 + $0xc0] sm:$0xff]
      %v2838 = vld [vmem:[#allocation2 + $0xc8] sm:$0xff]
      %v2839 = vld [vmem:[#allocation2 + $0xd0] sm:$0xff]
      %v2840 = vld [vmem:[#allocation2 + $0xd8] sm:$0xff]
      %v2841 = vld [vmem:[#allocation2 + $0xe0] sm:$0xff]
      %v2842 = vld [vmem:[#allocation2 + $0xe8] sm:$0xff]
      %v2843 = vld [vmem:[#allocation2 + $0xf0] sm:$0xff]
      %v2844 = vld [vmem:[#allocation2 + $0xf8] sm:$0xff]
      %v2845 = vld [vmem:[#allocation2 + $0x100] sm:$0xff]
      %v2846 = vld [vmem:[#allocation2 + $0x108] sm:$0xff]
      %v2847 = vld [vmem:[#allocation2 + $0x110] sm:$0xff]
      %v2848 = vld [vmem:[#allocation2 + $0x118] sm:$0xff]
      %v2849 = vpack.c.bf16 %v2814, %v2813
      %v2850 = vpack.c.bf16 %v2816, %v2815
      %v2851 = vpack.c.bf16 %v2818, %v2817
      %v2852 = vpack.c.bf16 %v2820, %v2819
      %v2853 = vpack.c.bf16 %v2822, %v2821
      %v2854 = vpack.c.bf16 %v2824, %v2823
      %v2855 = vpack.c.bf16 %v2826, %v2825
      %v2856 = vpack.c.bf16 %v2828, %v2827
      %v2857 = vpack.c.bf16 %v2830, %v2829
      %v2858 = vpack.c.bf16 %v2832, %v2831
      %v2859 = vpack.c.bf16 %v2834, %v2833
      %v2860 = vpack.c.bf16 %v2836, %v2835
      %v2861 = vpack.c.bf16 %v2838, %v2837
      %v2862 = vpack.c.bf16 %v2840, %v2839
      %v2863 = vpack.c.bf16 %v2842, %v2841
      %v2864 = vpack.c.bf16 %v2844, %v2843
      %v2865 = vpack.c.bf16 %v2846, %v2845
      %v2866 = vpack.c.bf16 %v2848, %v2847
      %v2867 = vld [vmem:[%s3] sm:$0xf]
      %v2868 = vld [vmem:[#allocation2 + $0x1] sm:$0xff]
      %v2869 = vld [vmem:[#allocation2 + $0x9] sm:$0xff]
      %v2870 = vld [vmem:[#allocation2 + $0x11] sm:$0xff]
      %v2871 = vld [vmem:[#allocation2 + $0x19] sm:$0xff]
      %v2872 = vld [vmem:[#allocation2 + $0x21] sm:$0xff]
      %v2873 = vld [vmem:[#allocation2 + $0x29] sm:$0xff]
      %v2874 = vld [vmem:[#allocation2 + $0x31] sm:$0xff]
      %v2875 = vld [vmem:[#allocation2 + $0x39] sm:$0xff]
      %v2876 = vld [vmem:[#allocation2 + $0x41] sm:$0xff]
      %v2877 = vld [vmem:[#allocation2 + $0x49] sm:$0xff]
      %v2878 = vld [vmem:[#allocation2 + $0x51] sm:$0xff]
      %v2879 = vld [vmem:[#allocation2 + $0x59] sm:$0xff]
      %v2880 = vld [vmem:[#allocation2 + $0x61] sm:$0xff]
      %v2881 = vld [vmem:[#allocation2 + $0x69] sm:$0xff]
      %v2882 = vld [vmem:[#allocation2 + $0x71] sm:$0xff]
      %v2883 = vld [vmem:[#allocation2 + $0x79] sm:$0xff]
      %v2884 = vld [vmem:[#allocation2 + $0x81] sm:$0xff]
      %v2885 = vld [vmem:[#allocation2 + $0x89] sm:$0xff]
      %v2886 = vld [vmem:[#allocation2 + $0x91] sm:$0xff]
      %v2887 = vld [vmem:[#allocation2 + $0x99] sm:$0xff]
      %v2888 = vld [vmem:[#allocation2 + $0xa1] sm:$0xff]
      %v2889 = vld [vmem:[#allocation2 + $0xa9] sm:$0xff]
      %v2890 = vld [vmem:[#allocation2 + $0xb1] sm:$0xff]
      %v2891 = vld [vmem:[#allocation2 + $0xb9] sm:$0xff]
      %v2892 = vld [vmem:[#allocation2 + $0xc1] sm:$0xff]
      %v2893 = vld [vmem:[#allocation2 + $0xc9] sm:$0xff]
      %v2894 = vld [vmem:[#allocation2 + $0xd1] sm:$0xff]
      %v2895 = vld [vmem:[#allocation2 + $0xd9] sm:$0xff]
      %v2896 = vld [vmem:[#allocation2 + $0xe1] sm:$0xff]
      %v2897 = vld [vmem:[#allocation2 + $0xe9] sm:$0xff]
      %v2898 = vld [vmem:[#allocation2 + $0xf1] sm:$0xff]
      %v2899 = vld [vmem:[#allocation2 + $0xf9] sm:$0xff]
      %v2900 = vld [vmem:[#allocation2 + $0x101] sm:$0xff]
      %v2901 = vld [vmem:[#allocation2 + $0x109] sm:$0xff]
      %v2902 = vld [vmem:[#allocation2 + $0x111] sm:$0xff]
      %v2903 = vld [vmem:[#allocation2 + $0x119] sm:$0xff]
      %v2904 = vpack.c.bf16 %v2869, %v2868
      %v2905 = vpack.c.bf16 %v2871, %v2870
      %v2906 = vpack.c.bf16 %v2873, %v2872
      %v2907 = vpack.c.bf16 %v2875, %v2874
      %v2908 = vpack.c.bf16 %v2877, %v2876
      %v2909 = vpack.c.bf16 %v2879, %v2878
      %v2910 = vpack.c.bf16 %v2881, %v2880
      %v2911 = vpack.c.bf16 %v2883, %v2882
      %v2912 = vpack.c.bf16 %v2885, %v2884
      %v2913 = vpack.c.bf16 %v2887, %v2886
      %v2914 = vpack.c.bf16 %v2889, %v2888
      %v2915 = vpack.c.bf16 %v2891, %v2890
      %v2916 = vpack.c.bf16 %v2893, %v2892
      %v2917 = vpack.c.bf16 %v2895, %v2894
      %v2918 = vpack.c.bf16 %v2897, %v2896
      %v2919 = vpack.c.bf16 %v2899, %v2898
      %v2920 = vpack.c.bf16 %v2901, %v2900
      %v2921 = vpack.c.bf16 %v2903, %v2902
      %s2922 = scalar_lea.vmem %s3, 4
      %v2923 = vld [vmem:[%s2922] sm:$0xf]
      %v2925 = vsel %vm2733, %v2904, 0
      %v2928 = vsel %vm2733, %v2905, 0
      %v2931 = vsel %vm2733, %v2906, 0
      %v2934 = vsel %vm2733, %v2907, 0
      %v2937 = vsel %vm2733, %v2908, 0
      %v2940 = vsel %vm2733, %v2909, 0
      %v2943 = vsel %vm2733, %v2910, 0
      %v2946 = vsel %vm2733, %v2911, 0
      %v2949 = vsel %vm2733, %v2912, 0
      %v2952 = vsel %vm2733, %v2913, 0
      %v2955 = vsel %vm2733, %v2914, 0
      %v2958 = vsel %vm2733, %v2915, 0
      %v2961 = vsel %vm2733, %v2916, 0
      %v2964 = vsel %vm2733, %v2917, 0
      %v2967 = vsel %vm2733, %v2918, 0
      %v2970 = vsel %vm2733, %v2919, 0
      %v2973 = vsel %vm2733, %v2920, 0
      %v2976 = vsel %vm2733, %v2921, 0
      %vm2978 = vcmask 1043456
      %v2980 = vsel %vm2978, %v2923, 0
      %2982 = vmatpush.bf16.msra.mxu0 0
      %2983 = vmatpush.bf16.msra.mxu0 0
      %2984 = vmatpush.bf16.msra.mxu0 0
      %2985 = vmatpush.bf16.msra.mxu0 0
      %2986 = vmatpush.bf16.msra.mxu0 0
      %2987 = vmatpush.bf16.msra.mxu0 0
      %2988 = vmatpush.bf16.msra.mxu0 0
      %2989 = vmatpush.bf16.msra.mxu0 %v2980
      %2990 = vmatmul.bf16.gmra.mxu0 %v2925
      %v2991 = vpop.f32.mrf.mxu0
      %v2992 = vadd.f32 0.0, %v2991
      %v2993 = vpop.f32.mrf.mxu0
      %v2994 = vadd.f32 0.0, %v2993
      %2995 = vmatmul.bf16.gmra.mxu0 %v2928
      %v2996 = vpop.f32.mrf.mxu0
      %v2997 = vadd.f32 0.0, %v2996
      %v2998 = vpop.f32.mrf.mxu0
      %v2999 = vadd.f32 0.0, %v2998
      %3000 = vmatmul.bf16.gmra.mxu0 %v2931
      %v3001 = vpop.f32.mrf.mxu0
      %v3002 = vadd.f32 0.0, %v3001
      %v3003 = vpop.f32.mrf.mxu0
      %v3004 = vadd.f32 0.0, %v3003
      %3005 = vmatmul.bf16.gmra.mxu0 %v2934
      %v3006 = vpop.f32.mrf.mxu0
      %v3007 = vadd.f32 0.0, %v3006
      %v3008 = vpop.f32.mrf.mxu0
      %v3009 = vadd.f32 0.0, %v3008
      %3010 = vmatmul.bf16.gmra.mxu0 %v2937
      %v3011 = vpop.f32.mrf.mxu0
      %v3012 = vadd.f32 0.0, %v3011
      %v3013 = vpop.f32.mrf.mxu0
      %v3014 = vadd.f32 0.0, %v3013
      %3015 = vmatmul.bf16.gmra.mxu0 %v2940
      %v3016 = vpop.f32.mrf.mxu0
      %v3017 = vadd.f32 0.0, %v3016
      %v3018 = vpop.f32.mrf.mxu0
      %v3019 = vadd.f32 0.0, %v3018
      %3020 = vmatmul.bf16.gmra.mxu0 %v2943
      %v3021 = vpop.f32.mrf.mxu0
      %v3022 = vadd.f32 0.0, %v3021
      %v3023 = vpop.f32.mrf.mxu0
      %v3024 = vadd.f32 0.0, %v3023
      %3025 = vmatmul.bf16.gmra.mxu0 %v2946
      %v3026 = vpop.f32.mrf.mxu0
      %v3027 = vadd.f32 0.0, %v3026
      %v3028 = vpop.f32.mrf.mxu0
      %v3029 = vadd.f32 0.0, %v3028
      %3030 = vmatmul.bf16.gmra.mxu0 %v2949
      %v3031 = vpop.f32.mrf.mxu0
      %v3032 = vadd.f32 0.0, %v3031
      %v3033 = vpop.f32.mrf.mxu0
      %v3034 = vadd.f32 0.0, %v3033
      %3035 = vmatmul.bf16.gmra.mxu0 %v2952
      %v3036 = vpop.f32.mrf.mxu0
      %v3037 = vadd.f32 0.0, %v3036
      %v3038 = vpop.f32.mrf.mxu0
      %v3039 = vadd.f32 0.0, %v3038
      %3040 = vmatmul.bf16.gmra.mxu0 %v2955
      %v3041 = vpop.f32.mrf.mxu0
      %v3042 = vadd.f32 0.0, %v3041
      %v3043 = vpop.f32.mrf.mxu0
      %v3044 = vadd.f32 0.0, %v3043
      %3045 = vmatmul.bf16.gmra.mxu0 %v2958
      %v3046 = vpop.f32.mrf.mxu0
      %v3047 = vadd.f32 0.0, %v3046
      %v3048 = vpop.f32.mrf.mxu0
      %v3049 = vadd.f32 0.0, %v3048
      %3050 = vmatmul.bf16.gmra.mxu0 %v2961
      %v3051 = vpop.f32.mrf.mxu0
      %v3052 = vadd.f32 0.0, %v3051
      %v3053 = vpop.f32.mrf.mxu0
      %v3054 = vadd.f32 0.0, %v3053
      %3055 = vmatmul.bf16.gmra.mxu0 %v2964
      %v3056 = vpop.f32.mrf.mxu0
      %v3057 = vadd.f32 0.0, %v3056
      %v3058 = vpop.f32.mrf.mxu0
      %v3059 = vadd.f32 0.0, %v3058
      %3060 = vmatmul.bf16.gmra.mxu0 %v2967
      %v3061 = vpop.f32.mrf.mxu0
      %v3062 = vadd.f32 0.0, %v3061
      %v3063 = vpop.f32.mrf.mxu0
      %v3064 = vadd.f32 0.0, %v3063
      %3065 = vmatmul.bf16.gmra.mxu0 %v2970
      %v3066 = vpop.f32.mrf.mxu0
      %v3067 = vadd.f32 0.0, %v3066
      %v3068 = vpop.f32.mrf.mxu0
      %v3069 = vadd.f32 0.0, %v3068
      %3070 = vmatmul.bf16.gmra.mxu0 %v2973
      %v3071 = vpop.f32.mrf.mxu0
      %v3072 = vadd.f32 0.0, %v3071
      %v3073 = vpop.f32.mrf.mxu0
      %v3074 = vadd.f32 0.0, %v3073
      %3075 = vmatmul.bf16.gmra.mxu0 %v2976
      %v3076 = vpop.f32.mrf.mxu0
      %v3077 = vadd.f32 0.0, %v3076
      %v3078 = vpop.f32.mrf.mxu0
      %v3079 = vadd.f32 0.0, %v3078
      %3080 = vdwg.mxu0
      %v3082 = vsel %vm2733, %v2849, 0
      %v3085 = vsel %vm2733, %v2850, 0
      %v3088 = vsel %vm2733, %v2851, 0
      %v3091 = vsel %vm2733, %v2852, 0
      %v3094 = vsel %vm2733, %v2853, 0
      %v3097 = vsel %vm2733, %v2854, 0
      %v3100 = vsel %vm2733, %v2855, 0
      %v3103 = vsel %vm2733, %v2856, 0
      %v3106 = vsel %vm2733, %v2857, 0
      %v3109 = vsel %vm2733, %v2858, 0
      %v3112 = vsel %vm2733, %v2859, 0
      %v3115 = vsel %vm2733, %v2860, 0
      %v3118 = vsel %vm2733, %v2861, 0
      %v3121 = vsel %vm2733, %v2862, 0
      %v3124 = vsel %vm2733, %v2863, 0
      %v3127 = vsel %vm2733, %v2864, 0
      %v3130 = vsel %vm2733, %v2865, 0
      %v3133 = vsel %vm2733, %v2866, 0
      %v3136 = vsel %vm2978, %v2867, 0
      %3138 = vmatpush.bf16.msra.mxu0 0
      %3139 = vmatpush.bf16.msra.mxu0 0
      %3140 = vmatpush.bf16.msra.mxu0 0
      %3141 = vmatpush.bf16.msra.mxu0 0
      %3142 = vmatpush.bf16.msra.mxu0 0
      %3143 = vmatpush.bf16.msra.mxu0 0
      %3144 = vmatpush.bf16.msra.mxu0 0
      %3145 = vmatpush.bf16.msra.mxu0 %v3136
      %3146 = vmatmul.bf16.gmra.mxu0 %v3082
      %v3147 = vpop.f32.mrf.mxu0
      %v3148 = vadd.f32 %v2992, %v3147
      %v3149 = vpop.f32.mrf.mxu0
      %v3150 = vadd.f32 %v2994, %v3149
      %3151 = vmatmul.bf16.gmra.mxu0 %v3085
      %v3152 = vpop.f32.mrf.mxu0
      %v3153 = vadd.f32 %v2997, %v3152
      %v3154 = vpop.f32.mrf.mxu0
      %v3155 = vadd.f32 %v2999, %v3154
      %3156 = vmatmul.bf16.gmra.mxu0 %v3088
      %v3157 = vpop.f32.mrf.mxu0
      %v3158 = vadd.f32 %v3002, %v3157
      %v3159 = vpop.f32.mrf.mxu0
      %v3160 = vadd.f32 %v3004, %v3159
      %3161 = vmatmul.bf16.gmra.mxu0 %v3091
      %v3162 = vpop.f32.mrf.mxu0
      %v3163 = vadd.f32 %v3007, %v3162
      %v3164 = vpop.f32.mrf.mxu0
      %v3165 = vadd.f32 %v3009, %v3164
      %3166 = vmatmul.bf16.gmra.mxu0 %v3094
      %v3167 = vpop.f32.mrf.mxu0
      %v3168 = vadd.f32 %v3012, %v3167
      %v3169 = vpop.f32.mrf.mxu0
      %v3170 = vadd.f32 %v3014, %v3169
      %3171 = vmatmul.bf16.gmra.mxu0 %v3097
      %v3172 = vpop.f32.mrf.mxu0
      %v3173 = vadd.f32 %v3017, %v3172
      %v3174 = vpop.f32.mrf.mxu0
      %v3175 = vadd.f32 %v3019, %v3174
      %3176 = vmatmul.bf16.gmra.mxu0 %v3100
      %v3177 = vpop.f32.mrf.mxu0
      %v3178 = vadd.f32 %v3022, %v3177
      %v3179 = vpop.f32.mrf.mxu0
      %v3180 = vadd.f32 %v3024, %v3179
      %3181 = vmatmul.bf16.gmra.mxu0 %v3103
      %v3182 = vpop.f32.mrf.mxu0
      %v3183 = vadd.f32 %v3027, %v3182
      %v3184 = vpop.f32.mrf.mxu0
      %v3185 = vadd.f32 %v3029, %v3184
      %3186 = vmatmul.bf16.gmra.mxu0 %v3106
      %v3187 = vpop.f32.mrf.mxu0
      %v3188 = vadd.f32 %v3032, %v3187
      %v3189 = vpop.f32.mrf.mxu0
      %v3190 = vadd.f32 %v3034, %v3189
      %3191 = vmatmul.bf16.gmra.mxu0 %v3109
      %v3192 = vpop.f32.mrf.mxu0
      %v3193 = vadd.f32 %v3037, %v3192
      %v3194 = vpop.f32.mrf.mxu0
      %v3195 = vadd.f32 %v3039, %v3194
      %3196 = vmatmul.bf16.gmra.mxu0 %v3112
      %v3197 = vpop.f32.mrf.mxu0
      %v3198 = vadd.f32 %v3042, %v3197
      %v3199 = vpop.f32.mrf.mxu0
      %v3200 = vadd.f32 %v3044, %v3199
      %3201 = vmatmul.bf16.gmra.mxu0 %v3115
      %v3202 = vpop.f32.mrf.mxu0
      %v3203 = vadd.f32 %v3047, %v3202
      %v3204 = vpop.f32.mrf.mxu0
      %v3205 = vadd.f32 %v3049, %v3204
      %3206 = vmatmul.bf16.gmra.mxu0 %v3118
      %v3207 = vpop.f32.mrf.mxu0
      %v3208 = vadd.f32 %v3052, %v3207
      %v3209 = vpop.f32.mrf.mxu0
      %v3210 = vadd.f32 %v3054, %v3209
      %3211 = vmatmul.bf16.gmra.mxu0 %v3121
      %v3212 = vpop.f32.mrf.mxu0
      %v3213 = vadd.f32 %v3057, %v3212
      %v3214 = vpop.f32.mrf.mxu0
      %v3215 = vadd.f32 %v3059, %v3214
      %3216 = vmatmul.bf16.gmra.mxu0 %v3124
      %v3217 = vpop.f32.mrf.mxu0
      %v3218 = vadd.f32 %v3062, %v3217
      %v3219 = vpop.f32.mrf.mxu0
      %v3220 = vadd.f32 %v3064, %v3219
      %3221 = vmatmul.bf16.gmra.mxu0 %v3127
      %v3222 = vpop.f32.mrf.mxu0
      %v3223 = vadd.f32 %v3067, %v3222
      %v3224 = vpop.f32.mrf.mxu0
      %v3225 = vadd.f32 %v3069, %v3224
      %3226 = vmatmul.bf16.gmra.mxu0 %v3130
      %v3227 = vpop.f32.mrf.mxu0
      %v3228 = vadd.f32 %v3072, %v3227
      %v3229 = vpop.f32.mrf.mxu0
      %v3230 = vadd.f32 %v3074, %v3229
      %3231 = vmatmul.bf16.gmra.mxu0 %v3133
      %v3232 = vpop.f32.mrf.mxu0
      %v3233 = vadd.f32 %v3077, %v3232
      %v3234 = vpop.f32.mrf.mxu0
      %v3235 = vadd.f32 %v3079, %v3234
      %3236 = vdwg.mxu0
      %v3237 = vld [vmem:[#allocation2 + $0x2] sm:$0xff]
      %v3238 = vld [vmem:[#allocation2 + $0xa] sm:$0xff]
      %v3239 = vld [vmem:[#allocation2 + $0x12] sm:$0xff]
      %v3240 = vld [vmem:[#allocation2 + $0x1a] sm:$0xff]
      %v3241 = vld [vmem:[#allocation2 + $0x22] sm:$0xff]
      %v3242 = vld [vmem:[#allocation2 + $0x2a] sm:$0xff]
      %v3243 = vld [vmem:[#allocation2 + $0x32] sm:$0xff]
      %v3244 = vld [vmem:[#allocation2 + $0x3a] sm:$0xff]
      %v3245 = vld [vmem:[#allocation2 + $0x42] sm:$0xff]
      %v3246 = vld [vmem:[#allocation2 + $0x4a] sm:$0xff]
      %v3247 = vld [vmem:[#allocation2 + $0x52] sm:$0xff]
      %v3248 = vld [vmem:[#allocation2 + $0x5a] sm:$0xff]
      %v3249 = vld [vmem:[#allocation2 + $0x62] sm:$0xff]
      %v3250 = vld [vmem:[#allocation2 + $0x6a] sm:$0xff]
      %v3251 = vld [vmem:[#allocation2 + $0x72] sm:$0xff]
      %v3252 = vld [vmem:[#allocation2 + $0x7a] sm:$0xff]
      %v3253 = vld [vmem:[#allocation2 + $0x82] sm:$0xff]
      %v3254 = vld [vmem:[#allocation2 + $0x8a] sm:$0xff]
      %v3255 = vld [vmem:[#allocation2 + $0x92] sm:$0xff]
      %v3256 = vld [vmem:[#allocation2 + $0x9a] sm:$0xff]
      %v3257 = vld [vmem:[#allocation2 + $0xa2] sm:$0xff]
      %v3258 = vld [vmem:[#allocation2 + $0xaa] sm:$0xff]
      %v3259 = vld [vmem:[#allocation2 + $0xb2] sm:$0xff]
      %v3260 = vld [vmem:[#allocation2 + $0xba] sm:$0xff]
      %v3261 = vld [vmem:[#allocation2 + $0xc2] sm:$0xff]
      %v3262 = vld [vmem:[#allocation2 + $0xca] sm:$0xff]
      %v3263 = vld [vmem:[#allocation2 + $0xd2] sm:$0xff]
      %v3264 = vld [vmem:[#allocation2 + $0xda] sm:$0xff]
      %v3265 = vld [vmem:[#allocation2 + $0xe2] sm:$0xff]
      %v3266 = vld [vmem:[#allocation2 + $0xea] sm:$0xff]
      %v3267 = vld [vmem:[#allocation2 + $0xf2] sm:$0xff]
      %v3268 = vld [vmem:[#allocation2 + $0xfa] sm:$0xff]
      %v3269 = vld [vmem:[#allocation2 + $0x102] sm:$0xff]
      %v3270 = vld [vmem:[#allocation2 + $0x10a] sm:$0xff]
      %v3271 = vld [vmem:[#allocation2 + $0x112] sm:$0xff]
      %v3272 = vld [vmem:[#allocation2 + $0x11a] sm:$0xff]
      %v3273 = vpack.c.bf16 %v3238, %v3237
      %v3274 = vpack.c.bf16 %v3240, %v3239
      %v3275 = vpack.c.bf16 %v3242, %v3241
      %v3276 = vpack.c.bf16 %v3244, %v3243
      %v3277 = vpack.c.bf16 %v3246, %v3245
      %v3278 = vpack.c.bf16 %v3248, %v3247
      %v3279 = vpack.c.bf16 %v3250, %v3249
      %v3280 = vpack.c.bf16 %v3252, %v3251
      %v3281 = vpack.c.bf16 %v3254, %v3253
      %v3282 = vpack.c.bf16 %v3256, %v3255
      %v3283 = vpack.c.bf16 %v3258, %v3257
      %v3284 = vpack.c.bf16 %v3260, %v3259
      %v3285 = vpack.c.bf16 %v3262, %v3261
      %v3286 = vpack.c.bf16 %v3264, %v3263
      %v3287 = vpack.c.bf16 %v3266, %v3265
      %v3288 = vpack.c.bf16 %v3268, %v3267
      %v3289 = vpack.c.bf16 %v3270, %v3269
      %v3290 = vpack.c.bf16 %v3272, %v3271
      %s3291 = scalar_lea.vmem %s3, 8
      %v3292 = vld [vmem:[%s3291] sm:$0xf]
      %v3294 = vsel %vm2733, %v3273, 0
      %v3297 = vsel %vm2733, %v3274, 0
      %v3300 = vsel %vm2733, %v3275, 0
      %v3303 = vsel %vm2733, %v3276, 0
      %v3306 = vsel %vm2733, %v3277, 0
      %v3309 = vsel %vm2733, %v3278, 0
      %v3312 = vsel %vm2733, %v3279, 0
      %v3315 = vsel %vm2733, %v3280, 0
      %v3318 = vsel %vm2733, %v3281, 0
      %v3321 = vsel %vm2733, %v3282, 0
      %v3324 = vsel %vm2733, %v3283, 0
      %v3327 = vsel %vm2733, %v3284, 0
      %v3330 = vsel %vm2733, %v3285, 0
      %v3333 = vsel %vm2733, %v3286, 0
      %v3336 = vsel %vm2733, %v3287, 0
      %v3339 = vsel %vm2733, %v3288, 0
      %v3342 = vsel %vm2733, %v3289, 0
      %v3345 = vsel %vm2733, %v3290, 0
      %v3348 = vsel %vm2978, %v3292, 0
      %3350 = vmatpush.bf16.msra.mxu0 0
      %3351 = vmatpush.bf16.msra.mxu0 0
      %3352 = vmatpush.bf16.msra.mxu0 0
      %3353 = vmatpush.bf16.msra.mxu0 0
      %3354 = vmatpush.bf16.msra.mxu0 0
      %3355 = vmatpush.bf16.msra.mxu0 0
      %3356 = vmatpush.bf16.msra.mxu0 0
      %3357 = vmatpush.bf16.msra.mxu0 %v3348
      %3358 = vmatmul.bf16.gmra.mxu0 %v3294
      %v3359 = vpop.f32.mrf.mxu0
      %v3360 = vadd.f32 0.0, %v3359
      %v3361 = vpop.f32.mrf.mxu0
      %v3362 = vadd.f32 0.0, %v3361
      %3363 = vmatmul.bf16.gmra.mxu0 %v3297
      %v3364 = vpop.f32.mrf.mxu0
      %v3365 = vadd.f32 0.0, %v3364
      %v3366 = vpop.f32.mrf.mxu0
      %v3367 = vadd.f32 0.0, %v3366
      %3368 = vmatmul.bf16.gmra.mxu0 %v3300
      %v3369 = vpop.f32.mrf.mxu0
      %v3370 = vadd.f32 0.0, %v3369
      %v3371 = vpop.f32.mrf.mxu0
      %v3372 = vadd.f32 0.0, %v3371
      %3373 = vmatmul.bf16.gmra.mxu0 %v3303
      %v3374 = vpop.f32.mrf.mxu0
      %v3375 = vadd.f32 0.0, %v3374
      %v3376 = vpop.f32.mrf.mxu0
      %v3377 = vadd.f32 0.0, %v3376
      %3378 = vmatmul.bf16.gmra.mxu0 %v3306
      %v3379 = vpop.f32.mrf.mxu0
      %v3380 = vadd.f32 0.0, %v3379
      %v3381 = vpop.f32.mrf.mxu0
      %v3382 = vadd.f32 0.0, %v3381
      %3383 = vmatmul.bf16.gmra.mxu0 %v3309
      %v3384 = vpop.f32.mrf.mxu0
      %v3385 = vadd.f32 0.0, %v3384
      %v3386 = vpop.f32.mrf.mxu0
      %v3387 = vadd.f32 0.0, %v3386
      %3388 = vmatmul.bf16.gmra.mxu0 %v3312
      %v3389 = vpop.f32.mrf.mxu0
      %v3390 = vadd.f32 0.0, %v3389
      %v3391 = vpop.f32.mrf.mxu0
      %v3392 = vadd.f32 0.0, %v3391
      %3393 = vmatmul.bf16.gmra.mxu0 %v3315
      %v3394 = vpop.f32.mrf.mxu0
      %v3395 = vadd.f32 0.0, %v3394
      %v3396 = vpop.f32.mrf.mxu0
      %v3397 = vadd.f32 0.0, %v3396
      %3398 = vmatmul.bf16.gmra.mxu0 %v3318
      %v3399 = vpop.f32.mrf.mxu0
      %v3400 = vadd.f32 0.0, %v3399
      %v3401 = vpop.f32.mrf.mxu0
      %v3402 = vadd.f32 0.0, %v3401
      %3403 = vmatmul.bf16.gmra.mxu0 %v3321
      %v3404 = vpop.f32.mrf.mxu0
      %v3405 = vadd.f32 0.0, %v3404
      %v3406 = vpop.f32.mrf.mxu0
      %v3407 = vadd.f32 0.0, %v3406
      %3408 = vmatmul.bf16.gmra.mxu0 %v3324
      %v3409 = vpop.f32.mrf.mxu0
      %v3410 = vadd.f32 0.0, %v3409
      %v3411 = vpop.f32.mrf.mxu0
      %v3412 = vadd.f32 0.0, %v3411
      %3413 = vmatmul.bf16.gmra.mxu0 %v3327
      %v3414 = vpop.f32.mrf.mxu0
      %v3415 = vadd.f32 0.0, %v3414
      %v3416 = vpop.f32.mrf.mxu0
      %v3417 = vadd.f32 0.0, %v3416
      %3418 = vmatmul.bf16.gmra.mxu0 %v3330
      %v3419 = vpop.f32.mrf.mxu0
      %v3420 = vadd.f32 0.0, %v3419
      %v3421 = vpop.f32.mrf.mxu0
      %v3422 = vadd.f32 0.0, %v3421
      %3423 = vmatmul.bf16.gmra.mxu0 %v3333
      %v3424 = vpop.f32.mrf.mxu0
      %v3425 = vadd.f32 0.0, %v3424
      %v3426 = vpop.f32.mrf.mxu0
      %v3427 = vadd.f32 0.0, %v3426
      %3428 = vmatmul.bf16.gmra.mxu0 %v3336
      %v3429 = vpop.f32.mrf.mxu0
      %v3430 = vadd.f32 0.0, %v3429
      %v3431 = vpop.f32.mrf.mxu0
      %v3432 = vadd.f32 0.0, %v3431
      %3433 = vmatmul.bf16.gmra.mxu0 %v3339
      %v3434 = vpop.f32.mrf.mxu0
      %v3435 = vadd.f32 0.0, %v3434
      %v3436 = vpop.f32.mrf.mxu0
      %v3437 = vadd.f32 0.0, %v3436
      %3438 = vmatmul.bf16.gmra.mxu0 %v3342
      %v3439 = vpop.f32.mrf.mxu0
      %v3440 = vadd.f32 0.0, %v3439
      %v3441 = vpop.f32.mrf.mxu0
      %v3442 = vadd.f32 0.0, %v3441
      %3443 = vmatmul.bf16.gmra.mxu0 %v3345
      %v3444 = vpop.f32.mrf.mxu0
      %v3445 = vadd.f32 0.0, %v3444
      %v3446 = vpop.f32.mrf.mxu0
      %v3447 = vadd.f32 0.0, %v3446
      %3448 = vdwg.mxu0
      %v3449 = vadd.f32 %v3148, %v3360
      %v3450 = vadd.f32 %v3150, %v3362
      %v3451 = vadd.f32 %v3153, %v3365
      %v3452 = vadd.f32 %v3155, %v3367
      %v3453 = vadd.f32 %v3158, %v3370
      %v3454 = vadd.f32 %v3160, %v3372
      %v3455 = vadd.f32 %v3163, %v3375
      %v3456 = vadd.f32 %v3165, %v3377
      %v3457 = vadd.f32 %v3168, %v3380
      %v3458 = vadd.f32 %v3170, %v3382
      %v3459 = vadd.f32 %v3173, %v3385
      %v3460 = vadd.f32 %v3175, %v3387
      %v3461 = vadd.f32 %v3178, %v3390
      %v3462 = vadd.f32 %v3180, %v3392
      %v3463 = vadd.f32 %v3183, %v3395
      %v3464 = vadd.f32 %v3185, %v3397
      %v3465 = vadd.f32 %v3188, %v3400
      %v3466 = vadd.f32 %v3190, %v3402
      %v3467 = vadd.f32 %v3193, %v3405
      %v3468 = vadd.f32 %v3195, %v3407
      %v3469 = vadd.f32 %v3198, %v3410
      %v3470 = vadd.f32 %v3200, %v3412
      %v3471 = vadd.f32 %v3203, %v3415
      %v3472 = vadd.f32 %v3205, %v3417
      %v3473 = vadd.f32 %v3208, %v3420
      %v3474 = vadd.f32 %v3210, %v3422
      %v3475 = vadd.f32 %v3213, %v3425
      %v3476 = vadd.f32 %v3215, %v3427
      %v3477 = vadd.f32 %v3218, %v3430
      %v3478 = vadd.f32 %v3220, %v3432
      %v3479 = vadd.f32 %v3223, %v3435
      %v3480 = vadd.f32 %v3225, %v3437
      %v3481 = vadd.f32 %v3228, %v3440
      %v3482 = vadd.f32 %v3230, %v3442
      %v3483 = vadd.f32 %v3233, %v3445
      %v3484 = vadd.f32 %v3235, %v3447
      %v3485 = vld [vmem:[#allocation2 + $0x12] sm:$0xff]
      %v3486 = vld [vmem:[#allocation2 + $0x1a] sm:$0xff]
      %v3487 = vld [vmem:[#allocation2 + $0x22] sm:$0xff]
      %v3488 = vld [vmem:[#allocation2 + $0x2a] sm:$0xff]
      %v3489 = vld [vmem:[#allocation2 + $0x32] sm:$0xff]
      %v3490 = vld [vmem:[#allocation2 + $0x3a] sm:$0xff]
      %v3491 = vld [vmem:[#allocation2 + $0x42] sm:$0xff]
      %v3492 = vld [vmem:[#allocation2 + $0x4a] sm:$0xff]
      %v3493 = vld [vmem:[#allocation2 + $0x52] sm:$0xff]
      %v3494 = vld [vmem:[#allocation2 + $0x5a] sm:$0xff]
      %v3495 = vld [vmem:[#allocation2 + $0x62] sm:$0xff]
      %v3496 = vld [vmem:[#allocation2 + $0x6a] sm:$0xff]
      %v3497 = vld [vmem:[#allocation2 + $0x72] sm:$0xff]
      %v3498 = vld [vmem:[#allocation2 + $0x7a] sm:$0xff]
      %v3499 = vld [vmem:[#allocation2 + $0x82] sm:$0xff]
      %v3500 = vld [vmem:[#allocation2 + $0x8a] sm:$0xff]
      %v3501 = vld [vmem:[#allocation2 + $0x92] sm:$0xff]
      %v3502 = vld [vmem:[#allocation2 + $0x9a] sm:$0xff]
      %v3503 = vld [vmem:[#allocation2 + $0xa2] sm:$0xff]
      %v3504 = vld [vmem:[#allocation2 + $0xaa] sm:$0xff]
      %v3505 = vld [vmem:[#allocation2 + $0xb2] sm:$0xff]
      %v3506 = vld [vmem:[#allocation2 + $0xba] sm:$0xff]
      %v3507 = vld [vmem:[#allocation2 + $0xc2] sm:$0xff]
      %v3508 = vld [vmem:[#allocation2 + $0xca] sm:$0xff]
      %v3509 = vld [vmem:[#allocation2 + $0xd2] sm:$0xff]
      %v3510 = vld [vmem:[#allocation2 + $0xda] sm:$0xff]
      %v3511 = vld [vmem:[#allocation2 + $0xe2] sm:$0xff]
      %v3512 = vld [vmem:[#allocation2 + $0xea] sm:$0xff]
      %v3513 = vld [vmem:[#allocation2 + $0xf2] sm:$0xff]
      %v3514 = vld [vmem:[#allocation2 + $0xfa] sm:$0xff]
      %v3515 = vld [vmem:[#allocation2 + $0x102] sm:$0xff]
      %v3516 = vld [vmem:[#allocation2 + $0x10a] sm:$0xff]
      %v3517 = vld [vmem:[#allocation2 + $0x112] sm:$0xff]
      %v3518 = vld [vmem:[#allocation2 + $0x11a] sm:$0xff]
      %v3519 = vld [vmem:[#allocation2 + $0x122] sm:$0xff]
      %v3520 = vld [vmem:[#allocation2 + $0x12a] sm:$0xff]
      %v3521 = vpack.c.bf16 %v3486, %v3485
      %v3522 = vpack.c.bf16 %v3488, %v3487
      %v3523 = vpack.c.bf16 %v3490, %v3489
      %v3524 = vpack.c.bf16 %v3492, %v3491
      %v3525 = vpack.c.bf16 %v3494, %v3493
      %v3526 = vpack.c.bf16 %v3496, %v3495
      %v3527 = vpack.c.bf16 %v3498, %v3497
      %v3528 = vpack.c.bf16 %v3500, %v3499
      %v3529 = vpack.c.bf16 %v3502, %v3501
      %v3530 = vpack.c.bf16 %v3504, %v3503
      %v3531 = vpack.c.bf16 %v3506, %v3505
      %v3532 = vpack.c.bf16 %v3508, %v3507
      %v3533 = vpack.c.bf16 %v3510, %v3509
      %v3534 = vpack.c.bf16 %v3512, %v3511
      %v3535 = vpack.c.bf16 %v3514, %v3513
      %v3536 = vpack.c.bf16 %v3516, %v3515
      %v3537 = vpack.c.bf16 %v3518, %v3517
      %v3538 = vpack.c.bf16 %v3520, %v3519
      %s3539 = scalar_lea.vmem %s3, 12
      %v3540 = vld [vmem:[%s3539] sm:$0xf]
      %v3542 = vsel %vm2733, %v3521, 0
      %v3545 = vsel %vm2733, %v3522, 0
      %v3548 = vsel %vm2733, %v3523, 0
      %v3551 = vsel %vm2733, %v3524, 0
      %v3554 = vsel %vm2733, %v3525, 0
      %v3557 = vsel %vm2733, %v3526, 0
      %v3560 = vsel %vm2733, %v3527, 0
      %v3563 = vsel %vm2733, %v3528, 0
      %v3566 = vsel %vm2733, %v3529, 0
      %v3569 = vsel %vm2733, %v3530, 0
      %v3572 = vsel %vm2733, %v3531, 0
      %v3575 = vsel %vm2733, %v3532, 0
      %v3578 = vsel %vm2733, %v3533, 0
      %v3581 = vsel %vm2733, %v3534, 0
      %v3584 = vsel %vm2733, %v3535, 0
      %v3587 = vsel %vm2733, %v3536, 0
      %v3590 = vsel %vm2733, %v3537, 0
      %v3593 = vsel %vm2733, %v3538, 0
      %v3596 = vsel %vm2978, %v3540, 0
      %3598 = vmatpush.bf16.msra.mxu0 0
      %3599 = vmatpush.bf16.msra.mxu0 0
      %3600 = vmatpush.bf16.msra.mxu0 0
      %3601 = vmatpush.bf16.msra.mxu0 0
      %3602 = vmatpush.bf16.msra.mxu0 0
      %3603 = vmatpush.bf16.msra.mxu0 0
      %3604 = vmatpush.bf16.msra.mxu0 0
      %3605 = vmatpush.bf16.msra.mxu0 %v3596
      %3606 = vmatmul.bf16.gmra.mxu0 %v3542
      %v3607 = vpop.f32.mrf.mxu0
      %v3608 = vadd.f32 0.0, %v3607
      %v3609 = vpop.f32.mrf.mxu0
      %v3610 = vadd.f32 0.0, %v3609
      %3611 = vmatmul.bf16.gmra.mxu0 %v3545
      %v3612 = vpop.f32.mrf.mxu0
      %v3613 = vadd.f32 0.0, %v3612
      %v3614 = vpop.f32.mrf.mxu0
      %v3615 = vadd.f32 0.0, %v3614
      %3616 = vmatmul.bf16.gmra.mxu0 %v3548
      %v3617 = vpop.f32.mrf.mxu0
      %v3618 = vadd.f32 0.0, %v3617
      %v3619 = vpop.f32.mrf.mxu0
      %v3620 = vadd.f32 0.0, %v3619
      %3621 = vmatmul.bf16.gmra.mxu0 %v3551
      %v3622 = vpop.f32.mrf.mxu0
      %v3623 = vadd.f32 0.0, %v3622
      %v3624 = vpop.f32.mrf.mxu0
      %v3625 = vadd.f32 0.0, %v3624
      %3626 = vmatmul.bf16.gmra.mxu0 %v3554
      %v3627 = vpop.f32.mrf.mxu0
      %v3628 = vadd.f32 0.0, %v3627
      %v3629 = vpop.f32.mrf.mxu0
      %v3630 = vadd.f32 0.0, %v3629
      %3631 = vmatmul.bf16.gmra.mxu0 %v3557
      %v3632 = vpop.f32.mrf.mxu0
      %v3633 = vadd.f32 0.0, %v3632
      %v3634 = vpop.f32.mrf.mxu0
      %v3635 = vadd.f32 0.0, %v3634
      %3636 = vmatmul.bf16.gmra.mxu0 %v3560
      %v3637 = vpop.f32.mrf.mxu0
      %v3638 = vadd.f32 0.0, %v3637
      %v3639 = vpop.f32.mrf.mxu0
      %v3640 = vadd.f32 0.0, %v3639
      %3641 = vmatmul.bf16.gmra.mxu0 %v3563
      %v3642 = vpop.f32.mrf.mxu0
      %v3643 = vadd.f32 0.0, %v3642
      %v3644 = vpop.f32.mrf.mxu0
      %v3645 = vadd.f32 0.0, %v3644
      %3646 = vmatmul.bf16.gmra.mxu0 %v3566
      %v3647 = vpop.f32.mrf.mxu0
      %v3648 = vadd.f32 0.0, %v3647
      %v3649 = vpop.f32.mrf.mxu0
      %v3650 = vadd.f32 0.0, %v3649
      %3651 = vmatmul.bf16.gmra.mxu0 %v3569
      %v3652 = vpop.f32.mrf.mxu0
      %v3653 = vadd.f32 0.0, %v3652
      %v3654 = vpop.f32.mrf.mxu0
      %v3655 = vadd.f32 0.0, %v3654
      %3656 = vmatmul.bf16.gmra.mxu0 %v3572
      %v3657 = vpop.f32.mrf.mxu0
      %v3658 = vadd.f32 0.0, %v3657
      %v3659 = vpop.f32.mrf.mxu0
      %v3660 = vadd.f32 0.0, %v3659
      %3661 = vmatmul.bf16.gmra.mxu0 %v3575
      %v3662 = vpop.f32.mrf.mxu0
      %v3663 = vadd.f32 0.0, %v3662
      %v3664 = vpop.f32.mrf.mxu0
      %v3665 = vadd.f32 0.0, %v3664
      %3666 = vmatmul.bf16.gmra.mxu0 %v3578
      %v3667 = vpop.f32.mrf.mxu0
      %v3668 = vadd.f32 0.0, %v3667
      %v3669 = vpop.f32.mrf.mxu0
      %v3670 = vadd.f32 0.0, %v3669
      %3671 = vmatmul.bf16.gmra.mxu0 %v3581
      %v3672 = vpop.f32.mrf.mxu0
      %v3673 = vadd.f32 0.0, %v3672
      %v3674 = vpop.f32.mrf.mxu0
      %v3675 = vadd.f32 0.0, %v3674
      %3676 = vmatmul.bf16.gmra.mxu0 %v3584
      %v3677 = vpop.f32.mrf.mxu0
      %v3678 = vadd.f32 0.0, %v3677
      %v3679 = vpop.f32.mrf.mxu0
      %v3680 = vadd.f32 0.0, %v3679
      %3681 = vmatmul.bf16.gmra.mxu0 %v3587
      %v3682 = vpop.f32.mrf.mxu0
      %v3683 = vadd.f32 0.0, %v3682
      %v3684 = vpop.f32.mrf.mxu0
      %v3685 = vadd.f32 0.0, %v3684
      %3686 = vmatmul.bf16.gmra.mxu0 %v3590
      %v3687 = vpop.f32.mrf.mxu0
      %v3688 = vadd.f32 0.0, %v3687
      %v3689 = vpop.f32.mrf.mxu0
      %v3690 = vadd.f32 0.0, %v3689
      %3691 = vmatmul.bf16.gmra.mxu0 %v3593
      %v3692 = vpop.f32.mrf.mxu0
      %v3693 = vadd.f32 0.0, %v3692
      %v3694 = vpop.f32.mrf.mxu0
      %v3695 = vadd.f32 0.0, %v3694
      %3696 = vdwg.mxu0
      %v3697 = vadd.f32 %v3449, %v3608
      %v3698 = vadd.f32 %v3450, %v3610
      %v3699 = vadd.f32 %v3451, %v3613
      %v3700 = vadd.f32 %v3452, %v3615
      %v3701 = vadd.f32 %v3453, %v3618
      %v3702 = vadd.f32 %v3454, %v3620
      %v3703 = vadd.f32 %v3455, %v3623
      %v3704 = vadd.f32 %v3456, %v3625
      %v3705 = vadd.f32 %v3457, %v3628
      %v3706 = vadd.f32 %v3458, %v3630
      %v3707 = vadd.f32 %v3459, %v3633
      %v3708 = vadd.f32 %v3460, %v3635
      %v3709 = vadd.f32 %v3461, %v3638
      %v3710 = vadd.f32 %v3462, %v3640
      %v3711 = vadd.f32 %v3463, %v3643
      %v3712 = vadd.f32 %v3464, %v3645
      %v3713 = vadd.f32 %v3465, %v3648
      %v3714 = vadd.f32 %v3466, %v3650
      %v3715 = vadd.f32 %v3467, %v3653
      %v3716 = vadd.f32 %v3468, %v3655
      %v3717 = vadd.f32 %v3469, %v3658
      %v3718 = vadd.f32 %v3470, %v3660
      %v3719 = vadd.f32 %v3471, %v3663
      %v3720 = vadd.f32 %v3472, %v3665
      %v3721 = vadd.f32 %v3473, %v3668
      %v3722 = vadd.f32 %v3474, %v3670
      %v3723 = vadd.f32 %v3475, %v3673
      %v3724 = vadd.f32 %v3476, %v3675
      %v3725 = vadd.f32 %v3477, %v3678
      %v3726 = vadd.f32 %v3478, %v3680
      %v3727 = vadd.f32 %v3479, %v3683
      %v3728 = vadd.f32 %v3480, %v3685
      %v3729 = vadd.f32 %v3481, %v3688
      %v3730 = vadd.f32 %v3482, %v3690
      %v3731 = vadd.f32 %v3483, %v3693
      %v3732 = vadd.f32 %v3484, %v3695
      %v3733 = vld [vmem:[#allocation2 + $0x13] sm:$0xff]
      %v3734 = vld [vmem:[#allocation2 + $0x1b] sm:$0xff]
      %v3735 = vld [vmem:[#allocation2 + $0x23] sm:$0xff]
      %v3736 = vld [vmem:[#allocation2 + $0x2b] sm:$0xff]
      %v3737 = vld [vmem:[#allocation2 + $0x33] sm:$0xff]
      %v3738 = vld [vmem:[#allocation2 + $0x3b] sm:$0xff]
      %v3739 = vld [vmem:[#allocation2 + $0x43] sm:$0xff]
      %v3740 = vld [vmem:[#allocation2 + $0x4b] sm:$0xff]
      %v3741 = vld [vmem:[#allocation2 + $0x53] sm:$0xff]
      %v3742 = vld [vmem:[#allocation2 + $0x5b] sm:$0xff]
      %v3743 = vld [vmem:[#allocation2 + $0x63] sm:$0xff]
      %v3744 = vld [vmem:[#allocation2 + $0x6b] sm:$0xff]
      %v3745 = vld [vmem:[#allocation2 + $0x73] sm:$0xff]
      %v3746 = vld [vmem:[#allocation2 + $0x7b] sm:$0xff]
      %v3747 = vld [vmem:[#allocation2 + $0x83] sm:$0xff]
      %v3748 = vld [vmem:[#allocation2 + $0x8b] sm:$0xff]
      %v3749 = vld [vmem:[#allocation2 + $0x93] sm:$0xff]
      %v3750 = vld [vmem:[#allocation2 + $0x9b] sm:$0xff]
      %v3751 = vld [vmem:[#allocation2 + $0xa3] sm:$0xff]
      %v3752 = vld [vmem:[#allocation2 + $0xab] sm:$0xff]
      %v3753 = vld [vmem:[#allocation2 + $0xb3] sm:$0xff]
      %v3754 = vld [vmem:[#allocation2 + $0xbb] sm:$0xff]
      %v3755 = vld [vmem:[#allocation2 + $0xc3] sm:$0xff]
      %v3756 = vld [vmem:[#allocation2 + $0xcb] sm:$0xff]
      %v3757 = vld [vmem:[#allocation2 + $0xd3] sm:$0xff]
      %v3758 = vld [vmem:[#allocation2 + $0xdb] sm:$0xff]
      %v3759 = vld [vmem:[#allocation2 + $0xe3] sm:$0xff]
      %v3760 = vld [vmem:[#allocation2 + $0xeb] sm:$0xff]
      %v3761 = vld [vmem:[#allocation2 + $0xf3] sm:$0xff]
      %v3762 = vld [vmem:[#allocation2 + $0xfb] sm:$0xff]
      %v3763 = vld [vmem:[#allocation2 + $0x103] sm:$0xff]
      %v3764 = vld [vmem:[#allocation2 + $0x10b] sm:$0xff]
      %v3765 = vld [vmem:[#allocation2 + $0x113] sm:$0xff]
      %v3766 = vld [vmem:[#allocation2 + $0x11b] sm:$0xff]
      %v3767 = vld [vmem:[#allocation2 + $0x123] sm:$0xff]
      %v3768 = vld [vmem:[#allocation2 + $0x12b] sm:$0xff]
      %v3769 = vpack.c.bf16 %v3734, %v3733
      %v3770 = vpack.c.bf16 %v3736, %v3735
      %v3771 = vpack.c.bf16 %v3738, %v3737
      %v3772 = vpack.c.bf16 %v3740, %v3739
      %v3773 = vpack.c.bf16 %v3742, %v3741
      %v3774 = vpack.c.bf16 %v3744, %v3743
      %v3775 = vpack.c.bf16 %v3746, %v3745
      %v3776 = vpack.c.bf16 %v3748, %v3747
      %v3777 = vpack.c.bf16 %v3750, %v3749
      %v3778 = vpack.c.bf16 %v3752, %v3751
      %v3779 = vpack.c.bf16 %v3754, %v3753
      %v3780 = vpack.c.bf16 %v3756, %v3755
      %v3781 = vpack.c.bf16 %v3758, %v3757
      %v3782 = vpack.c.bf16 %v3760, %v3759
      %v3783 = vpack.c.bf16 %v3762, %v3761
      %v3784 = vpack.c.bf16 %v3764, %v3763
      %v3785 = vpack.c.bf16 %v3766, %v3765
      %v3786 = vpack.c.bf16 %v3768, %v3767
      %s3787 = scalar_lea.vmem %s3, 16
      %v3788 = vld [vmem:[%s3787] sm:$0xf]
      %v3790 = vsel %vm2733, %v3769, 0
      %v3793 = vsel %vm2733, %v3770, 0
      %v3796 = vsel %vm2733, %v3771, 0
      %v3799 = vsel %vm2733, %v3772, 0
      %v3802 = vsel %vm2733, %v3773, 0
      %v3805 = vsel %vm2733, %v3774, 0
      %v3808 = vsel %vm2733, %v3775, 0
      %v3811 = vsel %vm2733, %v3776, 0
      %v3814 = vsel %vm2733, %v3777, 0
      %v3817 = vsel %vm2733, %v3778, 0
      %v3820 = vsel %vm2733, %v3779, 0
      %v3823 = vsel %vm2733, %v3780, 0
      %v3826 = vsel %vm2733, %v3781, 0
      %v3829 = vsel %vm2733, %v3782, 0
      %v3832 = vsel %vm2733, %v3783, 0
      %v3835 = vsel %vm2733, %v3784, 0
      %v3838 = vsel %vm2733, %v3785, 0
      %v3841 = vsel %vm2733, %v3786, 0
      %v3844 = vsel %vm2978, %v3788, 0
      %3846 = vmatpush.bf16.msra.mxu0 0
      %3847 = vmatpush.bf16.msra.mxu0 0
      %3848 = vmatpush.bf16.msra.mxu0 0
      %3849 = vmatpush.bf16.msra.mxu0 0
      %3850 = vmatpush.bf16.msra.mxu0 0
      %3851 = vmatpush.bf16.msra.mxu0 0
      %3852 = vmatpush.bf16.msra.mxu0 0
      %3853 = vmatpush.bf16.msra.mxu0 %v3844
      %3854 = vmatmul.bf16.gmra.mxu0 %v3790
      %v3855 = vpop.f32.mrf.mxu0
      %v3856 = vadd.f32 0.0, %v3855
      %v3857 = vpop.f32.mrf.mxu0
      %v3858 = vadd.f32 0.0, %v3857
      %3859 = vmatmul.bf16.gmra.mxu0 %v3793
      %v3860 = vpop.f32.mrf.mxu0
      %v3861 = vadd.f32 0.0, %v3860
      %v3862 = vpop.f32.mrf.mxu0
      %v3863 = vadd.f32 0.0, %v3862
      %3864 = vmatmul.bf16.gmra.mxu0 %v3796
      %v3865 = vpop.f32.mrf.mxu0
      %v3866 = vadd.f32 0.0, %v3865
      %v3867 = vpop.f32.mrf.mxu0
      %v3868 = vadd.f32 0.0, %v3867
      %3869 = vmatmul.bf16.gmra.mxu0 %v3799
      %v3870 = vpop.f32.mrf.mxu0
      %v3871 = vadd.f32 0.0, %v3870
      %v3872 = vpop.f32.mrf.mxu0
      %v3873 = vadd.f32 0.0, %v3872
      %3874 = vmatmul.bf16.gmra.mxu0 %v3802
      %v3875 = vpop.f32.mrf.mxu0
      %v3876 = vadd.f32 0.0, %v3875
      %v3877 = vpop.f32.mrf.mxu0
      %v3878 = vadd.f32 0.0, %v3877
      %3879 = vmatmul.bf16.gmra.mxu0 %v3805
      %v3880 = vpop.f32.mrf.mxu0
      %v3881 = vadd.f32 0.0, %v3880
      %v3882 = vpop.f32.mrf.mxu0
      %v3883 = vadd.f32 0.0, %v3882
      %3884 = vmatmul.bf16.gmra.mxu0 %v3808
      %v3885 = vpop.f32.mrf.mxu0
      %v3886 = vadd.f32 0.0, %v3885
      %v3887 = vpop.f32.mrf.mxu0
      %v3888 = vadd.f32 0.0, %v3887
      %3889 = vmatmul.bf16.gmra.mxu0 %v3811
      %v3890 = vpop.f32.mrf.mxu0
      %v3891 = vadd.f32 0.0, %v3890
      %v3892 = vpop.f32.mrf.mxu0
      %v3893 = vadd.f32 0.0, %v3892
      %3894 = vmatmul.bf16.gmra.mxu0 %v3814
      %v3895 = vpop.f32.mrf.mxu0
      %v3896 = vadd.f32 0.0, %v3895
      %v3897 = vpop.f32.mrf.mxu0
      %v3898 = vadd.f32 0.0, %v3897
      %3899 = vmatmul.bf16.gmra.mxu0 %v3817
      %v3900 = vpop.f32.mrf.mxu0
      %v3901 = vadd.f32 0.0, %v3900
      %v3902 = vpop.f32.mrf.mxu0
      %v3903 = vadd.f32 0.0, %v3902
      %3904 = vmatmul.bf16.gmra.mxu0 %v3820
      %v3905 = vpop.f32.mrf.mxu0
      %v3906 = vadd.f32 0.0, %v3905
      %v3907 = vpop.f32.mrf.mxu0
      %v3908 = vadd.f32 0.0, %v3907
      %3909 = vmatmul.bf16.gmra.mxu0 %v3823
      %v3910 = vpop.f32.mrf.mxu0
      %v3911 = vadd.f32 0.0, %v3910
      %v3912 = vpop.f32.mrf.mxu0
      %v3913 = vadd.f32 0.0, %v3912
      %3914 = vmatmul.bf16.gmra.mxu0 %v3826
      %v3915 = vpop.f32.mrf.mxu0
      %v3916 = vadd.f32 0.0, %v3915
      %v3917 = vpop.f32.mrf.mxu0
      %v3918 = vadd.f32 0.0, %v3917
      %3919 = vmatmul.bf16.gmra.mxu0 %v3829
      %v3920 = vpop.f32.mrf.mxu0
      %v3921 = vadd.f32 0.0, %v3920
      %v3922 = vpop.f32.mrf.mxu0
      %v3923 = vadd.f32 0.0, %v3922
      %3924 = vmatmul.bf16.gmra.mxu0 %v3832
      %v3925 = vpop.f32.mrf.mxu0
      %v3926 = vadd.f32 0.0, %v3925
      %v3927 = vpop.f32.mrf.mxu0
      %v3928 = vadd.f32 0.0, %v3927
      %3929 = vmatmul.bf16.gmra.mxu0 %v3835
      %v3930 = vpop.f32.mrf.mxu0
      %v3931 = vadd.f32 0.0, %v3930
      %v3932 = vpop.f32.mrf.mxu0
      %v3933 = vadd.f32 0.0, %v3932
      %3934 = vmatmul.bf16.gmra.mxu0 %v3838
      %v3935 = vpop.f32.mrf.mxu0
      %v3936 = vadd.f32 0.0, %v3935
      %v3937 = vpop.f32.mrf.mxu0
      %v3938 = vadd.f32 0.0, %v3937
      %3939 = vmatmul.bf16.gmra.mxu0 %v3841
      %v3940 = vpop.f32.mrf.mxu0
      %v3941 = vadd.f32 0.0, %v3940
      %v3942 = vpop.f32.mrf.mxu0
      %v3943 = vadd.f32 0.0, %v3942
      %3944 = vdwg.mxu0
      %v3945 = vadd.f32 %v3697, %v3856
      %v3946 = vadd.f32 %v3698, %v3858
      %v3947 = vadd.f32 %v3699, %v3861
      %v3948 = vadd.f32 %v3700, %v3863
      %v3949 = vadd.f32 %v3701, %v3866
      %v3950 = vadd.f32 %v3702, %v3868
      %v3951 = vadd.f32 %v3703, %v3871
      %v3952 = vadd.f32 %v3704, %v3873
      %v3953 = vadd.f32 %v3705, %v3876
      %v3954 = vadd.f32 %v3706, %v3878
      %v3955 = vadd.f32 %v3707, %v3881
      %v3956 = vadd.f32 %v3708, %v3883
      %v3957 = vadd.f32 %v3709, %v3886
      %v3958 = vadd.f32 %v3710, %v3888
      %v3959 = vadd.f32 %v3711, %v3891
      %v3960 = vadd.f32 %v3712, %v3893
      %v3961 = vadd.f32 %v3713, %v3896
      %v3962 = vadd.f32 %v3714, %v3898
      %v3963 = vadd.f32 %v3715, %v3901
      %v3964 = vadd.f32 %v3716, %v3903
      %v3965 = vadd.f32 %v3717, %v3906
      %v3966 = vadd.f32 %v3718, %v3908
      %v3967 = vadd.f32 %v3719, %v3911
      %v3968 = vadd.f32 %v3720, %v3913
      %v3969 = vadd.f32 %v3721, %v3916
      %v3970 = vadd.f32 %v3722, %v3918
      %v3971 = vadd.f32 %v3723, %v3921
      %v3972 = vadd.f32 %v3724, %v3923
      %v3973 = vadd.f32 %v3725, %v3926
      %v3974 = vadd.f32 %v3726, %v3928
      %v3975 = vadd.f32 %v3727, %v3931
      %v3976 = vadd.f32 %v3728, %v3933
      %v3977 = vadd.f32 %v3729, %v3936
      %v3978 = vadd.f32 %v3730, %v3938
      %v3979 = vadd.f32 %v3731, %v3941
      %v3980 = vadd.f32 %v3732, %v3943
      %v3981 = vld [vmem:[#allocation2 + $0x14] sm:$0xff]
      %v3982 = vld [vmem:[#allocation2 + $0x1c] sm:$0xff]
      %v3983 = vld [vmem:[#allocation2 + $0x24] sm:$0xff]
      %v3984 = vld [vmem:[#allocation2 + $0x2c] sm:$0xff]
      %v3985 = vld [vmem:[#allocation2 + $0x34] sm:$0xff]
      %v3986 = vld [vmem:[#allocation2 + $0x3c] sm:$0xff]
      %v3987 = vld [vmem:[#allocation2 + $0x44] sm:$0xff]
      %v3988 = vld [vmem:[#allocation2 + $0x4c] sm:$0xff]
      %v3989 = vld [vmem:[#allocation2 + $0x54] sm:$0xff]
      %v3990 = vld [vmem:[#allocation2 + $0x5c] sm:$0xff]
      %v3991 = vld [vmem:[#allocation2 + $0x64] sm:$0xff]
      %v3992 = vld [vmem:[#allocation2 + $0x6c] sm:$0xff]
      %v3993 = vld [vmem:[#allocation2 + $0x74] sm:$0xff]
      %v3994 = vld [vmem:[#allocation2 + $0x7c] sm:$0xff]
      %v3995 = vld [vmem:[#allocation2 + $0x84] sm:$0xff]
      %v3996 = vld [vmem:[#allocation2 + $0x8c] sm:$0xff]
      %v3997 = vld [vmem:[#allocation2 + $0x94] sm:$0xff]
      %v3998 = vld [vmem:[#allocation2 + $0x9c] sm:$0xff]
      %v3999 = vld [vmem:[#allocation2 + $0xa4] sm:$0xff]
      %v4000 = vld [vmem:[#allocation2 + $0xac] sm:$0xff]
      %v4001 = vld [vmem:[#allocation2 + $0xb4] sm:$0xff]
      %v4002 = vld [vmem:[#allocation2 + $0xbc] sm:$0xff]
      %v4003 = vld [vmem:[#allocation2 + $0xc4] sm:$0xff]
      %v4004 = vld [vmem:[#allocation2 + $0xcc] sm:$0xff]
      %v4005 = vld [vmem:[#allocation2 + $0xd4] sm:$0xff]
      %v4006 = vld [vmem:[#allocation2 + $0xdc] sm:$0xff]
      %v4007 = vld [vmem:[#allocation2 + $0xe4] sm:$0xff]
      %v4008 = vld [vmem:[#allocation2 + $0xec] sm:$0xff]
      %v4009 = vld [vmem:[#allocation2 + $0xf4] sm:$0xff]
      %v4010 = vld [vmem:[#allocation2 + $0xfc] sm:$0xff]
      %v4011 = vld [vmem:[#allocation2 + $0x104] sm:$0xff]
      %v4012 = vld [vmem:[#allocation2 + $0x10c] sm:$0xff]
      %v4013 = vld [vmem:[#allocation2 + $0x114] sm:$0xff]
      %v4014 = vld [vmem:[#allocation2 + $0x11c] sm:$0xff]
      %v4015 = vld [vmem:[#allocation2 + $0x124] sm:$0xff]
      %v4016 = vld [vmem:[#allocation2 + $0x12c] sm:$0xff]
      %v4017 = vpack.c.bf16 %v3982, %v3981
      %v4018 = vpack.c.bf16 %v3984, %v3983
      %v4019 = vpack.c.bf16 %v3986, %v3985
      %v4020 = vpack.c.bf16 %v3988, %v3987
      %v4021 = vpack.c.bf16 %v3990, %v3989
      %v4022 = vpack.c.bf16 %v3992, %v3991
      %v4023 = vpack.c.bf16 %v3994, %v3993
      %v4024 = vpack.c.bf16 %v3996, %v3995
      %v4025 = vpack.c.bf16 %v3998, %v3997
      %v4026 = vpack.c.bf16 %v4000, %v3999
      %v4027 = vpack.c.bf16 %v4002, %v4001
      %v4028 = vpack.c.bf16 %v4004, %v4003
      %v4029 = vpack.c.bf16 %v4006, %v4005
      %v4030 = vpack.c.bf16 %v4008, %v4007
      %v4031 = vpack.c.bf16 %v4010, %v4009
      %v4032 = vpack.c.bf16 %v4012, %v4011
      %v4033 = vpack.c.bf16 %v4014, %v4013
      %v4034 = vpack.c.bf16 %v4016, %v4015
      %s4035 = scalar_lea.vmem %s3, 20
      %v4036 = vld [vmem:[%s4035] sm:$0xf]
      %v4038 = vsel %vm2733, %v4017, 0
      %v4041 = vsel %vm2733, %v4018, 0
      %v4044 = vsel %vm2733, %v4019, 0
      %v4047 = vsel %vm2733, %v4020, 0
      %v4050 = vsel %vm2733, %v4021, 0
      %v4053 = vsel %vm2733, %v4022, 0
      %v4056 = vsel %vm2733, %v4023, 0
      %v4059 = vsel %vm2733, %v4024, 0
      %v4062 = vsel %vm2733, %v4025, 0
      %v4065 = vsel %vm2733, %v4026, 0
      %v4068 = vsel %vm2733, %v4027, 0
      %v4071 = vsel %vm2733, %v4028, 0
      %v4074 = vsel %vm2733, %v4029, 0
      %v4077 = vsel %vm2733, %v4030, 0
      %v4080 = vsel %vm2733, %v4031, 0
      %v4083 = vsel %vm2733, %v4032, 0
      %v4086 = vsel %vm2733, %v4033, 0
      %v4089 = vsel %vm2733, %v4034, 0
      %v4092 = vsel %vm2978, %v4036, 0
      %4094 = vmatpush.bf16.msra.mxu0 0
      %4095 = vmatpush.bf16.msra.mxu0 0
      %4096 = vmatpush.bf16.msra.mxu0 0
      %4097 = vmatpush.bf16.msra.mxu0 0
      %4098 = vmatpush.bf16.msra.mxu0 0
      %4099 = vmatpush.bf16.msra.mxu0 0
      %4100 = vmatpush.bf16.msra.mxu0 0
      %4101 = vmatpush.bf16.msra.mxu0 %v4092
      %4102 = vmatmul.bf16.gmra.mxu0 %v4038
      %v4103 = vpop.f32.mrf.mxu0
      %v4104 = vadd.f32 0.0, %v4103
      %v4105 = vpop.f32.mrf.mxu0
      %v4106 = vadd.f32 0.0, %v4105
      %4107 = vmatmul.bf16.gmra.mxu0 %v4041
      %v4108 = vpop.f32.mrf.mxu0
      %v4109 = vadd.f32 0.0, %v4108
      %v4110 = vpop.f32.mrf.mxu0
      %v4111 = vadd.f32 0.0, %v4110
      %4112 = vmatmul.bf16.gmra.mxu0 %v4044
      %v4113 = vpop.f32.mrf.mxu0
      %v4114 = vadd.f32 0.0, %v4113
      %v4115 = vpop.f32.mrf.mxu0
      %v4116 = vadd.f32 0.0, %v4115
      %4117 = vmatmul.bf16.gmra.mxu0 %v4047
      %v4118 = vpop.f32.mrf.mxu0
      %v4119 = vadd.f32 0.0, %v4118
      %v4120 = vpop.f32.mrf.mxu0
      %v4121 = vadd.f32 0.0, %v4120
      %4122 = vmatmul.bf16.gmra.mxu0 %v4050
      %v4123 = vpop.f32.mrf.mxu0
      %v4124 = vadd.f32 0.0, %v4123
      %v4125 = vpop.f32.mrf.mxu0
      %v4126 = vadd.f32 0.0, %v4125
      %4127 = vmatmul.bf16.gmra.mxu0 %v4053
      %v4128 = vpop.f32.mrf.mxu0
      %v4129 = vadd.f32 0.0, %v4128
      %v4130 = vpop.f32.mrf.mxu0
      %v4131 = vadd.f32 0.0, %v4130
      %4132 = vmatmul.bf16.gmra.mxu0 %v4056
      %v4133 = vpop.f32.mrf.mxu0
      %v4134 = vadd.f32 0.0, %v4133
      %v4135 = vpop.f32.mrf.mxu0
      %v4136 = vadd.f32 0.0, %v4135
      %4137 = vmatmul.bf16.gmra.mxu0 %v4059
      %v4138 = vpop.f32.mrf.mxu0
      %v4139 = vadd.f32 0.0, %v4138
      %v4140 = vpop.f32.mrf.mxu0
      %v4141 = vadd.f32 0.0, %v4140
      %4142 = vmatmul.bf16.gmra.mxu0 %v4062
      %v4143 = vpop.f32.mrf.mxu0
      %v4144 = vadd.f32 0.0, %v4143
      %v4145 = vpop.f32.mrf.mxu0
      %v4146 = vadd.f32 0.0, %v4145
      %4147 = vmatmul.bf16.gmra.mxu0 %v4065
      %v4148 = vpop.f32.mrf.mxu0
      %v4149 = vadd.f32 0.0, %v4148
      %v4150 = vpop.f32.mrf.mxu0
      %v4151 = vadd.f32 0.0, %v4150
      %4152 = vmatmul.bf16.gmra.mxu0 %v4068
      %v4153 = vpop.f32.mrf.mxu0
      %v4154 = vadd.f32 0.0, %v4153
      %v4155 = vpop.f32.mrf.mxu0
      %v4156 = vadd.f32 0.0, %v4155
      %4157 = vmatmul.bf16.gmra.mxu0 %v4071
      %v4158 = vpop.f32.mrf.mxu0
      %v4159 = vadd.f32 0.0, %v4158
      %v4160 = vpop.f32.mrf.mxu0
      %v4161 = vadd.f32 0.0, %v4160
      %4162 = vmatmul.bf16.gmra.mxu0 %v4074
      %v4163 = vpop.f32.mrf.mxu0
      %v4164 = vadd.f32 0.0, %v4163
      %v4165 = vpop.f32.mrf.mxu0
      %v4166 = vadd.f32 0.0, %v4165
      %4167 = vmatmul.bf16.gmra.mxu0 %v4077
      %v4168 = vpop.f32.mrf.mxu0
      %v4169 = vadd.f32 0.0, %v4168
      %v4170 = vpop.f32.mrf.mxu0
      %v4171 = vadd.f32 0.0, %v4170
      %4172 = vmatmul.bf16.gmra.mxu0 %v4080
      %v4173 = vpop.f32.mrf.mxu0
      %v4174 = vadd.f32 0.0, %v4173
      %v4175 = vpop.f32.mrf.mxu0
      %v4176 = vadd.f32 0.0, %v4175
      %4177 = vmatmul.bf16.gmra.mxu0 %v4083
      %v4178 = vpop.f32.mrf.mxu0
      %v4179 = vadd.f32 0.0, %v4178
      %v4180 = vpop.f32.mrf.mxu0
      %v4181 = vadd.f32 0.0, %v4180
      %4182 = vmatmul.bf16.gmra.mxu0 %v4086
      %v4183 = vpop.f32.mrf.mxu0
      %v4184 = vadd.f32 0.0, %v4183
      %v4185 = vpop.f32.mrf.mxu0
      %v4186 = vadd.f32 0.0, %v4185
      %4187 = vmatmul.bf16.gmra.mxu0 %v4089
      %v4188 = vpop.f32.mrf.mxu0
      %v4189 = vadd.f32 0.0, %v4188
      %v4190 = vpop.f32.mrf.mxu0
      %v4191 = vadd.f32 0.0, %v4190
      %4192 = vdwg.mxu0
      %v4193 = vadd.f32 %v3945, %v4104
      %v4194 = vadd.f32 %v3946, %v4106
      %v4195 = vadd.f32 %v3947, %v4109
      %v4196 = vadd.f32 %v3948, %v4111
      %v4197 = vadd.f32 %v3949, %v4114
      %v4198 = vadd.f32 %v3950, %v4116
      %v4199 = vadd.f32 %v3951, %v4119
      %v4200 = vadd.f32 %v3952, %v4121
      %v4201 = vadd.f32 %v3953, %v4124
      %v4202 = vadd.f32 %v3954, %v4126
      %v4203 = vadd.f32 %v3955, %v4129
      %v4204 = vadd.f32 %v3956, %v4131
      %v4205 = vadd.f32 %v3957, %v4134
      %v4206 = vadd.f32 %v3958, %v4136
      %v4207 = vadd.f32 %v3959, %v4139
      %v4208 = vadd.f32 %v3960, %v4141
      %v4209 = vadd.f32 %v3961, %v4144
      %v4210 = vadd.f32 %v3962, %v4146
      %v4211 = vadd.f32 %v3963, %v4149
      %v4212 = vadd.f32 %v3964, %v4151
      %v4213 = vadd.f32 %v3965, %v4154
      %v4214 = vadd.f32 %v3966, %v4156
      %v4215 = vadd.f32 %v3967, %v4159
      %v4216 = vadd.f32 %v3968, %v4161
      %v4217 = vadd.f32 %v3969, %v4164
      %v4218 = vadd.f32 %v3970, %v4166
      %v4219 = vadd.f32 %v3971, %v4169
      %v4220 = vadd.f32 %v3972, %v4171
      %v4221 = vadd.f32 %v3973, %v4174
      %v4222 = vadd.f32 %v3974, %v4176
      %v4223 = vadd.f32 %v3975, %v4179
      %v4224 = vadd.f32 %v3976, %v4181
      %v4225 = vadd.f32 %v3977, %v4184
      %v4226 = vadd.f32 %v3978, %v4186
      %v4227 = vadd.f32 %v3979, %v4189
      %v4228 = vadd.f32 %v3980, %v4191
      %v4229 = vld [vmem:[#allocation2 + $0x24] sm:$0xff]
      %v4230 = vld [vmem:[#allocation2 + $0x2c] sm:$0xff]
      %v4231 = vld [vmem:[#allocation2 + $0x34] sm:$0xff]
      %v4232 = vld [vmem:[#allocation2 + $0x3c] sm:$0xff]
      %v4233 = vld [vmem:[#allocation2 + $0x44] sm:$0xff]
      %v4234 = vld [vmem:[#allocation2 + $0x4c] sm:$0xff]
      %v4235 = vld [vmem:[#allocation2 + $0x54] sm:$0xff]
      %v4236 = vld [vmem:[#allocation2 + $0x5c] sm:$0xff]
      %v4237 = vld [vmem:[#allocation2 + $0x64] sm:$0xff]
      %v4238 = vld [vmem:[#allocation2 + $0x6c] sm:$0xff]
      %v4239 = vld [vmem:[#allocation2 + $0x74] sm:$0xff]
      %v4240 = vld [vmem:[#allocation2 + $0x7c] sm:$0xff]
      %v4241 = vld [vmem:[#allocation2 + $0x84] sm:$0xff]
      %v4242 = vld [vmem:[#allocation2 + $0x8c] sm:$0xff]
      %v4243 = vld [vmem:[#allocation2 + $0x94] sm:$0xff]
      %v4244 = vld [vmem:[#allocation2 + $0x9c] sm:$0xff]
      %v4245 = vld [vmem:[#allocation2 + $0xa4] sm:$0xff]
      %v4246 = vld [vmem:[#allocation2 + $0xac] sm:$0xff]
      %v4247 = vld [vmem:[#allocation2 + $0xb4] sm:$0xff]
      %v4248 = vld [vmem:[#allocation2 + $0xbc] sm:$0xff]
      %v4249 = vld [vmem:[#allocation2 + $0xc4] sm:$0xff]
      %v4250 = vld [vmem:[#allocation2 + $0xcc] sm:$0xff]
      %v4251 = vld [vmem:[#allocation2 + $0xd4] sm:$0xff]
      %v4252 = vld [vmem:[#allocation2 + $0xdc] sm:$0xff]
      %v4253 = vld [vmem:[#allocation2 + $0xe4] sm:$0xff]
      %v4254 = vld [vmem:[#allocation2 + $0xec] sm:$0xff]
      %v4255 = vld [vmem:[#allocation2 + $0xf4] sm:$0xff]
      %v4256 = vld [vmem:[#allocation2 + $0xfc] sm:$0xff]
      %v4257 = vld [vmem:[#allocation2 + $0x104] sm:$0xff]
      %v4258 = vld [vmem:[#allocation2 + $0x10c] sm:$0xff]
      %v4259 = vld [vmem:[#allocation2 + $0x114] sm:$0xff]
      %v4260 = vld [vmem:[#allocation2 + $0x11c] sm:$0xff]
      %v4261 = vld [vmem:[#allocation2 + $0x124] sm:$0xff]
      %v4262 = vld [vmem:[#allocation2 + $0x12c] sm:$0xff]
      %v4263 = vld [vmem:[#allocation2 + $0x134] sm:$0xff]
      %v4264 = vld [vmem:[#allocation2 + $0x13c] sm:$0xff]
      %v4265 = vpack.c.bf16 %v4230, %v4229
      %v4266 = vpack.c.bf16 %v4232, %v4231
      %v4267 = vpack.c.bf16 %v4234, %v4233
      %v4268 = vpack.c.bf16 %v4236, %v4235
      %v4269 = vpack.c.bf16 %v4238, %v4237
      %v4270 = vpack.c.bf16 %v4240, %v4239
      %v4271 = vpack.c.bf16 %v4242, %v4241
      %v4272 = vpack.c.bf16 %v4244, %v4243
      %v4273 = vpack.c.bf16 %v4246, %v4245
      %v4274 = vpack.c.bf16 %v4248, %v4247
      %v4275 = vpack.c.bf16 %v4250, %v4249
      %v4276 = vpack.c.bf16 %v4252, %v4251
      %v4277 = vpack.c.bf16 %v4254, %v4253
      %v4278 = vpack.c.bf16 %v4256, %v4255
      %v4279 = vpack.c.bf16 %v4258, %v4257
      %v4280 = vpack.c.bf16 %v4260, %v4259
      %v4281 = vpack.c.bf16 %v4262, %v4261
      %v4282 = vpack.c.bf16 %v4264, %v4263
      %s4283 = scalar_lea.vmem %s3, 24
      %v4284 = vld [vmem:[%s4283] sm:$0xf]
      %v4286 = vsel %vm2733, %v4265, 0
      %v4289 = vsel %vm2733, %v4266, 0
      %v4292 = vsel %vm2733, %v4267, 0
      %v4295 = vsel %vm2733, %v4268, 0
      %v4298 = vsel %vm2733, %v4269, 0
      %v4301 = vsel %vm2733, %v4270, 0
      %v4304 = vsel %vm2733, %v4271, 0
      %v4307 = vsel %vm2733, %v4272, 0
      %v4310 = vsel %vm2733, %v4273, 0
      %v4313 = vsel %vm2733, %v4274, 0
      %v4316 = vsel %vm2733, %v4275, 0
      %v4319 = vsel %vm2733, %v4276, 0
      %v4322 = vsel %vm2733, %v4277, 0
      %v4325 = vsel %vm2733, %v4278, 0
      %v4328 = vsel %vm2733, %v4279, 0
      %v4331 = vsel %vm2733, %v4280, 0
      %v4334 = vsel %vm2733, %v4281, 0
      %v4337 = vsel %vm2733, %v4282, 0
      %v4340 = vsel %vm2978, %v4284, 0
      %4342 = vmatpush.bf16.msra.mxu0 0
      %4343 = vmatpush.bf16.msra.mxu0 0
      %4344 = vmatpush.bf16.msra.mxu0 0
      %4345 = vmatpush.bf16.msra.mxu0 0
      %4346 = vmatpush.bf16.msra.mxu0 0
      %4347 = vmatpush.bf16.msra.mxu0 0
      %4348 = vmatpush.bf16.msra.mxu0 0
      %4349 = vmatpush.bf16.msra.mxu0 %v4340
      %4350 = vmatmul.bf16.gmra.mxu0 %v4286
      %v4351 = vpop.f32.mrf.mxu0
      %v4352 = vadd.f32 0.0, %v4351
      %v4353 = vpop.f32.mrf.mxu0
      %v4354 = vadd.f32 0.0, %v4353
      %4355 = vmatmul.bf16.gmra.mxu0 %v4289
      %v4356 = vpop.f32.mrf.mxu0
      %v4357 = vadd.f32 0.0, %v4356
      %v4358 = vpop.f32.mrf.mxu0
      %v4359 = vadd.f32 0.0, %v4358
      %4360 = vmatmul.bf16.gmra.mxu0 %v4292
      %v4361 = vpop.f32.mrf.mxu0
      %v4362 = vadd.f32 0.0, %v4361
      %v4363 = vpop.f32.mrf.mxu0
      %v4364 = vadd.f32 0.0, %v4363
      %4365 = vmatmul.bf16.gmra.mxu0 %v4295
      %v4366 = vpop.f32.mrf.mxu0
      %v4367 = vadd.f32 0.0, %v4366
      %v4368 = vpop.f32.mrf.mxu0
      %v4369 = vadd.f32 0.0, %v4368
      %4370 = vmatmul.bf16.gmra.mxu0 %v4298
      %v4371 = vpop.f32.mrf.mxu0
      %v4372 = vadd.f32 0.0, %v4371
      %v4373 = vpop.f32.mrf.mxu0
      %v4374 = vadd.f32 0.0, %v4373
      %4375 = vmatmul.bf16.gmra.mxu0 %v4301
      %v4376 = vpop.f32.mrf.mxu0
      %v4377 = vadd.f32 0.0, %v4376
      %v4378 = vpop.f32.mrf.mxu0
      %v4379 = vadd.f32 0.0, %v4378
      %4380 = vmatmul.bf16.gmra.mxu0 %v4304
      %v4381 = vpop.f32.mrf.mxu0
      %v4382 = vadd.f32 0.0, %v4381
      %v4383 = vpop.f32.mrf.mxu0
      %v4384 = vadd.f32 0.0, %v4383
      %4385 = vmatmul.bf16.gmra.mxu0 %v4307
      %v4386 = vpop.f32.mrf.mxu0
      %v4387 = vadd.f32 0.0, %v4386
      %v4388 = vpop.f32.mrf.mxu0
      %v4389 = vadd.f32 0.0, %v4388
      %4390 = vmatmul.bf16.gmra.mxu0 %v4310
      %v4391 = vpop.f32.mrf.mxu0
      %v4392 = vadd.f32 0.0, %v4391
      %v4393 = vpop.f32.mrf.mxu0
      %v4394 = vadd.f32 0.0, %v4393
      %4395 = vmatmul.bf16.gmra.mxu0 %v4313
      %v4396 = vpop.f32.mrf.mxu0
      %v4397 = vadd.f32 0.0, %v4396
      %v4398 = vpop.f32.mrf.mxu0
      %v4399 = vadd.f32 0.0, %v4398
      %4400 = vmatmul.bf16.gmra.mxu0 %v4316
      %v4401 = vpop.f32.mrf.mxu0
      %v4402 = vadd.f32 0.0, %v4401
      %v4403 = vpop.f32.mrf.mxu0
      %v4404 = vadd.f32 0.0, %v4403
      %4405 = vmatmul.bf16.gmra.mxu0 %v4319
      %v4406 = vpop.f32.mrf.mxu0
      %v4407 = vadd.f32 0.0, %v4406
      %v4408 = vpop.f32.mrf.mxu0
      %v4409 = vadd.f32 0.0, %v4408
      %4410 = vmatmul.bf16.gmra.mxu0 %v4322
      %v4411 = vpop.f32.mrf.mxu0
      %v4412 = vadd.f32 0.0, %v4411
      %v4413 = vpop.f32.mrf.mxu0
      %v4414 = vadd.f32 0.0, %v4413
      %4415 = vmatmul.bf16.gmra.mxu0 %v4325
      %v4416 = vpop.f32.mrf.mxu0
      %v4417 = vadd.f32 0.0, %v4416
      %v4418 = vpop.f32.mrf.mxu0
      %v4419 = vadd.f32 0.0, %v4418
      %4420 = vmatmul.bf16.gmra.mxu0 %v4328
      %v4421 = vpop.f32.mrf.mxu0
      %v4422 = vadd.f32 0.0, %v4421
      %v4423 = vpop.f32.mrf.mxu0
      %v4424 = vadd.f32 0.0, %v4423
      %4425 = vmatmul.bf16.gmra.mxu0 %v4331
      %v4426 = vpop.f32.mrf.mxu0
      %v4427 = vadd.f32 0.0, %v4426
      %v4428 = vpop.f32.mrf.mxu0
      %v4429 = vadd.f32 0.0, %v4428
      %4430 = vmatmul.bf16.gmra.mxu0 %v4334
      %v4431 = vpop.f32.mrf.mxu0
      %v4432 = vadd.f32 0.0, %v4431
      %v4433 = vpop.f32.mrf.mxu0
      %v4434 = vadd.f32 0.0, %v4433
      %4435 = vmatmul.bf16.gmra.mxu0 %v4337
      %v4436 = vpop.f32.mrf.mxu0
      %v4437 = vadd.f32 0.0, %v4436
      %v4438 = vpop.f32.mrf.mxu0
      %v4439 = vadd.f32 0.0, %v4438
      %4440 = vdwg.mxu0
      %v4441 = vadd.f32 %v4193, %v4352
      %v4442 = vadd.f32 %v4194, %v4354
      %v4443 = vadd.f32 %v4195, %v4357
      %v4444 = vadd.f32 %v4196, %v4359
      %v4445 = vadd.f32 %v4197, %v4362
      %v4446 = vadd.f32 %v4198, %v4364
      %v4447 = vadd.f32 %v4199, %v4367
      %v4448 = vadd.f32 %v4200, %v4369
      %v4449 = vadd.f32 %v4201, %v4372
      %v4450 = vadd.f32 %v4202, %v4374
      %v4451 = vadd.f32 %v4203, %v4377
      %v4452 = vadd.f32 %v4204, %v4379
      %v4453 = vadd.f32 %v4205, %v4382
      %v4454 = vadd.f32 %v4206, %v4384
      %v4455 = vadd.f32 %v4207, %v4387
      %v4456 = vadd.f32 %v4208, %v4389
      %v4457 = vadd.f32 %v4209, %v4392
      %v4458 = vadd.f32 %v4210, %v4394
      %v4459 = vadd.f32 %v4211, %v4397
      %v4460 = vadd.f32 %v4212, %v4399
      %v4461 = vadd.f32 %v4213, %v4402
      %v4462 = vadd.f32 %v4214, %v4404
      %v4463 = vadd.f32 %v4215, %v4407
      %v4464 = vadd.f32 %v4216, %v4409
      %v4465 = vadd.f32 %v4217, %v4412
      %v4466 = vadd.f32 %v4218, %v4414
      %v4467 = vadd.f32 %v4219, %v4417
      %v4468 = vadd.f32 %v4220, %v4419
      %v4469 = vadd.f32 %v4221, %v4422
      %v4470 = vadd.f32 %v4222, %v4424
      %v4471 = vadd.f32 %v4223, %v4427
      %v4472 = vadd.f32 %v4224, %v4429
      %v4473 = vadd.f32 %v4225, %v4432
      %v4474 = vadd.f32 %v4226, %v4434
      %v4475 = vadd.f32 %v4227, %v4437
      %v4476 = vadd.f32 %v4228, %v4439
      %v4477 = vld [vmem:[#allocation2 + $0x25] sm:$0xff]
      %v4478 = vld [vmem:[#allocation2 + $0x2d] sm:$0xff]
      %v4479 = vld [vmem:[#allocation2 + $0x35] sm:$0xff]
      %v4480 = vld [vmem:[#allocation2 + $0x3d] sm:$0xff]
      %v4481 = vld [vmem:[#allocation2 + $0x45] sm:$0xff]
      %v4482 = vld [vmem:[#allocation2 + $0x4d] sm:$0xff]
      %v4483 = vld [vmem:[#allocation2 + $0x55] sm:$0xff]
      %v4484 = vld [vmem:[#allocation2 + $0x5d] sm:$0xff]
      %v4485 = vld [vmem:[#allocation2 + $0x65] sm:$0xff]
      %v4486 = vld [vmem:[#allocation2 + $0x6d] sm:$0xff]
      %v4487 = vld [vmem:[#allocation2 + $0x75] sm:$0xff]
      %v4488 = vld [vmem:[#allocation2 + $0x7d] sm:$0xff]
      %v4489 = vld [vmem:[#allocation2 + $0x85] sm:$0xff]
      %v4490 = vld [vmem:[#allocation2 + $0x8d] sm:$0xff]
      %v4491 = vld [vmem:[#allocation2 + $0x95] sm:$0xff]
      %v4492 = vld [vmem:[#allocation2 + $0x9d] sm:$0xff]
      %v4493 = vld [vmem:[#allocation2 + $0xa5] sm:$0xff]
      %v4494 = vld [vmem:[#allocation2 + $0xad] sm:$0xff]
      %v4495 = vld [vmem:[#allocation2 + $0xb5] sm:$0xff]
      %v4496 = vld [vmem:[#allocation2 + $0xbd] sm:$0xff]
      %v4497 = vld [vmem:[#allocation2 + $0xc5] sm:$0xff]
      %v4498 = vld [vmem:[#allocation2 + $0xcd] sm:$0xff]
      %v4499 = vld [vmem:[#allocation2 + $0xd5] sm:$0xff]
      %v4500 = vld [vmem:[#allocation2 + $0xdd] sm:$0xff]
      %v4501 = vld [vmem:[#allocation2 + $0xe5] sm:$0xff]
      %v4502 = vld [vmem:[#allocation2 + $0xed] sm:$0xff]
      %v4503 = vld [vmem:[#allocation2 + $0xf5] sm:$0xff]
      %v4504 = vld [vmem:[#allocation2 + $0xfd] sm:$0xff]
      %v4505 = vld [vmem:[#allocation2 + $0x105] sm:$0xff]
      %v4506 = vld [vmem:[#allocation2 + $0x10d] sm:$0xff]
      %v4507 = vld [vmem:[#allocation2 + $0x115] sm:$0xff]
      %v4508 = vld [vmem:[#allocation2 + $0x11d] sm:$0xff]
      %v4509 = vld [vmem:[#allocation2 + $0x125] sm:$0xff]
      %v4510 = vld [vmem:[#allocation2 + $0x12d] sm:$0xff]
      %v4511 = vld [vmem:[#allocation2 + $0x135] sm:$0xff]
      %v4512 = vld [vmem:[#allocation2 + $0x13d] sm:$0xff]
      %v4513 = vpack.c.bf16 %v4478, %v4477
      %v4514 = vpack.c.bf16 %v4480, %v4479
      %v4515 = vpack.c.bf16 %v4482, %v4481
      %v4516 = vpack.c.bf16 %v4484, %v4483
      %v4517 = vpack.c.bf16 %v4486, %v4485
      %v4518 = vpack.c.bf16 %v4488, %v4487
      %v4519 = vpack.c.bf16 %v4490, %v4489
      %v4520 = vpack.c.bf16 %v4492, %v4491
      %v4521 = vpack.c.bf16 %v4494, %v4493
      %v4522 = vpack.c.bf16 %v4496, %v4495
      %v4523 = vpack.c.bf16 %v4498, %v4497
      %v4524 = vpack.c.bf16 %v4500, %v4499
      %v4525 = vpack.c.bf16 %v4502, %v4501
      %v4526 = vpack.c.bf16 %v4504, %v4503
      %v4527 = vpack.c.bf16 %v4506, %v4505
      %v4528 = vpack.c.bf16 %v4508, %v4507
      %v4529 = vpack.c.bf16 %v4510, %v4509
      %v4530 = vpack.c.bf16 %v4512, %v4511
      %s4531 = scalar_lea.vmem %s3, 28
      %v4532 = vld [vmem:[%s4531] sm:$0xf]
      %v4534 = vsel %vm2733, %v4513, 0
      %v4537 = vsel %vm2733, %v4514, 0
      %v4540 = vsel %vm2733, %v4515, 0
      %v4543 = vsel %vm2733, %v4516, 0
      %v4546 = vsel %vm2733, %v4517, 0
      %v4549 = vsel %vm2733, %v4518, 0
      %v4552 = vsel %vm2733, %v4519, 0
      %v4555 = vsel %vm2733, %v4520, 0
      %v4558 = vsel %vm2733, %v4521, 0
      %v4561 = vsel %vm2733, %v4522, 0
      %v4564 = vsel %vm2733, %v4523, 0
      %v4567 = vsel %vm2733, %v4524, 0
      %v4570 = vsel %vm2733, %v4525, 0
      %v4573 = vsel %vm2733, %v4526, 0
      %v4576 = vsel %vm2733, %v4527, 0
      %v4579 = vsel %vm2733, %v4528, 0
      %v4582 = vsel %vm2733, %v4529, 0
      %v4585 = vsel %vm2733, %v4530, 0
      %v4588 = vsel %vm2978, %v4532, 0
      %4590 = vmatpush.bf16.msra.mxu0 0
      %4591 = vmatpush.bf16.msra.mxu0 0
      %4592 = vmatpush.bf16.msra.mxu0 0
      %4593 = vmatpush.bf16.msra.mxu0 0
      %4594 = vmatpush.bf16.msra.mxu0 0
      %4595 = vmatpush.bf16.msra.mxu0 0
      %4596 = vmatpush.bf16.msra.mxu0 0
      %4597 = vmatpush.bf16.msra.mxu0 %v4588
      %4598 = vmatmul.bf16.gmra.mxu0 %v4534
      %v4599 = vpop.f32.mrf.mxu0
      %v4600 = vadd.f32 0.0, %v4599
      %v4601 = vpop.f32.mrf.mxu0
      %v4602 = vadd.f32 0.0, %v4601
      %4603 = vmatmul.bf16.gmra.mxu0 %v4537
      %v4604 = vpop.f32.mrf.mxu0
      %v4605 = vadd.f32 0.0, %v4604
      %v4606 = vpop.f32.mrf.mxu0
      %v4607 = vadd.f32 0.0, %v4606
      %4608 = vmatmul.bf16.gmra.mxu0 %v4540
      %v4609 = vpop.f32.mrf.mxu0
      %v4610 = vadd.f32 0.0, %v4609
      %v4611 = vpop.f32.mrf.mxu0
      %v4612 = vadd.f32 0.0, %v4611
      %4613 = vmatmul.bf16.gmra.mxu0 %v4543
      %v4614 = vpop.f32.mrf.mxu0
      %v4615 = vadd.f32 0.0, %v4614
      %v4616 = vpop.f32.mrf.mxu0
      %v4617 = vadd.f32 0.0, %v4616
      %4618 = vmatmul.bf16.gmra.mxu0 %v4546
      %v4619 = vpop.f32.mrf.mxu0
      %v4620 = vadd.f32 0.0, %v4619
      %v4621 = vpop.f32.mrf.mxu0
      %v4622 = vadd.f32 0.0, %v4621
      %4623 = vmatmul.bf16.gmra.mxu0 %v4549
      %v4624 = vpop.f32.mrf.mxu0
      %v4625 = vadd.f32 0.0, %v4624
      %v4626 = vpop.f32.mrf.mxu0
      %v4627 = vadd.f32 0.0, %v4626
      %4628 = vmatmul.bf16.gmra.mxu0 %v4552
      %v4629 = vpop.f32.mrf.mxu0
      %v4630 = vadd.f32 0.0, %v4629
      %v4631 = vpop.f32.mrf.mxu0
      %v4632 = vadd.f32 0.0, %v4631
      %4633 = vmatmul.bf16.gmra.mxu0 %v4555
      %v4634 = vpop.f32.mrf.mxu0
      %v4635 = vadd.f32 0.0, %v4634
      %v4636 = vpop.f32.mrf.mxu0
      %v4637 = vadd.f32 0.0, %v4636
      %4638 = vmatmul.bf16.gmra.mxu0 %v4558
      %v4639 = vpop.f32.mrf.mxu0
      %v4640 = vadd.f32 0.0, %v4639
      %v4641 = vpop.f32.mrf.mxu0
      %v4642 = vadd.f32 0.0, %v4641
      %4643 = vmatmul.bf16.gmra.mxu0 %v4561
      %v4644 = vpop.f32.mrf.mxu0
      %v4645 = vadd.f32 0.0, %v4644
      %v4646 = vpop.f32.mrf.mxu0
      %v4647 = vadd.f32 0.0, %v4646
      %4648 = vmatmul.bf16.gmra.mxu0 %v4564
      %v4649 = vpop.f32.mrf.mxu0
      %v4650 = vadd.f32 0.0, %v4649
      %v4651 = vpop.f32.mrf.mxu0
      %v4652 = vadd.f32 0.0, %v4651
      %4653 = vmatmul.bf16.gmra.mxu0 %v4567
      %v4654 = vpop.f32.mrf.mxu0
      %v4655 = vadd.f32 0.0, %v4654
      %v4656 = vpop.f32.mrf.mxu0
      %v4657 = vadd.f32 0.0, %v4656
      %4658 = vmatmul.bf16.gmra.mxu0 %v4570
      %v4659 = vpop.f32.mrf.mxu0
      %v4660 = vadd.f32 0.0, %v4659
      %v4661 = vpop.f32.mrf.mxu0
      %v4662 = vadd.f32 0.0, %v4661
      %4663 = vmatmul.bf16.gmra.mxu0 %v4573
      %v4664 = vpop.f32.mrf.mxu0
      %v4665 = vadd.f32 0.0, %v4664
      %v4666 = vpop.f32.mrf.mxu0
      %v4667 = vadd.f32 0.0, %v4666
      %4668 = vmatmul.bf16.gmra.mxu0 %v4576
      %v4669 = vpop.f32.mrf.mxu0
      %v4670 = vadd.f32 0.0, %v4669
      %v4671 = vpop.f32.mrf.mxu0
      %v4672 = vadd.f32 0.0, %v4671
      %4673 = vmatmul.bf16.gmra.mxu0 %v4579
      %v4674 = vpop.f32.mrf.mxu0
      %v4675 = vadd.f32 0.0, %v4674
      %v4676 = vpop.f32.mrf.mxu0
      %v4677 = vadd.f32 0.0, %v4676
      %4678 = vmatmul.bf16.gmra.mxu0 %v4582
      %v4679 = vpop.f32.mrf.mxu0
      %v4680 = vadd.f32 0.0, %v4679
      %v4681 = vpop.f32.mrf.mxu0
      %v4682 = vadd.f32 0.0, %v4681
      %4683 = vmatmul.bf16.gmra.mxu0 %v4585
      %v4684 = vpop.f32.mrf.mxu0
      %v4685 = vadd.f32 0.0, %v4684
      %v4686 = vpop.f32.mrf.mxu0
      %v4687 = vadd.f32 0.0, %v4686
      %4688 = vdwg.mxu0
      %v4689 = vadd.f32 %v4441, %v4600
      %v4690 = vadd.f32 %v4442, %v4602
      %v4691 = vadd.f32 %v4443, %v4605
      %v4692 = vadd.f32 %v4444, %v4607
      %v4693 = vadd.f32 %v4445, %v4610
      %v4694 = vadd.f32 %v4446, %v4612
      %v4695 = vadd.f32 %v4447, %v4615
      %v4696 = vadd.f32 %v4448, %v4617
      %v4697 = vadd.f32 %v4449, %v4620
      %v4698 = vadd.f32 %v4450, %v4622
      %v4699 = vadd.f32 %v4451, %v4625
      %v4700 = vadd.f32 %v4452, %v4627
      %v4701 = vadd.f32 %v4453, %v4630
      %v4702 = vadd.f32 %v4454, %v4632
      %v4703 = vadd.f32 %v4455, %v4635
      %v4704 = vadd.f32 %v4456, %v4637
      %v4705 = vadd.f32 %v4457, %v4640
      %v4706 = vadd.f32 %v4458, %v4642
      %v4707 = vadd.f32 %v4459, %v4645
      %v4708 = vadd.f32 %v4460, %v4647
      %v4709 = vadd.f32 %v4461, %v4650
      %v4710 = vadd.f32 %v4462, %v4652
      %v4711 = vadd.f32 %v4463, %v4655
      %v4712 = vadd.f32 %v4464, %v4657
      %v4713 = vadd.f32 %v4465, %v4660
      %v4714 = vadd.f32 %v4466, %v4662
      %v4715 = vadd.f32 %v4467, %v4665
      %v4716 = vadd.f32 %v4468, %v4667
      %v4717 = vadd.f32 %v4469, %v4670
      %v4718 = vadd.f32 %v4470, %v4672
      %v4719 = vadd.f32 %v4471, %v4675
      %v4720 = vadd.f32 %v4472, %v4677
      %v4721 = vadd.f32 %v4473, %v4680
      %v4722 = vadd.f32 %v4474, %v4682
      %v4723 = vadd.f32 %v4475, %v4685
      %v4724 = vadd.f32 %v4476, %v4687
      %v4725 = vld [vmem:[#allocation2 + $0x26] sm:$0xff]
      %v4726 = vld [vmem:[#allocation2 + $0x2e] sm:$0xff]
      %v4727 = vld [vmem:[#allocation2 + $0x36] sm:$0xff]
      %v4728 = vld [vmem:[#allocation2 + $0x3e] sm:$0xff]
      %v4729 = vld [vmem:[#allocation2 + $0x46] sm:$0xff]
      %v4730 = vld [vmem:[#allocation2 + $0x4e] sm:$0xff]
      %v4731 = vld [vmem:[#allocation2 + $0x56] sm:$0xff]
      %v4732 = vld [vmem:[#allocation2 + $0x5e] sm:$0xff]
      %v4733 = vld [vmem:[#allocation2 + $0x66] sm:$0xff]
      %v4734 = vld [vmem:[#allocation2 + $0x6e] sm:$0xff]
      %v4735 = vld [vmem:[#allocation2 + $0x76] sm:$0xff]
      %v4736 = vld [vmem:[#allocation2 + $0x7e] sm:$0xff]
      %v4737 = vld [vmem:[#allocation2 + $0x86] sm:$0xff]
      %v4738 = vld [vmem:[#allocation2 + $0x8e] sm:$0xff]
      %v4739 = vld [vmem:[#allocation2 + $0x96] sm:$0xff]
      %v4740 = vld [vmem:[#allocation2 + $0x9e] sm:$0xff]
      %v4741 = vld [vmem:[#allocation2 + $0xa6] sm:$0xff]
      %v4742 = vld [vmem:[#allocation2 + $0xae] sm:$0xff]
      %v4743 = vld [vmem:[#allocation2 + $0xb6] sm:$0xff]
      %v4744 = vld [vmem:[#allocation2 + $0xbe] sm:$0xff]
      %v4745 = vld [vmem:[#allocation2 + $0xc6] sm:$0xff]
      %v4746 = vld [vmem:[#allocation2 + $0xce] sm:$0xff]
      %v4747 = vld [vmem:[#allocation2 + $0xd6] sm:$0xff]
      %v4748 = vld [vmem:[#allocation2 + $0xde] sm:$0xff]
      %v4749 = vld [vmem:[#allocation2 + $0xe6] sm:$0xff]
      %v4750 = vld [vmem:[#allocation2 + $0xee] sm:$0xff]
      %v4751 = vld [vmem:[#allocation2 + $0xf6] sm:$0xff]
      %v4752 = vld [vmem:[#allocation2 + $0xfe] sm:$0xff]
      %v4753 = vld [vmem:[#allocation2 + $0x106] sm:$0xff]
      %v4754 = vld [vmem:[#allocation2 + $0x10e] sm:$0xff]
      %v4755 = vld [vmem:[#allocation2 + $0x116] sm:$0xff]
      %v4756 = vld [vmem:[#allocation2 + $0x11e] sm:$0xff]
      %v4757 = vld [vmem:[#allocation2 + $0x126] sm:$0xff]
      %v4758 = vld [vmem:[#allocation2 + $0x12e] sm:$0xff]
      %v4759 = vld [vmem:[#allocation2 + $0x136] sm:$0xff]
      %v4760 = vld [vmem:[#allocation2 + $0x13e] sm:$0xff]
      %v4761 = vpack.c.bf16 %v4726, %v4725
      %v4762 = vpack.c.bf16 %v4728, %v4727
      %v4763 = vpack.c.bf16 %v4730, %v4729
      %v4764 = vpack.c.bf16 %v4732, %v4731
      %v4765 = vpack.c.bf16 %v4734, %v4733
      %v4766 = vpack.c.bf16 %v4736, %v4735
      %v4767 = vpack.c.bf16 %v4738, %v4737
      %v4768 = vpack.c.bf16 %v4740, %v4739
      %v4769 = vpack.c.bf16 %v4742, %v4741
      %v4770 = vpack.c.bf16 %v4744, %v4743
      %v4771 = vpack.c.bf16 %v4746, %v4745
      %v4772 = vpack.c.bf16 %v4748, %v4747
      %v4773 = vpack.c.bf16 %v4750, %v4749
      %v4774 = vpack.c.bf16 %v4752, %v4751
      %v4775 = vpack.c.bf16 %v4754, %v4753
      %v4776 = vpack.c.bf16 %v4756, %v4755
      %v4777 = vpack.c.bf16 %v4758, %v4757
      %v4778 = vpack.c.bf16 %v4760, %v4759
      %s4779 = scalar_lea.vmem %s3, 32
      %v4780 = vld [vmem:[%s4779] sm:$0xf]
      %v4782 = vsel %vm2733, %v4761, 0
      %v4785 = vsel %vm2733, %v4762, 0
      %v4788 = vsel %vm2733, %v4763, 0
      %v4791 = vsel %vm2733, %v4764, 0
      %v4794 = vsel %vm2733, %v4765, 0
      %v4797 = vsel %vm2733, %v4766, 0
      %v4800 = vsel %vm2733, %v4767, 0
      %v4803 = vsel %vm2733, %v4768, 0
      %v4806 = vsel %vm2733, %v4769, 0
      %v4809 = vsel %vm2733, %v4770, 0
      %v4812 = vsel %vm2733, %v4771, 0
      %v4815 = vsel %vm2733, %v4772, 0
      %v4818 = vsel %vm2733, %v4773, 0
      %v4821 = vsel %vm2733, %v4774, 0
      %v4824 = vsel %vm2733, %v4775, 0
      %v4827 = vsel %vm2733, %v4776, 0
      %v4830 = vsel %vm2733, %v4777, 0
      %v4833 = vsel %vm2733, %v4778, 0
      %v4836 = vsel %vm2978, %v4780, 0
      %4838 = vmatpush.bf16.msra.mxu0 0
      %4839 = vmatpush.bf16.msra.mxu0 0
      %4840 = vmatpush.bf16.msra.mxu0 0
      %4841 = vmatpush.bf16.msra.mxu0 0
      %4842 = vmatpush.bf16.msra.mxu0 0
      %4843 = vmatpush.bf16.msra.mxu0 0
      %4844 = vmatpush.bf16.msra.mxu0 0
      %4845 = vmatpush.bf16.msra.mxu0 %v4836
      %4846 = vmatmul.bf16.gmra.mxu0 %v4782
      %v4847 = vpop.f32.mrf.mxu0
      %v4848 = vadd.f32 0.0, %v4847
      %v4849 = vpop.f32.mrf.mxu0
      %v4850 = vadd.f32 0.0, %v4849
      %4851 = vmatmul.bf16.gmra.mxu0 %v4785
      %v4852 = vpop.f32.mrf.mxu0
      %v4853 = vadd.f32 0.0, %v4852
      %v4854 = vpop.f32.mrf.mxu0
      %v4855 = vadd.f32 0.0, %v4854
      %4856 = vmatmul.bf16.gmra.mxu0 %v4788
      %v4857 = vpop.f32.mrf.mxu0
      %v4858 = vadd.f32 0.0, %v4857
      %v4859 = vpop.f32.mrf.mxu0
      %v4860 = vadd.f32 0.0, %v4859
      %4861 = vmatmul.bf16.gmra.mxu0 %v4791
      %v4862 = vpop.f32.mrf.mxu0
      %v4863 = vadd.f32 0.0, %v4862
      %v4864 = vpop.f32.mrf.mxu0
      %v4865 = vadd.f32 0.0, %v4864
      %4866 = vmatmul.bf16.gmra.mxu0 %v4794
      %v4867 = vpop.f32.mrf.mxu0
      %v4868 = vadd.f32 0.0, %v4867
      %v4869 = vpop.f32.mrf.mxu0
      %v4870 = vadd.f32 0.0, %v4869
      %4871 = vmatmul.bf16.gmra.mxu0 %v4797
      %v4872 = vpop.f32.mrf.mxu0
      %v4873 = vadd.f32 0.0, %v4872
      %v4874 = vpop.f32.mrf.mxu0
      %v4875 = vadd.f32 0.0, %v4874
      %4876 = vmatmul.bf16.gmra.mxu0 %v4800
      %v4877 = vpop.f32.mrf.mxu0
      %v4878 = vadd.f32 0.0, %v4877
      %v4879 = vpop.f32.mrf.mxu0
      %v4880 = vadd.f32 0.0, %v4879
      %4881 = vmatmul.bf16.gmra.mxu0 %v4803
      %v4882 = vpop.f32.mrf.mxu0
      %v4883 = vadd.f32 0.0, %v4882
      %v4884 = vpop.f32.mrf.mxu0
      %v4885 = vadd.f32 0.0, %v4884
      %4886 = vmatmul.bf16.gmra.mxu0 %v4806
      %v4887 = vpop.f32.mrf.mxu0
      %v4888 = vadd.f32 0.0, %v4887
      %v4889 = vpop.f32.mrf.mxu0
      %v4890 = vadd.f32 0.0, %v4889
      %4891 = vmatmul.bf16.gmra.mxu0 %v4809
      %v4892 = vpop.f32.mrf.mxu0
      %v4893 = vadd.f32 0.0, %v4892
      %v4894 = vpop.f32.mrf.mxu0
      %v4895 = vadd.f32 0.0, %v4894
      %4896 = vmatmul.bf16.gmra.mxu0 %v4812
      %v4897 = vpop.f32.mrf.mxu0
      %v4898 = vadd.f32 0.0, %v4897
      %v4899 = vpop.f32.mrf.mxu0
      %v4900 = vadd.f32 0.0, %v4899
      %4901 = vmatmul.bf16.gmra.mxu0 %v4815
      %v4902 = vpop.f32.mrf.mxu0
      %v4903 = vadd.f32 0.0, %v4902
      %v4904 = vpop.f32.mrf.mxu0
      %v4905 = vadd.f32 0.0, %v4904
      %4906 = vmatmul.bf16.gmra.mxu0 %v4818
      %v4907 = vpop.f32.mrf.mxu0
      %v4908 = vadd.f32 0.0, %v4907
      %v4909 = vpop.f32.mrf.mxu0
      %v4910 = vadd.f32 0.0, %v4909
      %4911 = vmatmul.bf16.gmra.mxu0 %v4821
      %v4912 = vpop.f32.mrf.mxu0
      %v4913 = vadd.f32 0.0, %v4912
      %v4914 = vpop.f32.mrf.mxu0
      %v4915 = vadd.f32 0.0, %v4914
      %4916 = vmatmul.bf16.gmra.mxu0 %v4824
      %v4917 = vpop.f32.mrf.mxu0
      %v4918 = vadd.f32 0.0, %v4917
      %v4919 = vpop.f32.mrf.mxu0
      %v4920 = vadd.f32 0.0, %v4919
      %4921 = vmatmul.bf16.gmra.mxu0 %v4827
      %v4922 = vpop.f32.mrf.mxu0
      %v4923 = vadd.f32 0.0, %v4922
      %v4924 = vpop.f32.mrf.mxu0
      %v4925 = vadd.f32 0.0, %v4924
      %4926 = vmatmul.bf16.gmra.mxu0 %v4830
      %v4927 = vpop.f32.mrf.mxu0
      %v4928 = vadd.f32 0.0, %v4927
      %v4929 = vpop.f32.mrf.mxu0
      %v4930 = vadd.f32 0.0, %v4929
      %4931 = vmatmul.bf16.gmra.mxu0 %v4833
      %v4932 = vpop.f32.mrf.mxu0
      %v4933 = vadd.f32 0.0, %v4932
      %v4934 = vpop.f32.mrf.mxu0
      %v4935 = vadd.f32 0.0, %v4934
      %4936 = vdwg.mxu0
      %v4937 = vadd.f32 %v4689, %v4848
      %v4938 = vadd.f32 %v4690, %v4850
      %v4939 = vadd.f32 %v4691, %v4853
      %v4940 = vadd.f32 %v4692, %v4855
      %v4941 = vadd.f32 %v4693, %v4858
      %v4942 = vadd.f32 %v4694, %v4860
      %v4943 = vadd.f32 %v4695, %v4863
      %v4944 = vadd.f32 %v4696, %v4865
      %v4945 = vadd.f32 %v4697, %v4868
      %v4946 = vadd.f32 %v4698, %v4870
      %v4947 = vadd.f32 %v4699, %v4873
      %v4948 = vadd.f32 %v4700, %v4875
      %v4949 = vadd.f32 %v4701, %v4878
      %v4950 = vadd.f32 %v4702, %v4880
      %v4951 = vadd.f32 %v4703, %v4883
      %v4952 = vadd.f32 %v4704, %v4885
      %v4953 = vadd.f32 %v4705, %v4888
      %v4954 = vadd.f32 %v4706, %v4890
      %v4955 = vadd.f32 %v4707, %v4893
      %v4956 = vadd.f32 %v4708, %v4895
      %v4957 = vadd.f32 %v4709, %v4898
      %v4958 = vadd.f32 %v4710, %v4900
      %v4959 = vadd.f32 %v4711, %v4903
      %v4960 = vadd.f32 %v4712, %v4905
      %v4961 = vadd.f32 %v4713, %v4908
      %v4962 = vadd.f32 %v4714, %v4910
      %v4963 = vadd.f32 %v4715, %v4913
      %v4964 = vadd.f32 %v4716, %v4915
      %v4965 = vadd.f32 %v4717, %v4918
      %v4966 = vadd.f32 %v4718, %v4920
      %v4967 = vadd.f32 %v4719, %v4923
      %v4968 = vadd.f32 %v4720, %v4925
      %v4969 = vadd.f32 %v4721, %v4928
      %v4970 = vadd.f32 %v4722, %v4930
      %v4971 = vadd.f32 %v4723, %v4933
      %v4972 = vadd.f32 %v4724, %v4935
      %v4973 = vld [vmem:[%s7] sm:$0x1]
      %v4975 = vperm.slane %v4973, 0
      %v4977 = vmul.f32 %v4937, %v4975
      %v4978 = vmul.f32 %v4938, %v4975
      %v4979 = vmul.f32 %v4939, %v4975
      %v4980 = vmul.f32 %v4940, %v4975
      %v4981 = vmul.f32 %v4941, %v4975
      %v4982 = vmul.f32 %v4942, %v4975
      %v4983 = vmul.f32 %v4943, %v4975
      %v4984 = vmul.f32 %v4944, %v4975
      %v4985 = vmul.f32 %v4945, %v4975
      %v4986 = vmul.f32 %v4946, %v4975
      %v4987 = vmul.f32 %v4947, %v4975
      %v4988 = vmul.f32 %v4948, %v4975
      %v4989 = vmul.f32 %v4949, %v4975
      %v4990 = vmul.f32 %v4950, %v4975
      %v4991 = vmul.f32 %v4951, %v4975
      %v4992 = vmul.f32 %v4952, %v4975
      %v4993 = vmul.f32 %v4953, %v4975
      %v4994 = vmul.f32 %v4954, %v4975
      %v4995 = vmul.f32 %v4955, %v4975
      %v4996 = vmul.f32 %v4956, %v4975
      %v4997 = vmul.f32 %v4957, %v4975
      %v4998 = vmul.f32 %v4958, %v4975
      %v4999 = vmul.f32 %v4959, %v4975
      %v5000 = vmul.f32 %v4960, %v4975
      %v5001 = vmul.f32 %v4961, %v4975
      %v5002 = vmul.f32 %v4962, %v4975
      %v5003 = vmul.f32 %v4963, %v4975
      %v5004 = vmul.f32 %v4964, %v4975
      %v5005 = vmul.f32 %v4965, %v4975
      %v5006 = vmul.f32 %v4966, %v4975
      %v5007 = vmul.f32 %v4967, %v4975
      %v5008 = vmul.f32 %v4968, %v4975
      %v5009 = vmul.f32 %v4969, %v4975
      %v5010 = vmul.f32 %v4970, %v4975
      %v5011 = vmul.f32 %v4971, %v4975
      %v5012 = vmul.f32 %v4972, %v4975
      %v5013 = vld [vmem:[%s8] sm:$0x1]
      %v5015 = vperm.slane %v5013, 0
      %v5017 = vadd.f32 %v4977, %v5015
      %v5018 = vadd.f32 %v4978, %v5015
      %v5019 = vadd.f32 %v4979, %v5015
      %v5020 = vadd.f32 %v4980, %v5015
      %v5021 = vadd.f32 %v4981, %v5015
      %v5022 = vadd.f32 %v4982, %v5015
      %v5023 = vadd.f32 %v4983, %v5015
      %v5024 = vadd.f32 %v4984, %v5015
      %v5025 = vadd.f32 %v4985, %v5015
      %v5026 = vadd.f32 %v4986, %v5015
      %v5027 = vadd.f32 %v4987, %v5015
      %v5028 = vadd.f32 %v4988, %v5015
      %v5029 = vadd.f32 %v4989, %v5015
      %v5030 = vadd.f32 %v4990, %v5015
      %v5031 = vadd.f32 %v4991, %v5015
      %v5032 = vadd.f32 %v4992, %v5015
      %v5033 = vadd.f32 %v4993, %v5015
      %v5034 = vadd.f32 %v4994, %v5015
      %v5035 = vadd.f32 %v4995, %v5015
      %v5036 = vadd.f32 %v4996, %v5015
      %v5037 = vadd.f32 %v4997, %v5015
      %v5038 = vadd.f32 %v4998, %v5015
      %v5039 = vadd.f32 %v4999, %v5015
      %v5040 = vadd.f32 %v5000, %v5015
      %v5041 = vadd.f32 %v5001, %v5015
      %v5042 = vadd.f32 %v5002, %v5015
      %v5043 = vadd.f32 %v5003, %v5015
      %v5044 = vadd.f32 %v5004, %v5015
      %v5045 = vadd.f32 %v5005, %v5015
      %v5046 = vadd.f32 %v5006, %v5015
      %v5047 = vadd.f32 %v5007, %v5015
      %v5048 = vadd.f32 %v5008, %v5015
      %v5049 = vadd.f32 %v5009, %v5015
      %v5050 = vadd.f32 %v5010, %v5015
      %v5051 = vadd.f32 %v5011, %v5015
      %v5052 = vadd.f32 %v5012, %v5015
      %v5053 = vld [vmem:[%s401] sm:$0xf]
      %v5054 = vld [vmem:[%s401 + $0x4] sm:$0xf]
      %v5055 = vld [vmem:[%s401 + $0x8] sm:$0xf]
      %v5056 = vld [vmem:[%s401 + $0xc] sm:$0xf]
      %v5057 = vld [vmem:[%s401 + $0x10] sm:$0xf]
      %v5058 = vld [vmem:[%s401 + $0x14] sm:$0xf]
      %v5059 = vld [vmem:[%s401 + $0x18] sm:$0xf]
      %v5060 = vld [vmem:[%s401 + $0x1c] sm:$0xf]
      %v5061 = vld [vmem:[%s401 + $0x20] sm:$0xf]
      %v5062 = vld [vmem:[%s401 + $0x24] sm:$0xf]
      %v5063 = vld [vmem:[%s401 + $0x28] sm:$0xf]
      %v5064 = vld [vmem:[%s401 + $0x2c] sm:$0xf]
      %v5065 = vld [vmem:[%s401 + $0x30] sm:$0xf]
      %v5066 = vld [vmem:[%s401 + $0x34] sm:$0xf]
      %v5067 = vld [vmem:[%s401 + $0x38] sm:$0xf]
      %v5068 = vld [vmem:[%s401 + $0x3c] sm:$0xf]
      %v5069 = vld [vmem:[%s401 + $0x40] sm:$0xf]
      %v5070 = vld [vmem:[%s401 + $0x44] sm:$0xf]
      %v5071 = vld [vmem:[%s401 + $0x48] sm:$0xf]
      %v5072 = vld [vmem:[%s401 + $0x4c] sm:$0xf]
      %v5073 = vld [vmem:[%s401 + $0x50] sm:$0xf]
      %v5074 = vld [vmem:[%s401 + $0x54] sm:$0xf]
      %v5075 = vld [vmem:[%s401 + $0x58] sm:$0xf]
      %v5076 = vld [vmem:[%s401 + $0x5c] sm:$0xf]
      %v5077 = vld [vmem:[%s401 + $0x60] sm:$0xf]
      %v5078 = vld [vmem:[%s401 + $0x64] sm:$0xf]
      %v5079 = vld [vmem:[%s401 + $0x68] sm:$0xf]
      %v5080 = vld [vmem:[%s401 + $0x6c] sm:$0xf]
      %v5081 = vld [vmem:[%s401 + $0x70] sm:$0xf]
      %v5082 = vld [vmem:[%s401 + $0x74] sm:$0xf]
      %v5083 = vld [vmem:[%s401 + $0x78] sm:$0xf]
      %v5084 = vld [vmem:[%s401 + $0x7c] sm:$0xf]
      %v5085 = vld [vmem:[%s401 + $0x80] sm:$0xf]
      %v5086 = vld [vmem:[%s401 + $0x84] sm:$0xf]
      %v5087 = vld [vmem:[%s401 + $0x88] sm:$0xf]
      %v5088 = vld [vmem:[%s401 + $0x8c] sm:$0xf]
      %v5089 = vld [vmem:[%s4] sm:$0x3]
      %v5126 = vunpack.c.l.b16 %v5053
      %v5127 = vunpack.c.l.b16 %v5054
      %v5128 = vunpack.c.l.b16 %v5055
      %v5129 = vunpack.c.l.b16 %v5056
      %v5130 = vunpack.c.l.b16 %v5057
      %v5131 = vunpack.c.l.b16 %v5058
      %v5132 = vunpack.c.l.b16 %v5059
      %v5133 = vunpack.c.l.b16 %v5060
      %v5134 = vunpack.c.l.b16 %v5061
      %v5135 = vunpack.c.l.b16 %v5062
      %v5136 = vunpack.c.l.b16 %v5063
      %v5137 = vunpack.c.l.b16 %v5064
      %v5138 = vunpack.c.l.b16 %v5065
      %v5139 = vunpack.c.l.b16 %v5066
      %v5140 = vunpack.c.l.b16 %v5067
      %v5141 = vunpack.c.l.b16 %v5068
      %v5142 = vunpack.c.l.b16 %v5069
      %v5143 = vunpack.c.l.b16 %v5070
      %v5144 = vunpack.c.l.b16 %v5071
      %v5145 = vunpack.c.l.b16 %v5072
      %v5146 = vunpack.c.l.b16 %v5073
      %v5147 = vunpack.c.l.b16 %v5074
      %v5148 = vunpack.c.l.b16 %v5075
      %v5149 = vunpack.c.l.b16 %v5076
      %v5150 = vunpack.c.l.b16 %v5077
      %v5151 = vunpack.c.l.b16 %v5078
      %v5152 = vunpack.c.l.b16 %v5079
      %v5153 = vunpack.c.l.b16 %v5080
      %v5154 = vunpack.c.l.b16 %v5081
      %v5155 = vunpack.c.l.b16 %v5082
      %v5156 = vunpack.c.l.b16 %v5083
      %v5157 = vunpack.c.l.b16 %v5084
      %v5158 = vunpack.c.l.b16 %v5085
      %v5159 = vunpack.c.l.b16 %v5086
      %v5160 = vunpack.c.l.b16 %v5087
      %v5161 = vunpack.c.l.b16 %v5088
      %v5162 = vpack.c.b16 %v5127, %v5126
      %v5163 = vpack.c.b16 %v5129, %v5128
      %v5164 = vpack.c.b16 %v5131, %v5130
      %v5165 = vpack.c.b16 %v5133, %v5132
      %v5166 = vpack.c.b16 %v5135, %v5134
      %v5167 = vpack.c.b16 %v5137, %v5136
      %v5168 = vpack.c.b16 %v5139, %v5138
      %v5169 = vpack.c.b16 %v5141, %v5140
      %v5170 = vpack.c.b16 %v5143, %v5142
      %v5171 = vpack.c.b16 %v5145, %v5144
      %v5172 = vpack.c.b16 %v5147, %v5146
      %v5173 = vpack.c.b16 %v5149, %v5148
      %v5174 = vpack.c.b16 %v5151, %v5150
      %v5175 = vpack.c.b16 %v5153, %v5152
      %v5176 = vpack.c.b16 %v5155, %v5154
      %v5177 = vpack.c.b16 %v5157, %v5156
      %v5178 = vpack.c.b16 %v5159, %v5158
      %v5179 = vpack.c.b16 %v5161, %v5160
      %vm5180 = vcmask 31744
      %v5182 = vsel %vm5180, %v5162, 0
      %v5185 = vsel %vm5180, %v5163, 0
      %v5188 = vsel %vm5180, %v5164, 0
      %v5191 = vsel %vm5180, %v5165, 0
      %v5194 = vsel %vm5180, %v5166, 0
      %v5197 = vsel %vm5180, %v5167, 0
      %v5200 = vsel %vm5180, %v5168, 0
      %v5203 = vsel %vm5180, %v5169, 0
      %v5206 = vsel %vm5180, %v5170, 0
      %v5209 = vsel %vm5180, %v5171, 0
      %v5212 = vsel %vm5180, %v5172, 0
      %v5215 = vsel %vm5180, %v5173, 0
      %v5218 = vsel %vm5180, %v5174, 0
      %v5221 = vsel %vm5180, %v5175, 0
      %v5224 = vsel %vm5180, %v5176, 0
      %v5227 = vsel %vm5180, %v5177, 0
      %v5230 = vsel %vm5180, %v5178, 0
      %v5233 = vsel %vm5180, %v5179, 0
      %vm5235 = vcmask 1041408
      %v5237 = vsel %vm5235, %v5089, 0
      %5239 = vmatpush.bf16.msra.mxu0 0
      %5240 = vmatpush.bf16.msra.mxu0 0
      %5241 = vmatpush.bf16.msra.mxu0 0
      %5242 = vmatpush.bf16.msra.mxu0 0
      %5243 = vmatpush.bf16.msra.mxu0 0
      %5244 = vmatpush.bf16.msra.mxu0 0
      %5245 = vmatpush.bf16.msra.mxu0 0
      %5246 = vmatpush.bf16.msra.mxu0 %v5237
      %5247 = vmatmul.bf16.gmra.mxu0 %v5182
      %v5248 = vpop.f32.mrf.mxu0
      %v5249 = vadd.f32 0.0, %v5248
      %v5250 = vpop.f32.mrf.mxu0
      %v5251 = vadd.f32 0.0, %v5250
      %5252 = vmatmul.bf16.gmra.mxu0 %v5185
      %v5253 = vpop.f32.mrf.mxu0
      %v5254 = vadd.f32 0.0, %v5253
      %v5255 = vpop.f32.mrf.mxu0
      %v5256 = vadd.f32 0.0, %v5255
      %5257 = vmatmul.bf16.gmra.mxu0 %v5188
      %v5258 = vpop.f32.mrf.mxu0
      %v5259 = vadd.f32 0.0, %v5258
      %v5260 = vpop.f32.mrf.mxu0
      %v5261 = vadd.f32 0.0, %v5260
      %5262 = vmatmul.bf16.gmra.mxu0 %v5191
      %v5263 = vpop.f32.mrf.mxu0
      %v5264 = vadd.f32 0.0, %v5263
      %v5265 = vpop.f32.mrf.mxu0
      %v5266 = vadd.f32 0.0, %v5265
      %5267 = vmatmul.bf16.gmra.mxu0 %v5194
      %v5268 = vpop.f32.mrf.mxu0
      %v5269 = vadd.f32 0.0, %v5268
      %v5270 = vpop.f32.mrf.mxu0
      %v5271 = vadd.f32 0.0, %v5270
      %5272 = vmatmul.bf16.gmra.mxu0 %v5197
      %v5273 = vpop.f32.mrf.mxu0
      %v5274 = vadd.f32 0.0, %v5273
      %v5275 = vpop.f32.mrf.mxu0
      %v5276 = vadd.f32 0.0, %v5275
      %5277 = vmatmul.bf16.gmra.mxu0 %v5200
      %v5278 = vpop.f32.mrf.mxu0
      %v5279 = vadd.f32 0.0, %v5278
      %v5280 = vpop.f32.mrf.mxu0
      %v5281 = vadd.f32 0.0, %v5280
      %5282 = vmatmul.bf16.gmra.mxu0 %v5203
      %v5283 = vpop.f32.mrf.mxu0
      %v5284 = vadd.f32 0.0, %v5283
      %v5285 = vpop.f32.mrf.mxu0
      %v5286 = vadd.f32 0.0, %v5285
      %5287 = vmatmul.bf16.gmra.mxu0 %v5206
      %v5288 = vpop.f32.mrf.mxu0
      %v5289 = vadd.f32 0.0, %v5288
      %v5290 = vpop.f32.mrf.mxu0
      %v5291 = vadd.f32 0.0, %v5290
      %5292 = vmatmul.bf16.gmra.mxu0 %v5209
      %v5293 = vpop.f32.mrf.mxu0
      %v5294 = vadd.f32 0.0, %v5293
      %v5295 = vpop.f32.mrf.mxu0
      %v5296 = vadd.f32 0.0, %v5295
      %5297 = vmatmul.bf16.gmra.mxu0 %v5212
      %v5298 = vpop.f32.mrf.mxu0
      %v5299 = vadd.f32 0.0, %v5298
      %v5300 = vpop.f32.mrf.mxu0
      %v5301 = vadd.f32 0.0, %v5300
      %5302 = vmatmul.bf16.gmra.mxu0 %v5215
      %v5303 = vpop.f32.mrf.mxu0
      %v5304 = vadd.f32 0.0, %v5303
      %v5305 = vpop.f32.mrf.mxu0
      %v5306 = vadd.f32 0.0, %v5305
      %5307 = vmatmul.bf16.gmra.mxu0 %v5218
      %v5308 = vpop.f32.mrf.mxu0
      %v5309 = vadd.f32 0.0, %v5308
      %v5310 = vpop.f32.mrf.mxu0
      %v5311 = vadd.f32 0.0, %v5310
      %5312 = vmatmul.bf16.gmra.mxu0 %v5221
      %v5313 = vpop.f32.mrf.mxu0
      %v5314 = vadd.f32 0.0, %v5313
      %v5315 = vpop.f32.mrf.mxu0
      %v5316 = vadd.f32 0.0, %v5315
      %5317 = vmatmul.bf16.gmra.mxu0 %v5224
      %v5318 = vpop.f32.mrf.mxu0
      %v5319 = vadd.f32 0.0, %v5318
      %v5320 = vpop.f32.mrf.mxu0
      %v5321 = vadd.f32 0.0, %v5320
      %5322 = vmatmul.bf16.gmra.mxu0 %v5227
      %v5323 = vpop.f32.mrf.mxu0
      %v5324 = vadd.f32 0.0, %v5323
      %v5325 = vpop.f32.mrf.mxu0
      %v5326 = vadd.f32 0.0, %v5325
      %5327 = vmatmul.bf16.gmra.mxu0 %v5230
      %v5328 = vpop.f32.mrf.mxu0
      %v5329 = vadd.f32 0.0, %v5328
      %v5330 = vpop.f32.mrf.mxu0
      %v5331 = vadd.f32 0.0, %v5330
      %5332 = vmatmul.bf16.gmra.mxu0 %v5233
      %v5333 = vpop.f32.mrf.mxu0
      %v5334 = vadd.f32 0.0, %v5333
      %v5335 = vpop.f32.mrf.mxu0
      %v5336 = vadd.f32 0.0, %v5335
      %5337 = vdwg.mxu0
      %v5338 = vld [vmem:[%s9] sm:$0x1]
      %v5340 = vperm.slane %v5338, 0
      %v5342 = vmul.f32 %v5249, %v5340
      %v5343 = vmul.f32 %v5251, %v5340
      %v5344 = vmul.f32 %v5254, %v5340
      %v5345 = vmul.f32 %v5256, %v5340
      %v5346 = vmul.f32 %v5259, %v5340
      %v5347 = vmul.f32 %v5261, %v5340
      %v5348 = vmul.f32 %v5264, %v5340
      %v5349 = vmul.f32 %v5266, %v5340
      %v5350 = vmul.f32 %v5269, %v5340
      %v5351 = vmul.f32 %v5271, %v5340
      %v5352 = vmul.f32 %v5274, %v5340
      %v5353 = vmul.f32 %v5276, %v5340
      %v5354 = vmul.f32 %v5279, %v5340
      %v5355 = vmul.f32 %v5281, %v5340
      %v5356 = vmul.f32 %v5284, %v5340
      %v5357 = vmul.f32 %v5286, %v5340
      %v5358 = vmul.f32 %v5289, %v5340
      %v5359 = vmul.f32 %v5291, %v5340
      %v5360 = vmul.f32 %v5294, %v5340
      %v5361 = vmul.f32 %v5296, %v5340
      %v5362 = vmul.f32 %v5299, %v5340
      %v5363 = vmul.f32 %v5301, %v5340
      %v5364 = vmul.f32 %v5304, %v5340
      %v5365 = vmul.f32 %v5306, %v5340
      %v5366 = vmul.f32 %v5309, %v5340
      %v5367 = vmul.f32 %v5311, %v5340
      %v5368 = vmul.f32 %v5314, %v5340
      %v5369 = vmul.f32 %v5316, %v5340
      %v5370 = vmul.f32 %v5319, %v5340
      %v5371 = vmul.f32 %v5321, %v5340
      %v5372 = vmul.f32 %v5324, %v5340
      %v5373 = vmul.f32 %v5326, %v5340
      %v5374 = vmul.f32 %v5329, %v5340
      %v5375 = vmul.f32 %v5331, %v5340
      %v5376 = vmul.f32 %v5334, %v5340
      %v5377 = vmul.f32 %v5336, %v5340
      %v5378 = vld [vmem:[%s10] sm:$0x1]
      %v5380 = vperm.slane %v5378, 0
      %v5382 = vadd.f32 %v5342, %v5380
      %v5383 = vadd.f32 %v5343, %v5380
      %v5384 = vadd.f32 %v5344, %v5380
      %v5385 = vadd.f32 %v5345, %v5380
      %v5386 = vadd.f32 %v5346, %v5380
      %v5387 = vadd.f32 %v5347, %v5380
      %v5388 = vadd.f32 %v5348, %v5380
      %v5389 = vadd.f32 %v5349, %v5380
      %v5390 = vadd.f32 %v5350, %v5380
      %v5391 = vadd.f32 %v5351, %v5380
      %v5392 = vadd.f32 %v5352, %v5380
      %v5393 = vadd.f32 %v5353, %v5380
      %v5394 = vadd.f32 %v5354, %v5380
      %v5395 = vadd.f32 %v5355, %v5380
      %v5396 = vadd.f32 %v5356, %v5380
      %v5397 = vadd.f32 %v5357, %v5380
      %v5398 = vadd.f32 %v5358, %v5380
      %v5399 = vadd.f32 %v5359, %v5380
      %v5400 = vadd.f32 %v5360, %v5380
      %v5401 = vadd.f32 %v5361, %v5380
      %v5402 = vadd.f32 %v5362, %v5380
      %v5403 = vadd.f32 %v5363, %v5380
      %v5404 = vadd.f32 %v5364, %v5380
      %v5405 = vadd.f32 %v5365, %v5380
      %v5406 = vadd.f32 %v5366, %v5380
      %v5407 = vadd.f32 %v5367, %v5380
      %v5408 = vadd.f32 %v5368, %v5380
      %v5409 = vadd.f32 %v5369, %v5380
      %v5410 = vadd.f32 %v5370, %v5380
      %v5411 = vadd.f32 %v5371, %v5380
      %v5412 = vadd.f32 %v5372, %v5380
      %v5413 = vadd.f32 %v5373, %v5380
      %v5414 = vadd.f32 %v5374, %v5380
      %v5415 = vadd.f32 %v5375, %v5380
      %v5416 = vadd.f32 %v5376, %v5380
      %v5417 = vadd.f32 %v5377, %v5380
      %v5418 = vadd.f32 %v5017, %v5382
      %v5419 = vadd.f32 %v5018, %v5383
      %v5420 = vadd.f32 %v5019, %v5384
      %v5421 = vadd.f32 %v5020, %v5385
      %v5422 = vadd.f32 %v5021, %v5386
      %v5423 = vadd.f32 %v5022, %v5387
      %v5424 = vadd.f32 %v5023, %v5388
      %v5425 = vadd.f32 %v5024, %v5389
      %v5426 = vadd.f32 %v5025, %v5390
      %v5427 = vadd.f32 %v5026, %v5391
      %v5428 = vadd.f32 %v5027, %v5392
      %v5429 = vadd.f32 %v5028, %v5393
      %v5430 = vadd.f32 %v5029, %v5394
      %v5431 = vadd.f32 %v5030, %v5395
      %v5432 = vadd.f32 %v5031, %v5396
      %v5433 = vadd.f32 %v5032, %v5397
      %v5434 = vadd.f32 %v5033, %v5398
      %v5435 = vadd.f32 %v5034, %v5399
      %v5436 = vadd.f32 %v5035, %v5400
      %v5437 = vadd.f32 %v5036, %v5401
      %v5438 = vadd.f32 %v5037, %v5402
      %v5439 = vadd.f32 %v5038, %v5403
      %v5440 = vadd.f32 %v5039, %v5404
      %v5441 = vadd.f32 %v5040, %v5405
      %v5442 = vadd.f32 %v5041, %v5406
      %v5443 = vadd.f32 %v5042, %v5407
      %v5444 = vadd.f32 %v5043, %v5408
      %v5445 = vadd.f32 %v5044, %v5409
      %v5446 = vadd.f32 %v5045, %v5410
      %v5447 = vadd.f32 %v5046, %v5411
      %v5448 = vadd.f32 %v5047, %v5412
      %v5449 = vadd.f32 %v5048, %v5413
      %v5450 = vadd.f32 %v5049, %v5414
      %v5451 = vadd.f32 %v5050, %v5415
      %v5452 = vadd.f32 %v5051, %v5416
      %v5453 = vadd.f32 %v5052, %v5417
      %v5454 = vmax.f32 %v5418, 0.0
      %v5455 = vmax.f32 %v5419, 0.0
      %v5456 = vmax.f32 %v5420, 0.0
      %v5457 = vmax.f32 %v5421, 0.0
      %v5458 = vmax.f32 %v5422, 0.0
      %v5459 = vmax.f32 %v5423, 0.0
      %v5460 = vmax.f32 %v5424, 0.0
      %v5461 = vmax.f32 %v5425, 0.0
      %v5462 = vmax.f32 %v5426, 0.0
      %v5463 = vmax.f32 %v5427, 0.0
      %v5464 = vmax.f32 %v5428, 0.0
      %v5465 = vmax.f32 %v5429, 0.0
      %v5466 = vmax.f32 %v5430, 0.0
      %v5467 = vmax.f32 %v5431, 0.0
      %v5468 = vmax.f32 %v5432, 0.0
      %v5469 = vmax.f32 %v5433, 0.0
      %v5470 = vmax.f32 %v5434, 0.0
      %v5471 = vmax.f32 %v5435, 0.0
      %v5472 = vmax.f32 %v5436, 0.0
      %v5473 = vmax.f32 %v5437, 0.0
      %v5474 = vmax.f32 %v5438, 0.0
      %v5475 = vmax.f32 %v5439, 0.0
      %v5476 = vmax.f32 %v5440, 0.0
      %v5477 = vmax.f32 %v5441, 0.0
      %v5478 = vmax.f32 %v5442, 0.0
      %v5479 = vmax.f32 %v5443, 0.0
      %v5480 = vmax.f32 %v5444, 0.0
      %v5481 = vmax.f32 %v5445, 0.0
      %v5482 = vmax.f32 %v5446, 0.0
      %v5483 = vmax.f32 %v5447, 0.0
      %v5484 = vmax.f32 %v5448, 0.0
      %v5485 = vmax.f32 %v5449, 0.0
      %v5486 = vmax.f32 %v5450, 0.0
      %v5487 = vmax.f32 %v5451, 0.0
      %v5488 = vmax.f32 %v5452, 0.0
      %v5489 = vmax.f32 %v5453, 0.0
      %5490 = vst.msk [vmem:[%s406] sm:$0xff] %vm2733, %v5454
      %5491 = vst.msk [vmem:[%s406 + $0x8] sm:$0xff] %vm2733, %v5455
      %5492 = vst.msk [vmem:[%s406 + $0x10] sm:$0xff] %vm2733, %v5456
      %5493 = vst.msk [vmem:[%s406 + $0x18] sm:$0xff] %vm2733, %v5457
      %5494 = vst.msk [vmem:[%s406 + $0x20] sm:$0xff] %vm2733, %v5458
      %5495 = vst.msk [vmem:[%s406 + $0x28] sm:$0xff] %vm2733, %v5459
      %5496 = vst.msk [vmem:[%s406 + $0x30] sm:$0xff] %vm2733, %v5460
      %5497 = vst.msk [vmem:[%s406 + $0x38] sm:$0xff] %vm2733, %v5461
      %5498 = vst.msk [vmem:[%s406 + $0x40] sm:$0xff] %vm2733, %v5462
      %5499 = vst.msk [vmem:[%s406 + $0x48] sm:$0xff] %vm2733, %v5463
      %5500 = vst.msk [vmem:[%s406 + $0x50] sm:$0xff] %vm2733, %v5464
      %5501 = vst.msk [vmem:[%s406 + $0x58] sm:$0xff] %vm2733, %v5465
      %5502 = vst.msk [vmem:[%s406 + $0x60] sm:$0xff] %vm2733, %v5466
      %5503 = vst.msk [vmem:[%s406 + $0x68] sm:$0xff] %vm2733, %v5467
      %5504 = vst.msk [vmem:[%s406 + $0x70] sm:$0xff] %vm2733, %v5468
      %5505 = vst.msk [vmem:[%s406 + $0x78] sm:$0xff] %vm2733, %v5469
      %5506 = vst.msk [vmem:[%s406 + $0x80] sm:$0xff] %vm2733, %v5470
      %5507 = vst.msk [vmem:[%s406 + $0x88] sm:$0xff] %vm2733, %v5471
      %5508 = vst.msk [vmem:[%s406 + $0x90] sm:$0xff] %vm2733, %v5472
      %5509 = vst.msk [vmem:[%s406 + $0x98] sm:$0xff] %vm2733, %v5473
      %5510 = vst.msk [vmem:[%s406 + $0xa0] sm:$0xff] %vm2733, %v5474
      %5511 = vst.msk [vmem:[%s406 + $0xa8] sm:$0xff] %vm2733, %v5475
      %5512 = vst.msk [vmem:[%s406 + $0xb0] sm:$0xff] %vm2733, %v5476
      %5513 = vst.msk [vmem:[%s406 + $0xb8] sm:$0xff] %vm2733, %v5477
      %5514 = vst.msk [vmem:[%s406 + $0xc0] sm:$0xff] %vm2733, %v5478
      %5515 = vst.msk [vmem:[%s406 + $0xc8] sm:$0xff] %vm2733, %v5479
      %5516 = vst.msk [vmem:[%s406 + $0xd0] sm:$0xff] %vm2733, %v5480
      %5517 = vst.msk [vmem:[%s406 + $0xd8] sm:$0xff] %vm2733, %v5481
      %5518 = vst.msk [vmem:[%s406 + $0xe0] sm:$0xff] %vm2733, %v5482
      %5519 = vst.msk [vmem:[%s406 + $0xe8] sm:$0xff] %vm2733, %v5483
      %5520 = vst.msk [vmem:[%s406 + $0xf0] sm:$0xff] %vm2733, %v5484
      %5521 = vst.msk [vmem:[%s406 + $0xf8] sm:$0xff] %vm2733, %v5485
      %5522 = vst.msk [vmem:[%s406 + $0x100] sm:$0xff] %vm2733, %v5486
      %5523 = vst.msk [vmem:[%s406 + $0x108] sm:$0xff] %vm2733, %v5487
      %5524 = vst.msk [vmem:[%s406 + $0x110] sm:$0xff] %vm2733, %v5488
      %5525 = vst.msk [vmem:[%s406 + $0x118] sm:$0xff] %vm2733, %v5489
      %p5526 = scmp.lt.s32.totalorder %s22, 1
      %s5527 = scalar_select %p5526, %s22, 1
      %s5528 = smul.addr %s5527, 36
      %s5529 = smul.addr %s5528, 8
      %s5530 = scalar_lea.vmem %s11, %s5529
      // Predicated region
      $region65: #{tpu_custom_call.1} parent=63 // pred_check
        %p5531 = pneg %p281
      $region66: #{tpu_custom_call.1} parent=63 // pred_check_branch
        %5533 = sbr.rel (%p5531) target = $region68
      $region67: #{tpu_custom_call.1} parent=63 // pred_region
        _
      $region68: #{tpu_custom_call.1} parent=63 // pred_fallthru
        _
    $region64: #{tpu_custom_call.1} parent=5 // pred_fallthru
      _
    %p5534 = scmp.le.s32.totalorder 2, %s17
    // Predicated region
    $region69: #{tpu_custom_call.1} parent=5 // pred_check
      %p5535 = pneg %p5534
    $region70: #{tpu_custom_call.1} parent=5 // pred_check_branch
      %5537 = sbr.rel (%p5535) target = $region72
    $region71: #{tpu_custom_call.1} parent=5 // pred_region
      %s5538 = ssub.s32 %s17, 2
      // Predicated region
      $region73: #{tpu_custom_call.1} parent=71 // pred_check
        %p5539 = pneg %p287
      $region74: #{tpu_custom_call.1} parent=71 // pred_check_branch
        %5541 = sbr.rel (%p5539) target = $region76
      $region75: #{tpu_custom_call.1} parent=71 // pred_region
        %p5542 = scmp.lt.s32.totalorder %s23, 1
        %s5543 = scalar_select %p5542, %s23, 1
        %s5544 = smul.addr %s5543, 36
        %s5545 = smul.addr %s5544, 8
        %s5546 = scalar_lea.vmem %s11, %s5545
      $region76: #{tpu_custom_call.1} parent=71 // pred_fallthru
        _
    $region72: #{tpu_custom_call.1} parent=5 // pred_fallthru
      _
  $region6: #{tpu_custom_call.1} parent=0 // loop_footer
    %s21 = sadd.s32 1, %s17
  $region7: #{tpu_custom_call.1} parent=0 // loop_footer_branch
    %16 = sbr.rel target = $region3
  $region8: #{tpu_custom_call.1} parent=0 // loop_exit
    _

</llo_original>
